<compile_context>
chip_gen: v6e
topology: v6e:2x2x1
jax: 0.10.0
libtpu: 0.0.40
codegen_flags: <defaults>
</compile_context>

<pallas_src>
import jax
import jax.numpy as jnp
from jax import lax
from jax.experimental import pallas as pl
from jax.experimental.pallas import tpu as pltpu


def _make_res_kernel(H, W):
    """Builds the fused ResModule kernel for images of size H x W."""

    def kernel(x_ref, coords_ref, w1_ref, b1_ref, w2_ref, b2_ref, o_ref):
        # x_ref      : [C, L]   input slab (channels on sublanes, (n,y,x) on lanes)
        # coords_ref : [2, L]   int32 per-lane (y, x) position inside its image
        # w1/w2_ref  : [C, 9*C] folded conv weights; column (t*C + ci), t = ky*3 + kx
        # b1/b2_ref  : [C, 1]   folded BN shifts
        # o_ref      : [C, L]   output slab
        C, L = x_ref.shape
        x = x_ref[...].astype(jnp.float32)

        coords = coords_ref[...]
        yy = coords[0:1, :]                                   # [1, L] int32
        xx = coords[1:2, :]

        # Per-tap validity masks replace any zero-padded buffer.
        row_ok = [(yy + dy >= 0) & (yy + dy < H) for dy in (-1, 0, 1)]
        col_ok = [(xx + dx >= 0) & (xx + dx < W) for dx in (-1, 0, 1)]
        taps = []
        for iy, dy in enumerate((-1, 0, 1)):
            for ix, dx in enumerate((-1, 0, 1)):
                taps.append((dy * W + dx, row_ok[iy] & col_ok[ix]))

        def conv3x3(src, w_all):
            # 3x3 "same" conv on the VPU: 9 lane-rolled taps x C broadcast FMAs.
            acc = jnp.zeros((C, L), jnp.float32)
            for t, (off, mask) in enumerate(taps):
                # shifted[p] = src[p + off]; wrapped / cross-image lanes are all
                # invalid positions and get zeroed by the mask.
                shifted = src if off == 0 else pltpu.roll(src, shift=(-off) % L, axis=1)
                shifted = jnp.where(mask, shifted, 0.0)
                for ci in range(C):
                    col = w_all[:, t * C + ci:t * C + ci + 1]     # [C, 1]
                    acc = acc + col * shifted[ci:ci + 1, :]       # [C,1]*[1,L] -> [C,L]
            return acc

        w1 = w1_ref[...].astype(jnp.float32)
        w2 = w2_ref[...].astype(jnp.float32)
        b1 = b1_ref[...].astype(jnp.float32)
        b2 = b2_ref[...].astype(jnp.float32)

        h = jnp.maximum(conv3x3(x, w1) + b1, 0.0)     # conv1 (+BN1 scale) + BN1 shift + ReLU
        out = conv3x3(h, w2) + b2 + x                 # conv2 (+BN2 scale) + BN2 shift + residual
        o_ref[...] = out.astype(o_ref.dtype)

    return kernel


def res_module_forward(x_nchw, conv1_w, bn1_params, conv2_w, bn2_params,
                       eps=1e-5, num_blocks=1):
    """ResModule forward (inference-mode BatchNorm folded into conv weights).

    x_nchw    : [N, C, H, W]
    conv*_w   : [C, C, 3, 3]   (PyTorch OIHW, bias=False)
    bn*_params: (gamma[C], beta[C], running_mean[C], running_var[C])
    num_blocks: grid splits along the batch axis; 1 for single-TC v5e/v6e,
                2 to occupy both TensorCores on v7x.
    """
    N, C, H, W = x_nchw.shape
    HW = H * W
    L = N * HW
    assert L % num_blocks == 0 and (L // num_blocks) % HW == 0, (
        "grid blocks must cover whole images")
    L_blk = L // num_blocks

    def fold_bn(conv_w, bn):
        gamma, beta, mean, var = bn
        scale = gamma * lax.rsqrt(var + eps)                     # [C]
        shift = beta - mean * scale                              # [C]
        w_eff = conv_w * scale[:, None, None, None]              # OIHW, scale on O
        # [O, I, 3, 3] -> [O, 3, 3, I] -> [O, 9*I]; column = (ky*3+kx)*I + ci
        wk = jnp.transpose(w_eff, (0, 2, 3, 1)).reshape(C, 9 * C)
        return wk.astype(jnp.float32), shift.reshape(C, 1).astype(jnp.float32)

    w1, b1 = fold_bn(conv1_w, bn1_params)
    w2, b2 = fold_bn(conv2_w, bn2_params)

    # Lane-dense layout: channels on sublanes, (n, y, x) flattened on the lane axis.
    # (Keep the surrounding network in this layout to avoid these transposes.)
    x_cl = jnp.transpose(x_nchw, (1, 0, 2, 3)).reshape(C, L)

    # Per-lane (y, x) coordinates inside each image (tiny; avoids in-kernel div/mod).
    yy = jnp.tile(jnp.repeat(jnp.arange(H, dtype=jnp.int32), W), N)
    xx = jnp.tile(jnp.arange(W, dtype=jnp.int32), N * H)
    coords = jnp.stack([yy, xx], axis=0)                         # [2, L] int32

    flops = 2 * 2 * 9 * C * C * L
    bytes_accessed = (2 * x_cl.size * x_cl.dtype.itemsize
                      + coords.size * 4
                      + (w1.size + w2.size + b1.size + b2.size) * 4)

    out_cl = pl.pallas_call(
        _make_res_kernel(H, W),
        out_shape=jax.ShapeDtypeStruct((C, L), x_nchw.dtype),
        grid_spec=pltpu.PrefetchScalarGridSpec(
            num_scalar_prefetch=0,
            grid=(num_blocks,),
            in_specs=[
                pl.BlockSpec((C, L_blk), lambda g: (0, g)),
                pl.BlockSpec((2, L_blk), lambda g: (0, g)),
                pl.BlockSpec((C, 9 * C), lambda g: (0, 0)),
                pl.BlockSpec((C, 1), lambda g: (0, 0)),
                pl.BlockSpec((C, 9 * C), lambda g: (0, 0)),
                pl.BlockSpec((C, 1), lambda g: (0, 0)),
            ],
            out_specs=pl.BlockSpec((C, L_blk), lambda g: (0, g)),
        ),
        compiler_params=pltpu.CompilerParams(
            dimension_semantics=("parallel",)),
        cost_estimate=pl.CostEstimate(flops=flops, transcendentals=0,
                                      bytes_accessed=bytes_accessed),
    )(x_cl, coords, w1, b1, w2, b2)

    # Back to NCHW for the test / external interface.
    return jnp.transpose(out_cl.reshape(C, N, H, W), (1, 0, 2, 3))


if __name__ == "__main__":
    # Module config: in_chans=4; batched input [N, C, H, W] (BatchNorm2d needs 4-D).
    in_chans, N, H, W = 4, 2, 16, 16
    C = in_chans
    eps = 1e-5

    ks = jax.random.split(jax.random.PRNGKey(0), 12)
    x = jax.random.normal(ks[0], (N, C, H, W), dtype=jnp.float32)
    conv1_w = jax.random.normal(ks[1], (C, C, 3, 3), dtype=jnp.float32) * 0.2
    conv2_w = jax.random.normal(ks[2], (C, C, 3, 3), dtype=jnp.float32) * 0.2
    bn1 = (jax.random.uniform(ks[3], (C,), minval=0.5, maxval=1.5),
           jax.random.normal(ks[4], (C,)) * 0.1,
           jax.random.normal(ks[5], (C,)) * 0.1,
           jax.random.uniform(ks[6], (C,), minval=0.5, maxval=1.5))
    bn2 = (jax.random.uniform(ks[7], (C,), minval=0.5, maxval=1.5),
           jax.random.normal(ks[8], (C,)) * 0.1,
           jax.random.normal(ks[9], (C,)) * 0.1,
           jax.random.uniform(ks[10], (C,), minval=0.5, maxval=1.5))

    out = res_module_forward(x, conv1_w, bn1, conv2_w, bn2, eps=eps)
    out = jax.block_until_ready(out)

    # Pure-JAX reference of the same math (inference-mode BN).
    def conv(y, w):
        return lax.conv_general_dilated(
            y, w, window_strides=(1, 1), padding=((1, 1), (1, 1)),
            dimension_numbers=("NCHW", "OIHW", "NCHW"))

    def bn_apply(y, bn):
        gamma, beta, mean, var = bn
        s = (gamma * lax.rsqrt(var + eps))[None, :, None, None]
        return (y - mean[None, :, None, None]) * s + beta[None, :, None, None]

    ref = x + bn_apply(conv(jnp.maximum(bn_apply(conv(x, conv1_w), bn1), 0.0),
                            conv2_w), bn2)

    assert out.shape == (N, C, H, W)
    err = float(jnp.max(jnp.abs(out - ref)))
    assert jnp.allclose(out, ref, atol=1e-4, rtol=1e-4), err

    print("KERNEL_OK")
</pallas_src>

<mosaic_0001>
module attributes {stable_mosaic.version = 11 : i64} {
  func.func @kernel(%arg0: i32, %arg1: memref<4x512xf32, #tpu.memory_space<vmem>>, %arg2: memref<2x512xi32, #tpu.memory_space<vmem>>, %arg3: memref<4x36xf32, #tpu.memory_space<vmem>>, %arg4: memref<4x1xf32, #tpu.memory_space<vmem>>, %arg5: memref<4x36xf32, #tpu.memory_space<vmem>>, %arg6: memref<4x1xf32, #tpu.memory_space<vmem>>, %arg7: memref<4x512xf32, #tpu.memory_space<vmem>>) attributes {dimension_semantics = [#tpu.dimension_semantics<parallel>], iteration_bounds = array<i64: 1>, scalar_prefetch = 0 : i64, scratch_operands = 0 : i64, tpu.core_type = #tpu.core_type<tc>, window_params = [{transform_indices = @transform_0, window_bounds = array<i64: 4, 512>}, {transform_indices = @transform_1, window_bounds = array<i64: 2, 512>}, {pipeline_mode = #tpu.pipeline_mode<synchronous>, transform_indices = @transform_2, window_bounds = array<i64: 4, 36>}, {pipeline_mode = #tpu.pipeline_mode<synchronous>, transform_indices = @transform_3, window_bounds = array<i64: 4, 1>}, {pipeline_mode = #tpu.pipeline_mode<synchronous>, transform_indices = @transform_4, window_bounds = array<i64: 4, 36>}, {pipeline_mode = #tpu.pipeline_mode<synchronous>, transform_indices = @transform_5, window_bounds = array<i64: 4, 1>}, {transform_indices = @transform_6, window_bounds = array<i64: 4, 512>}]} {
    %c0 = arith.constant 0 : index
    %c0_0 = arith.constant 0 : index
    %0 = vector.load %arg1[%c0, %c0_0] : memref<4x512xf32, #tpu.memory_space<vmem>>, vector<4x512xf32>
    %c0_1 = arith.constant 0 : index
    %c0_2 = arith.constant 0 : index
    %1 = vector.load %arg2[%c0_1, %c0_2] : memref<2x512xi32, #tpu.memory_space<vmem>>, vector<2x512xi32>
    %2 = vector.extract_strided_slice %1 {offsets = [0, 0], sizes = [1, 512], strides = [1, 1]} : vector<2x512xi32> to vector<1x512xi32>
    %3 = vector.extract_strided_slice %1 {offsets = [1, 0], sizes = [1, 512], strides = [1, 1]} : vector<2x512xi32> to vector<1x512xi32>
    %c-1_i32 = arith.constant -1 : i32
    %4 = vector.broadcast %c-1_i32 : i32 to vector<1x512xi32>
    %5 = arith.addi %2, %4 : vector<1x512xi32>
    %c0_i32 = arith.constant 0 : i32
    %6 = vector.broadcast %c0_i32 : i32 to vector<1x512xi32>
    %7 = arith.cmpi sge, %5, %6 : vector<1x512xi32>
    %c-1_i32_3 = arith.constant -1 : i32
    %8 = vector.broadcast %c-1_i32_3 : i32 to vector<1x512xi32>
    %9 = arith.addi %2, %8 : vector<1x512xi32>
    %c16_i32 = arith.constant 16 : i32
    %10 = vector.broadcast %c16_i32 : i32 to vector<1x512xi32>
    %11 = arith.cmpi slt, %9, %10 : vector<1x512xi32>
    %12 = arith.andi %7, %11 : vector<1x512xi1>
    %c0_i32_4 = arith.constant 0 : i32
    %13 = vector.broadcast %c0_i32_4 : i32 to vector<1x512xi32>
    %14 = arith.addi %2, %13 : vector<1x512xi32>
    %c0_i32_5 = arith.constant 0 : i32
    %15 = vector.broadcast %c0_i32_5 : i32 to vector<1x512xi32>
    %16 = arith.cmpi sge, %14, %15 : vector<1x512xi32>
    %c0_i32_6 = arith.constant 0 : i32
    %17 = vector.broadcast %c0_i32_6 : i32 to vector<1x512xi32>
    %18 = arith.addi %2, %17 : vector<1x512xi32>
    %c16_i32_7 = arith.constant 16 : i32
    %19 = vector.broadcast %c16_i32_7 : i32 to vector<1x512xi32>
    %20 = arith.cmpi slt, %18, %19 : vector<1x512xi32>
    %21 = arith.andi %16, %20 : vector<1x512xi1>
    %c1_i32 = arith.constant 1 : i32
    %22 = vector.broadcast %c1_i32 : i32 to vector<1x512xi32>
    %23 = arith.addi %2, %22 : vector<1x512xi32>
    %c0_i32_8 = arith.constant 0 : i32
    %24 = vector.broadcast %c0_i32_8 : i32 to vector<1x512xi32>
    %25 = arith.cmpi sge, %23, %24 : vector<1x512xi32>
    %c1_i32_9 = arith.constant 1 : i32
    %26 = vector.broadcast %c1_i32_9 : i32 to vector<1x512xi32>
    %27 = arith.addi %2, %26 : vector<1x512xi32>
    %c16_i32_10 = arith.constant 16 : i32
    %28 = vector.broadcast %c16_i32_10 : i32 to vector<1x512xi32>
    %29 = arith.cmpi slt, %27, %28 : vector<1x512xi32>
    %30 = arith.andi %25, %29 : vector<1x512xi1>
    %c-1_i32_11 = arith.constant -1 : i32
    %31 = vector.broadcast %c-1_i32_11 : i32 to vector<1x512xi32>
    %32 = arith.addi %3, %31 : vector<1x512xi32>
    %c0_i32_12 = arith.constant 0 : i32
    %33 = vector.broadcast %c0_i32_12 : i32 to vector<1x512xi32>
    %34 = arith.cmpi sge, %32, %33 : vector<1x512xi32>
    %c-1_i32_13 = arith.constant -1 : i32
    %35 = vector.broadcast %c-1_i32_13 : i32 to vector<1x512xi32>
    %36 = arith.addi %3, %35 : vector<1x512xi32>
    %c16_i32_14 = arith.constant 16 : i32
    %37 = vector.broadcast %c16_i32_14 : i32 to vector<1x512xi32>
    %38 = arith.cmpi slt, %36, %37 : vector<1x512xi32>
    %39 = arith.andi %34, %38 : vector<1x512xi1>
    %c0_i32_15 = arith.constant 0 : i32
    %40 = vector.broadcast %c0_i32_15 : i32 to vector<1x512xi32>
    %41 = arith.addi %3, %40 : vector<1x512xi32>
    %c0_i32_16 = arith.constant 0 : i32
    %42 = vector.broadcast %c0_i32_16 : i32 to vector<1x512xi32>
    %43 = arith.cmpi sge, %41, %42 : vector<1x512xi32>
    %c0_i32_17 = arith.constant 0 : i32
    %44 = vector.broadcast %c0_i32_17 : i32 to vector<1x512xi32>
    %45 = arith.addi %3, %44 : vector<1x512xi32>
    %c16_i32_18 = arith.constant 16 : i32
    %46 = vector.broadcast %c16_i32_18 : i32 to vector<1x512xi32>
    %47 = arith.cmpi slt, %45, %46 : vector<1x512xi32>
    %48 = arith.andi %43, %47 : vector<1x512xi1>
    %c1_i32_19 = arith.constant 1 : i32
    %49 = vector.broadcast %c1_i32_19 : i32 to vector<1x512xi32>
    %50 = arith.addi %3, %49 : vector<1x512xi32>
    %c0_i32_20 = arith.constant 0 : i32
    %51 = vector.broadcast %c0_i32_20 : i32 to vector<1x512xi32>
    %52 = arith.cmpi sge, %50, %51 : vector<1x512xi32>
    %c1_i32_21 = arith.constant 1 : i32
    %53 = vector.broadcast %c1_i32_21 : i32 to vector<1x512xi32>
    %54 = arith.addi %3, %53 : vector<1x512xi32>
    %c16_i32_22 = arith.constant 16 : i32
    %55 = vector.broadcast %c16_i32_22 : i32 to vector<1x512xi32>
    %56 = arith.cmpi slt, %54, %55 : vector<1x512xi32>
    %57 = arith.andi %52, %56 : vector<1x512xi1>
    %58 = arith.andi %12, %39 : vector<1x512xi1>
    %59 = arith.andi %12, %48 : vector<1x512xi1>
    %60 = arith.andi %12, %57 : vector<1x512xi1>
    %61 = arith.andi %21, %39 : vector<1x512xi1>
    %62 = arith.andi %21, %48 : vector<1x512xi1>
    %63 = arith.andi %21, %57 : vector<1x512xi1>
    %64 = arith.andi %30, %39 : vector<1x512xi1>
    %65 = arith.andi %30, %48 : vector<1x512xi1>
    %66 = arith.andi %30, %57 : vector<1x512xi1>
    %c0_23 = arith.constant 0 : index
    %c0_24 = arith.constant 0 : index
    %67 = vector.load %arg3[%c0_23, %c0_24] : memref<4x36xf32, #tpu.memory_space<vmem>>, vector<4x36xf32>
    %c0_25 = arith.constant 0 : index
    %c0_26 = arith.constant 0 : index
    %68 = vector.load %arg5[%c0_25, %c0_26] : memref<4x36xf32, #tpu.memory_space<vmem>>, vector<4x36xf32>
    %c0_27 = arith.constant 0 : index
    %c0_28 = arith.constant 0 : index
    %69 = vector.load %arg4[%c0_27, %c0_28] : memref<4x1xf32, #tpu.memory_space<vmem>>, vector<4x1xf32>
    %c0_29 = arith.constant 0 : index
    %c0_30 = arith.constant 0 : index
    %70 = vector.load %arg6[%c0_29, %c0_30] : memref<4x1xf32, #tpu.memory_space<vmem>>, vector<4x1xf32>
    %cst = arith.constant 0.000000e+00 : f32
    %71 = vector.broadcast %cst : f32 to vector<4x512xf32>
    %c17_i32 = arith.constant 17 : i32
    %72 = tpu.dynamic_rotate %0 by %c17_i32 dim 1 : vector<4x512xf32>, i32 -> vector<4x512xf32>
    %cst_31 = arith.constant 0.000000e+00 : f32
    %73 = vector.shape_cast %58 : vector<1x512xi1> to vector<1x512xi1>
    %74 = vector.broadcast %73 : vector<1x512xi1> to vector<4x512xi1>
    %75 = vector.broadcast %cst_31 : f32 to vector<4x512xf32>
    %76 = arith.select %74, %72, %75 : vector<4x512xi1>, vector<4x512xf32>
    %77 = vector.extract_strided_slice %67 {offsets = [0, 0], sizes = [4, 1], strides = [1, 1]} : vector<4x36xf32> to vector<4x1xf32>
    %78 = vector.extract_strided_slice %76 {offsets = [0, 0], sizes = [1, 512], strides = [1, 1]} : vector<4x512xf32> to vector<1x512xf32>
    %79 = vector.broadcast %77 : vector<4x1xf32> to vector<4x512xf32>
    %80 = vector.broadcast %78 : vector<1x512xf32> to vector<4x512xf32>
    %81 = arith.mulf %79, %80 : vector<4x512xf32>
    %82 = arith.addf %71, %81 : vector<4x512xf32>
    %83 = vector.extract_strided_slice %67 {offsets = [0, 1], sizes = [4, 1], strides = [1, 1]} : vector<4x36xf32> to vector<4x1xf32>
    %84 = vector.extract_strided_slice %76 {offsets = [1, 0], sizes = [1, 512], strides = [1, 1]} : vector<4x512xf32> to vector<1x512xf32>
    %85 = vector.broadcast %83 : vector<4x1xf32> to vector<4x512xf32>
    %86 = vector.broadcast %84 : vector<1x512xf32> to vector<4x512xf32>
    %87 = arith.mulf %85, %86 : vector<4x512xf32>
    %88 = arith.addf %82, %87 : vector<4x512xf32>
    %89 = vector.extract_strided_slice %67 {offsets = [0, 2], sizes = [4, 1], strides = [1, 1]} : vector<4x36xf32> to vector<4x1xf32>
    %90 = vector.extract_strided_slice %76 {offsets = [2, 0], sizes = [1, 512], strides = [1, 1]} : vector<4x512xf32> to vector<1x512xf32>
    %91 = vector.broadcast %89 : vector<4x1xf32> to vector<4x512xf32>
    %92 = vector.broadcast %90 : vector<1x512xf32> to vector<4x512xf32>
    %93 = arith.mulf %91, %92 : vector<4x512xf32>
    %94 = arith.addf %88, %93 : vector<4x512xf32>
    %95 = vector.extract_strided_slice %67 {offsets = [0, 3], sizes = [4, 1], strides = [1, 1]} : vector<4x36xf32> to vector<4x1xf32>
    %96 = vector.extract_strided_slice %76 {offsets = [3, 0], sizes = [1, 512], strides = [1, 1]} : vector<4x512xf32> to vector<1x512xf32>
    %97 = vector.broadcast %95 : vector<4x1xf32> to vector<4x512xf32>
    %98 = vector.broadcast %96 : vector<1x512xf32> to vector<4x512xf32>
    %99 = arith.mulf %97, %98 : vector<4x512xf32>
    %100 = arith.addf %94, %99 : vector<4x512xf32>
    %c16_i32_32 = arith.constant 16 : i32
    %101 = tpu.dynamic_rotate %0 by %c16_i32_32 dim 1 : vector<4x512xf32>, i32 -> vector<4x512xf32>
    %cst_33 = arith.constant 0.000000e+00 : f32
    %102 = vector.shape_cast %59 : vector<1x512xi1> to vector<1x512xi1>
    %103 = vector.broadcast %102 : vector<1x512xi1> to vector<4x512xi1>
    %104 = vector.broadcast %cst_33 : f32 to vector<4x512xf32>
    %105 = arith.select %103, %101, %104 : vector<4x512xi1>, vector<4x512xf32>
    %106 = vector.extract_strided_slice %67 {offsets = [0, 4], sizes = [4, 1], strides = [1, 1]} : vector<4x36xf32> to vector<4x1xf32>
    %107 = vector.extract_strided_slice %105 {offsets = [0, 0], sizes = [1, 512], strides = [1, 1]} : vector<4x512xf32> to vector<1x512xf32>
    %108 = vector.broadcast %106 : vector<4x1xf32> to vector<4x512xf32>
    %109 = vector.broadcast %107 : vector<1x512xf32> to vector<4x512xf32>
    %110 = arith.mulf %108, %109 : vector<4x512xf32>
    %111 = arith.addf %100, %110 : vector<4x512xf32>
    %112 = vector.extract_strided_slice %67 {offsets = [0, 5], sizes = [4, 1], strides = [1, 1]} : vector<4x36xf32> to vector<4x1xf32>
    %113 = vector.extract_strided_slice %105 {offsets = [1, 0], sizes = [1, 512], strides = [1, 1]} : vector<4x512xf32> to vector<1x512xf32>
    %114 = vector.broadcast %112 : vector<4x1xf32> to vector<4x512xf32>
    %115 = vector.broadcast %113 : vector<1x512xf32> to vector<4x512xf32>
    %116 = arith.mulf %114, %115 : vector<4x512xf32>
    %117 = arith.addf %111, %116 : vector<4x512xf32>
    %118 = vector.extract_strided_slice %67 {offsets = [0, 6], sizes = [4, 1], strides = [1, 1]} : vector<4x36xf32> to vector<4x1xf32>
    %119 = vector.extract_strided_slice %105 {offsets = [2, 0], sizes = [1, 512], strides = [1, 1]} : vector<4x512xf32> to vector<1x512xf32>
    %120 = vector.broadcast %118 : vector<4x1xf32> to vector<4x512xf32>
    %121 = vector.broadcast %119 : vector<1x512xf32> to vector<4x512xf32>
    %122 = arith.mulf %120, %121 : vector<4x512xf32>
    %123 = arith.addf %117, %122 : vector<4x512xf32>
    %124 = vector.extract_strided_slice %67 {offsets = [0, 7], sizes = [4, 1], strides = [1, 1]} : vector<4x36xf32> to vector<4x1xf32>
    %125 = vector.extract_strided_slice %105 {offsets = [3, 0], sizes = [1, 512], strides = [1, 1]} : vector<4x512xf32> to vector<1x512xf32>
    %126 = vector.broadcast %124 : vector<4x1xf32> to vector<4x512xf32>
    %127 = vector.broadcast %125 : vector<1x512xf32> to vector<4x512xf32>
    %128 = arith.mulf %126, %127 : vector<4x512xf32>
    %129 = arith.addf %123, %128 : vector<4x512xf32>
    %c15_i32 = arith.constant 15 : i32
    %130 = tpu.dynamic_rotate %0 by %c15_i32 dim 1 : vector<4x512xf32>, i32 -> vector<4x512xf32>
    %cst_34 = arith.constant 0.000000e+00 : f32
    %131 = vector.shape_cast %60 : vector<1x512xi1> to vector<1x512xi1>
    %132 = vector.broadcast %131 : vector<1x512xi1> to vector<4x512xi1>
    %133 = vector.broadcast %cst_34 : f32 to vector<4x512xf32>
    %134 = arith.select %132, %130, %133 : vector<4x512xi1>, vector<4x512xf32>
    %135 = vector.extract_strided_slice %67 {offsets = [0, 8], sizes = [4, 1], strides = [1, 1]} : vector<4x36xf32> to vector<4x1xf32>
    %136 = vector.extract_strided_slice %134 {offsets = [0, 0], sizes = [1, 512], strides = [1, 1]} : vector<4x512xf32> to vector<1x512xf32>
    %137 = vector.broadcast %135 : vector<4x1xf32> to vector<4x512xf32>
    %138 = vector.broadcast %136 : vector<1x512xf32> to vector<4x512xf32>
    %139 = arith.mulf %137, %138 : vector<4x512xf32>
    %140 = arith.addf %129, %139 : vector<4x512xf32>
    %141 = vector.extract_strided_slice %67 {offsets = [0, 9], sizes = [4, 1], strides = [1, 1]} : vector<4x36xf32> to vector<4x1xf32>
    %142 = vector.extract_strided_slice %134 {offsets = [1, 0], sizes = [1, 512], strides = [1, 1]} : vector<4x512xf32> to vector<1x512xf32>
    %143 = vector.broadcast %141 : vector<4x1xf32> to vector<4x512xf32>
    %144 = vector.broadcast %142 : vector<1x512xf32> to vector<4x512xf32>
    %145 = arith.mulf %143, %144 : vector<4x512xf32>
    %146 = arith.addf %140, %145 : vector<4x512xf32>
    %147 = vector.extract_strided_slice %67 {offsets = [0, 10], sizes = [4, 1], strides = [1, 1]} : vector<4x36xf32> to vector<4x1xf32>
    %148 = vector.extract_strided_slice %134 {offsets = [2, 0], sizes = [1, 512], strides = [1, 1]} : vector<4x512xf32> to vector<1x512xf32>
    %149 = vector.broadcast %147 : vector<4x1xf32> to vector<4x512xf32>
    %150 = vector.broadcast %148 : vector<1x512xf32> to vector<4x512xf32>
    %151 = arith.mulf %149, %150 : vector<4x512xf32>
    %152 = arith.addf %146, %151 : vector<4x512xf32>
    %153 = vector.extract_strided_slice %67 {offsets = [0, 11], sizes = [4, 1], strides = [1, 1]} : vector<4x36xf32> to vector<4x1xf32>
    %154 = vector.extract_strided_slice %134 {offsets = [3, 0], sizes = [1, 512], strides = [1, 1]} : vector<4x512xf32> to vector<1x512xf32>
    %155 = vector.broadcast %153 : vector<4x1xf32> to vector<4x512xf32>
    %156 = vector.broadcast %154 : vector<1x512xf32> to vector<4x512xf32>
    %157 = arith.mulf %155, %156 : vector<4x512xf32>
    %158 = arith.addf %152, %157 : vector<4x512xf32>
    %c1_i32_35 = arith.constant 1 : i32
    %159 = tpu.dynamic_rotate %0 by %c1_i32_35 dim 1 : vector<4x512xf32>, i32 -> vector<4x512xf32>
    %cst_36 = arith.constant 0.000000e+00 : f32
    %160 = vector.shape_cast %61 : vector<1x512xi1> to vector<1x512xi1>
    %161 = vector.broadcast %160 : vector<1x512xi1> to vector<4x512xi1>
    %162 = vector.broadcast %cst_36 : f32 to vector<4x512xf32>
    %163 = arith.select %161, %159, %162 : vector<4x512xi1>, vector<4x512xf32>
    %164 = vector.extract_strided_slice %67 {offsets = [0, 12], sizes = [4, 1], strides = [1, 1]} : vector<4x36xf32> to vector<4x1xf32>
    %165 = vector.extract_strided_slice %163 {offsets = [0, 0], sizes = [1, 512], strides = [1, 1]} : vector<4x512xf32> to vector<1x512xf32>
    %166 = vector.broadcast %164 : vector<4x1xf32> to vector<4x512xf32>
    %167 = vector.broadcast %165 : vector<1x512xf32> to vector<4x512xf32>
    %168 = arith.mulf %166, %167 : vector<4x512xf32>
    %169 = arith.addf %158, %168 : vector<4x512xf32>
    %170 = vector.extract_strided_slice %67 {offsets = [0, 13], sizes = [4, 1], strides = [1, 1]} : vector<4x36xf32> to vector<4x1xf32>
    %171 = vector.extract_strided_slice %163 {offsets = [1, 0], sizes = [1, 512], strides = [1, 1]} : vector<4x512xf32> to vector<1x512xf32>
    %172 = vector.broadcast %170 : vector<4x1xf32> to vector<4x512xf32>
    %173 = vector.broadcast %171 : vector<1x512xf32> to vector<4x512xf32>
    %174 = arith.mulf %172, %173 : vector<4x512xf32>
    %175 = arith.addf %169, %174 : vector<4x512xf32>
    %176 = vector.extract_strided_slice %67 {offsets = [0, 14], sizes = [4, 1], strides = [1, 1]} : vector<4x36xf32> to vector<4x1xf32>
    %177 = vector.extract_strided_slice %163 {offsets = [2, 0], sizes = [1, 512], strides = [1, 1]} : vector<4x512xf32> to vector<1x512xf32>
    %178 = vector.broadcast %176 : vector<4x1xf32> to vector<4x512xf32>
    %179 = vector.broadcast %177 : vector<1x512xf32> to vector<4x512xf32>
    %180 = arith.mulf %178, %179 : vector<4x512xf32>
    %181 = arith.addf %175, %180 : vector<4x512xf32>
    %182 = vector.extract_strided_slice %67 {offsets = [0, 15], sizes = [4, 1], strides = [1, 1]} : vector<4x36xf32> to vector<4x1xf32>
    %183 = vector.extract_strided_slice %163 {offsets = [3, 0], sizes = [1, 512], strides = [1, 1]} : vector<4x512xf32> to vector<1x512xf32>
    %184 = vector.broadcast %182 : vector<4x1xf32> to vector<4x512xf32>
    %185 = vector.broadcast %183 : vector<1x512xf32> to vector<4x512xf32>
    %186 = arith.mulf %184, %185 : vector<4x512xf32>
    %187 = arith.addf %181, %186 : vector<4x512xf32>
    %cst_37 = arith.constant 0.000000e+00 : f32
    %188 = vector.shape_cast %62 : vector<1x512xi1> to vector<1x512xi1>
    %189 = vector.broadcast %188 : vector<1x512xi1> to vector<4x512xi1>
    %190 = vector.broadcast %cst_37 : f32 to vector<4x512xf32>
    %191 = arith.select %189, %0, %190 : vector<4x512xi1>, vector<4x512xf32>
    %192 = vector.extract_strided_slice %67 {offsets = [0, 16], sizes = [4, 1], strides = [1, 1]} : vector<4x36xf32> to vector<4x1xf32>
    %193 = vector.extract_strided_slice %191 {offsets = [0, 0], sizes = [1, 512], strides = [1, 1]} : vector<4x512xf32> to vector<1x512xf32>
    %194 = vector.broadcast %192 : vector<4x1xf32> to vector<4x512xf32>
    %195 = vector.broadcast %193 : vector<1x512xf32> to vector<4x512xf32>
    %196 = arith.mulf %194, %195 : vector<4x512xf32>
    %197 = arith.addf %187, %196 : vector<4x512xf32>
    %198 = vector.extract_strided_slice %67 {offsets = [0, 17], sizes = [4, 1], strides = [1, 1]} : vector<4x36xf32> to vector<4x1xf32>
    %199 = vector.extract_strided_slice %191 {offsets = [1, 0], sizes = [1, 512], strides = [1, 1]} : vector<4x512xf32> to vector<1x512xf32>
    %200 = vector.broadcast %198 : vector<4x1xf32> to vector<4x512xf32>
    %201 = vector.broadcast %199 : vector<1x512xf32> to vector<4x512xf32>
    %202 = arith.mulf %200, %201 : vector<4x512xf32>
    %203 = arith.addf %197, %202 : vector<4x512xf32>
    %204 = vector.extract_strided_slice %67 {offsets = [0, 18], sizes = [4, 1], strides = [1, 1]} : vector<4x36xf32> to vector<4x1xf32>
    %205 = vector.extract_strided_slice %191 {offsets = [2, 0], sizes = [1, 512], strides = [1, 1]} : vector<4x512xf32> to vector<1x512xf32>
    %206 = vector.broadcast %204 : vector<4x1xf32> to vector<4x512xf32>
    %207 = vector.broadcast %205 : vector<1x512xf32> to vector<4x512xf32>
    %208 = arith.mulf %206, %207 : vector<4x512xf32>
    %209 = arith.addf %203, %208 : vector<4x512xf32>
    %210 = vector.extract_strided_slice %67 {offsets = [0, 19], sizes = [4, 1], strides = [1, 1]} : vector<4x36xf32> to vector<4x1xf32>
    %211 = vector.extract_strided_slice %191 {offsets = [3, 0], sizes = [1, 512], strides = [1, 1]} : vector<4x512xf32> to vector<1x512xf32>
    %212 = vector.broadcast %210 : vector<4x1xf32> to vector<4x512xf32>
    %213 = vector.broadcast %211 : vector<1x512xf32> to vector<4x512xf32>
    %214 = arith.mulf %212, %213 : vector<4x512xf32>
    %215 = arith.addf %209, %214 : vector<4x512xf32>
    %c511_i32 = arith.constant 511 : i32
    %216 = tpu.dynamic_rotate %0 by %c511_i32 dim 1 : vector<4x512xf32>, i32 -> vector<4x512xf32>
    %cst_38 = arith.constant 0.000000e+00 : f32
    %217 = vector.shape_cast %63 : vector<1x512xi1> to vector<1x512xi1>
    %218 = vector.broadcast %217 : vector<1x512xi1> to vector<4x512xi1>
    %219 = vector.broadcast %cst_38 : f32 to vector<4x512xf32>
    %220 = arith.select %218, %216, %219 : vector<4x512xi1>, vector<4x512xf32>
    %221 = vector.extract_strided_slice %67 {offsets = [0, 20], sizes = [4, 1], strides = [1, 1]} : vector<4x36xf32> to vector<4x1xf32>
    %222 = vector.extract_strided_slice %220 {offsets = [0, 0], sizes = [1, 512], strides = [1, 1]} : vector<4x512xf32> to vector<1x512xf32>
    %223 = vector.broadcast %221 : vector<4x1xf32> to vector<4x512xf32>
    %224 = vector.broadcast %222 : vector<1x512xf32> to vector<4x512xf32>
    %225 = arith.mulf %223, %224 : vector<4x512xf32>
    %226 = arith.addf %215, %225 : vector<4x512xf32>
    %227 = vector.extract_strided_slice %67 {offsets = [0, 21], sizes = [4, 1], strides = [1, 1]} : vector<4x36xf32> to vector<4x1xf32>
    %228 = vector.extract_strided_slice %220 {offsets = [1, 0], sizes = [1, 512], strides = [1, 1]} : vector<4x512xf32> to vector<1x512xf32>
    %229 = vector.broadcast %227 : vector<4x1xf32> to vector<4x512xf32>
    %230 = vector.broadcast %228 : vector<1x512xf32> to vector<4x512xf32>
    %231 = arith.mulf %229, %230 : vector<4x512xf32>
    %232 = arith.addf %226, %231 : vector<4x512xf32>
    %233 = vector.extract_strided_slice %67 {offsets = [0, 22], sizes = [4, 1], strides = [1, 1]} : vector<4x36xf32> to vector<4x1xf32>
    %234 = vector.extract_strided_slice %220 {offsets = [2, 0], sizes = [1, 512], strides = [1, 1]} : vector<4x512xf32> to vector<1x512xf32>
    %235 = vector.broadcast %233 : vector<4x1xf32> to vector<4x512xf32>
    %236 = vector.broadcast %234 : vector<1x512xf32> to vector<4x512xf32>
    %237 = arith.mulf %235, %236 : vector<4x512xf32>
    %238 = arith.addf %232, %237 : vector<4x512xf32>
    %239 = vector.extract_strided_slice %67 {offsets = [0, 23], sizes = [4, 1], strides = [1, 1]} : vector<4x36xf32> to vector<4x1xf32>
    %240 = vector.extract_strided_slice %220 {offsets = [3, 0], sizes = [1, 512], strides = [1, 1]} : vector<4x512xf32> to vector<1x512xf32>
    %241 = vector.broadcast %239 : vector<4x1xf32> to vector<4x512xf32>
    %242 = vector.broadcast %240 : vector<1x512xf32> to vector<4x512xf32>
    %243 = arith.mulf %241, %242 : vector<4x512xf32>
    %244 = arith.addf %238, %243 : vector<4x512xf32>
    %c497_i32 = arith.constant 497 : i32
    %245 = tpu.dynamic_rotate %0 by %c497_i32 dim 1 : vector<4x512xf32>, i32 -> vector<4x512xf32>
    %cst_39 = arith.constant 0.000000e+00 : f32
    %246 = vector.shape_cast %64 : vector<1x512xi1> to vector<1x512xi1>
    %247 = vector.broadcast %246 : vector<1x512xi1> to vector<4x512xi1>
    %248 = vector.broadcast %cst_39 : f32 to vector<4x512xf32>
    %249 = arith.select %247, %245, %248 : vector<4x512xi1>, vector<4x512xf32>
    %250 = vector.extract_strided_slice %67 {offsets = [0, 24], sizes = [4, 1], strides = [1, 1]} : vector<4x36xf32> to vector<4x1xf32>
    %251 = vector.extract_strided_slice %249 {offsets = [0, 0], sizes = [1, 512], strides = [1, 1]} : vector<4x512xf32> to vector<1x512xf32>
    %252 = vector.broadcast %250 : vector<4x1xf32> to vector<4x512xf32>
    %253 = vector.broadcast %251 : vector<1x512xf32> to vector<4x512xf32>
    %254 = arith.mulf %252, %253 : vector<4x512xf32>
    %255 = arith.addf %244, %254 : vector<4x512xf32>
    %256 = vector.extract_strided_slice %67 {offsets = [0, 25], sizes = [4, 1], strides = [1, 1]} : vector<4x36xf32> to vector<4x1xf32>
    %257 = vector.extract_strided_slice %249 {offsets = [1, 0], sizes = [1, 512], strides = [1, 1]} : vector<4x512xf32> to vector<1x512xf32>
    %258 = vector.broadcast %256 : vector<4x1xf32> to vector<4x512xf32>
    %259 = vector.broadcast %257 : vector<1x512xf32> to vector<4x512xf32>
    %260 = arith.mulf %258, %259 : vector<4x512xf32>
    %261 = arith.addf %255, %260 : vector<4x512xf32>
    %262 = vector.extract_strided_slice %67 {offsets = [0, 26], sizes = [4, 1], strides = [1, 1]} : vector<4x36xf32> to vector<4x1xf32>
    %263 = vector.extract_strided_slice %249 {offsets = [2, 0], sizes = [1, 512], strides = [1, 1]} : vector<4x512xf32> to vector<1x512xf32>
    %264 = vector.broadcast %262 : vector<4x1xf32> to vector<4x512xf32>
    %265 = vector.broadcast %263 : vector<1x512xf32> to vector<4x512xf32>
    %266 = arith.mulf %264, %265 : vector<4x512xf32>
    %267 = arith.addf %261, %266 : vector<4x512xf32>
    %268 = vector.extract_strided_slice %67 {offsets = [0, 27], sizes = [4, 1], strides = [1, 1]} : vector<4x36xf32> to vector<4x1xf32>
    %269 = vector.extract_strided_slice %249 {offsets = [3, 0], sizes = [1, 512], strides = [1, 1]} : vector<4x512xf32> to vector<1x512xf32>
    %270 = vector.broadcast %268 : vector<4x1xf32> to vector<4x512xf32>
    %271 = vector.broadcast %269 : vector<1x512xf32> to vector<4x512xf32>
    %272 = arith.mulf %270, %271 : vector<4x512xf32>
    %273 = arith.addf %267, %272 : vector<4x512xf32>
    %c496_i32 = arith.constant 496 : i32
    %274 = tpu.dynamic_rotate %0 by %c496_i32 dim 1 : vector<4x512xf32>, i32 -> vector<4x512xf32>
    %cst_40 = arith.constant 0.000000e+00 : f32
    %275 = vector.shape_cast %65 : vector<1x512xi1> to vector<1x512xi1>
    %276 = vector.broadcast %275 : vector<1x512xi1> to vector<4x512xi1>
    %277 = vector.broadcast %cst_40 : f32 to vector<4x512xf32>
    %278 = arith.select %276, %274, %277 : vector<4x512xi1>, vector<4x512xf32>
    %279 = vector.extract_strided_slice %67 {offsets = [0, 28], sizes = [4, 1], strides = [1, 1]} : vector<4x36xf32> to vector<4x1xf32>
    %280 = vector.extract_strided_slice %278 {offsets = [0, 0], sizes = [1, 512], strides = [1, 1]} : vector<4x512xf32> to vector<1x512xf32>
    %281 = vector.broadcast %279 : vector<4x1xf32> to vector<4x512xf32>
    %282 = vector.broadcast %280 : vector<1x512xf32> to vector<4x512xf32>
    %283 = arith.mulf %281, %282 : vector<4x512xf32>
    %284 = arith.addf %273, %283 : vector<4x512xf32>
    %285 = vector.extract_strided_slice %67 {offsets = [0, 29], sizes = [4, 1], strides = [1, 1]} : vector<4x36xf32> to vector<4x1xf32>
    %286 = vector.extract_strided_slice %278 {offsets = [1, 0], sizes = [1, 512], strides = [1, 1]} : vector<4x512xf32> to vector<1x512xf32>
    %287 = vector.broadcast %285 : vector<4x1xf32> to vector<4x512xf32>
    %288 = vector.broadcast %286 : vector<1x512xf32> to vector<4x512xf32>
    %289 = arith.mulf %287, %288 : vector<4x512xf32>
    %290 = arith.addf %284, %289 : vector<4x512xf32>
    %291 = vector.extract_strided_slice %67 {offsets = [0, 30], sizes = [4, 1], strides = [1, 1]} : vector<4x36xf32> to vector<4x1xf32>
    %292 = vector.extract_strided_slice %278 {offsets = [2, 0], sizes = [1, 512], strides = [1, 1]} : vector<4x512xf32> to vector<1x512xf32>
    %293 = vector.broadcast %291 : vector<4x1xf32> to vector<4x512xf32>
    %294 = vector.broadcast %292 : vector<1x512xf32> to vector<4x512xf32>
    %295 = arith.mulf %293, %294 : vector<4x512xf32>
    %296 = arith.addf %290, %295 : vector<4x512xf32>
    %297 = vector.extract_strided_slice %67 {offsets = [0, 31], sizes = [4, 1], strides = [1, 1]} : vector<4x36xf32> to vector<4x1xf32>
    %298 = vector.extract_strided_slice %278 {offsets = [3, 0], sizes = [1, 512], strides = [1, 1]} : vector<4x512xf32> to vector<1x512xf32>
    %299 = vector.broadcast %297 : vector<4x1xf32> to vector<4x512xf32>
    %300 = vector.broadcast %298 : vector<1x512xf32> to vector<4x512xf32>
    %301 = arith.mulf %299, %300 : vector<4x512xf32>
    %302 = arith.addf %296, %301 : vector<4x512xf32>
    %c495_i32 = arith.constant 495 : i32
    %303 = tpu.dynamic_rotate %0 by %c495_i32 dim 1 : vector<4x512xf32>, i32 -> vector<4x512xf32>
    %cst_41 = arith.constant 0.000000e+00 : f32
    %304 = vector.shape_cast %66 : vector<1x512xi1> to vector<1x512xi1>
    %305 = vector.broadcast %304 : vector<1x512xi1> to vector<4x512xi1>
    %306 = vector.broadcast %cst_41 : f32 to vector<4x512xf32>
    %307 = arith.select %305, %303, %306 : vector<4x512xi1>, vector<4x512xf32>
    %308 = vector.extract_strided_slice %67 {offsets = [0, 32], sizes = [4, 1], strides = [1, 1]} : vector<4x36xf32> to vector<4x1xf32>
    %309 = vector.extract_strided_slice %307 {offsets = [0, 0], sizes = [1, 512], strides = [1, 1]} : vector<4x512xf32> to vector<1x512xf32>
    %310 = vector.broadcast %308 : vector<4x1xf32> to vector<4x512xf32>
    %311 = vector.broadcast %309 : vector<1x512xf32> to vector<4x512xf32>
    %312 = arith.mulf %310, %311 : vector<4x512xf32>
    %313 = arith.addf %302, %312 : vector<4x512xf32>
    %314 = vector.extract_strided_slice %67 {offsets = [0, 33], sizes = [4, 1], strides = [1, 1]} : vector<4x36xf32> to vector<4x1xf32>
    %315 = vector.extract_strided_slice %307 {offsets = [1, 0], sizes = [1, 512], strides = [1, 1]} : vector<4x512xf32> to vector<1x512xf32>
    %316 = vector.broadcast %314 : vector<4x1xf32> to vector<4x512xf32>
    %317 = vector.broadcast %315 : vector<1x512xf32> to vector<4x512xf32>
    %318 = arith.mulf %316, %317 : vector<4x512xf32>
    %319 = arith.addf %313, %318 : vector<4x512xf32>
    %320 = vector.extract_strided_slice %67 {offsets = [0, 34], sizes = [4, 1], strides = [1, 1]} : vector<4x36xf32> to vector<4x1xf32>
    %321 = vector.extract_strided_slice %307 {offsets = [2, 0], sizes = [1, 512], strides = [1, 1]} : vector<4x512xf32> to vector<1x512xf32>
    %322 = vector.broadcast %320 : vector<4x1xf32> to vector<4x512xf32>
    %323 = vector.broadcast %321 : vector<1x512xf32> to vector<4x512xf32>
    %324 = arith.mulf %322, %323 : vector<4x512xf32>
    %325 = arith.addf %319, %324 : vector<4x512xf32>
    %326 = vector.extract_strided_slice %67 {offsets = [0, 35], sizes = [4, 1], strides = [1, 1]} : vector<4x36xf32> to vector<4x1xf32>
    %327 = vector.extract_strided_slice %307 {offsets = [3, 0], sizes = [1, 512], strides = [1, 1]} : vector<4x512xf32> to vector<1x512xf32>
    %328 = vector.broadcast %326 : vector<4x1xf32> to vector<4x512xf32>
    %329 = vector.broadcast %327 : vector<1x512xf32> to vector<4x512xf32>
    %330 = arith.mulf %328, %329 : vector<4x512xf32>
    %331 = arith.addf %325, %330 : vector<4x512xf32>
    %332 = vector.broadcast %69 : vector<4x1xf32> to vector<4x512xf32>
    %333 = arith.addf %331, %332 : vector<4x512xf32>
    %cst_42 = arith.constant 0.000000e+00 : f32
    %334 = vector.broadcast %cst_42 : f32 to vector<4x512xf32>
    %335 = arith.maximumf %333, %334 : vector<4x512xf32>
    %cst_43 = arith.constant 0.000000e+00 : f32
    %336 = vector.broadcast %cst_43 : f32 to vector<4x512xf32>
    %c17_i32_44 = arith.constant 17 : i32
    %337 = tpu.dynamic_rotate %335 by %c17_i32_44 dim 1 : vector<4x512xf32>, i32 -> vector<4x512xf32>
    %cst_45 = arith.constant 0.000000e+00 : f32
    %338 = vector.shape_cast %58 : vector<1x512xi1> to vector<1x512xi1>
    %339 = vector.broadcast %338 : vector<1x512xi1> to vector<4x512xi1>
    %340 = vector.broadcast %cst_45 : f32 to vector<4x512xf32>
    %341 = arith.select %339, %337, %340 : vector<4x512xi1>, vector<4x512xf32>
    %342 = vector.extract_strided_slice %68 {offsets = [0, 0], sizes = [4, 1], strides = [1, 1]} : vector<4x36xf32> to vector<4x1xf32>
    %343 = vector.extract_strided_slice %341 {offsets = [0, 0], sizes = [1, 512], strides = [1, 1]} : vector<4x512xf32> to vector<1x512xf32>
    %344 = vector.broadcast %342 : vector<4x1xf32> to vector<4x512xf32>
    %345 = vector.broadcast %343 : vector<1x512xf32> to vector<4x512xf32>
    %346 = arith.mulf %344, %345 : vector<4x512xf32>
    %347 = arith.addf %336, %346 : vector<4x512xf32>
    %348 = vector.extract_strided_slice %68 {offsets = [0, 1], sizes = [4, 1], strides = [1, 1]} : vector<4x36xf32> to vector<4x1xf32>
    %349 = vector.extract_strided_slice %341 {offsets = [1, 0], sizes = [1, 512], strides = [1, 1]} : vector<4x512xf32> to vector<1x512xf32>
    %350 = vector.broadcast %348 : vector<4x1xf32> to vector<4x512xf32>
    %351 = vector.broadcast %349 : vector<1x512xf32> to vector<4x512xf32>
    %352 = arith.mulf %350, %351 : vector<4x512xf32>
    %353 = arith.addf %347, %352 : vector<4x512xf32>
    %354 = vector.extract_strided_slice %68 {offsets = [0, 2], sizes = [4, 1], strides = [1, 1]} : vector<4x36xf32> to vector<4x1xf32>
    %355 = vector.extract_strided_slice %341 {offsets = [2, 0], sizes = [1, 512], strides = [1, 1]} : vector<4x512xf32> to vector<1x512xf32>
    %356 = vector.broadcast %354 : vector<4x1xf32> to vector<4x512xf32>
    %357 = vector.broadcast %355 : vector<1x512xf32> to vector<4x512xf32>
    %358 = arith.mulf %356, %357 : vector<4x512xf32>
    %359 = arith.addf %353, %358 : vector<4x512xf32>
    %360 = vector.extract_strided_slice %68 {offsets = [0, 3], sizes = [4, 1], strides = [1, 1]} : vector<4x36xf32> to vector<4x1xf32>
    %361 = vector.extract_strided_slice %341 {offsets = [3, 0], sizes = [1, 512], strides = [1, 1]} : vector<4x512xf32> to vector<1x512xf32>
    %362 = vector.broadcast %360 : vector<4x1xf32> to vector<4x512xf32>
    %363 = vector.broadcast %361 : vector<1x512xf32> to vector<4x512xf32>
    %364 = arith.mulf %362, %363 : vector<4x512xf32>
    %365 = arith.addf %359, %364 : vector<4x512xf32>
    %c16_i32_46 = arith.constant 16 : i32
    %366 = tpu.dynamic_rotate %335 by %c16_i32_46 dim 1 : vector<4x512xf32>, i32 -> vector<4x512xf32>
    %cst_47 = arith.constant 0.000000e+00 : f32
    %367 = vector.shape_cast %59 : vector<1x512xi1> to vector<1x512xi1>
    %368 = vector.broadcast %367 : vector<1x512xi1> to vector<4x512xi1>
    %369 = vector.broadcast %cst_47 : f32 to vector<4x512xf32>
    %370 = arith.select %368, %366, %369 : vector<4x512xi1>, vector<4x512xf32>
    %371 = vector.extract_strided_slice %68 {offsets = [0, 4], sizes = [4, 1], strides = [1, 1]} : vector<4x36xf32> to vector<4x1xf32>
    %372 = vector.extract_strided_slice %370 {offsets = [0, 0], sizes = [1, 512], strides = [1, 1]} : vector<4x512xf32> to vector<1x512xf32>
    %373 = vector.broadcast %371 : vector<4x1xf32> to vector<4x512xf32>
    %374 = vector.broadcast %372 : vector<1x512xf32> to vector<4x512xf32>
    %375 = arith.mulf %373, %374 : vector<4x512xf32>
    %376 = arith.addf %365, %375 : vector<4x512xf32>
    %377 = vector.extract_strided_slice %68 {offsets = [0, 5], sizes = [4, 1], strides = [1, 1]} : vector<4x36xf32> to vector<4x1xf32>
    %378 = vector.extract_strided_slice %370 {offsets = [1, 0], sizes = [1, 512], strides = [1, 1]} : vector<4x512xf32> to vector<1x512xf32>
    %379 = vector.broadcast %377 : vector<4x1xf32> to vector<4x512xf32>
    %380 = vector.broadcast %378 : vector<1x512xf32> to vector<4x512xf32>
    %381 = arith.mulf %379, %380 : vector<4x512xf32>
    %382 = arith.addf %376, %381 : vector<4x512xf32>
    %383 = vector.extract_strided_slice %68 {offsets = [0, 6], sizes = [4, 1], strides = [1, 1]} : vector<4x36xf32> to vector<4x1xf32>
    %384 = vector.extract_strided_slice %370 {offsets = [2, 0], sizes = [1, 512], strides = [1, 1]} : vector<4x512xf32> to vector<1x512xf32>
    %385 = vector.broadcast %383 : vector<4x1xf32> to vector<4x512xf32>
    %386 = vector.broadcast %384 : vector<1x512xf32> to vector<4x512xf32>
    %387 = arith.mulf %385, %386 : vector<4x512xf32>
    %388 = arith.addf %382, %387 : vector<4x512xf32>
    %389 = vector.extract_strided_slice %68 {offsets = [0, 7], sizes = [4, 1], strides = [1, 1]} : vector<4x36xf32> to vector<4x1xf32>
    %390 = vector.extract_strided_slice %370 {offsets = [3, 0], sizes = [1, 512], strides = [1, 1]} : vector<4x512xf32> to vector<1x512xf32>
    %391 = vector.broadcast %389 : vector<4x1xf32> to vector<4x512xf32>
    %392 = vector.broadcast %390 : vector<1x512xf32> to vector<4x512xf32>
    %393 = arith.mulf %391, %392 : vector<4x512xf32>
    %394 = arith.addf %388, %393 : vector<4x512xf32>
    %c15_i32_48 = arith.constant 15 : i32
    %395 = tpu.dynamic_rotate %335 by %c15_i32_48 dim 1 : vector<4x512xf32>, i32 -> vector<4x512xf32>
    %cst_49 = arith.constant 0.000000e+00 : f32
    %396 = vector.shape_cast %60 : vector<1x512xi1> to vector<1x512xi1>
    %397 = vector.broadcast %396 : vector<1x512xi1> to vector<4x512xi1>
    %398 = vector.broadcast %cst_49 : f32 to vector<4x512xf32>
    %399 = arith.select %397, %395, %398 : vector<4x512xi1>, vector<4x512xf32>
    %400 = vector.extract_strided_slice %68 {offsets = [0, 8], sizes = [4, 1], strides = [1, 1]} : vector<4x36xf32> to vector<4x1xf32>
    %401 = vector.extract_strided_slice %399 {offsets = [0, 0], sizes = [1, 512], strides = [1, 1]} : vector<4x512xf32> to vector<1x512xf32>
    %402 = vector.broadcast %400 : vector<4x1xf32> to vector<4x512xf32>
    %403 = vector.broadcast %401 : vector<1x512xf32> to vector<4x512xf32>
    %404 = arith.mulf %402, %403 : vector<4x512xf32>
    %405 = arith.addf %394, %404 : vector<4x512xf32>
    %406 = vector.extract_strided_slice %68 {offsets = [0, 9], sizes = [4, 1], strides = [1, 1]} : vector<4x36xf32> to vector<4x1xf32>
    %407 = vector.extract_strided_slice %399 {offsets = [1, 0], sizes = [1, 512], strides = [1, 1]} : vector<4x512xf32> to vector<1x512xf32>
    %408 = vector.broadcast %406 : vector<4x1xf32> to vector<4x512xf32>
    %409 = vector.broadcast %407 : vector<1x512xf32> to vector<4x512xf32>
    %410 = arith.mulf %408, %409 : vector<4x512xf32>
    %411 = arith.addf %405, %410 : vector<4x512xf32>
    %412 = vector.extract_strided_slice %68 {offsets = [0, 10], sizes = [4, 1], strides = [1, 1]} : vector<4x36xf32> to vector<4x1xf32>
    %413 = vector.extract_strided_slice %399 {offsets = [2, 0], sizes = [1, 512], strides = [1, 1]} : vector<4x512xf32> to vector<1x512xf32>
    %414 = vector.broadcast %412 : vector<4x1xf32> to vector<4x512xf32>
    %415 = vector.broadcast %413 : vector<1x512xf32> to vector<4x512xf32>
    %416 = arith.mulf %414, %415 : vector<4x512xf32>
    %417 = arith.addf %411, %416 : vector<4x512xf32>
    %418 = vector.extract_strided_slice %68 {offsets = [0, 11], sizes = [4, 1], strides = [1, 1]} : vector<4x36xf32> to vector<4x1xf32>
    %419 = vector.extract_strided_slice %399 {offsets = [3, 0], sizes = [1, 512], strides = [1, 1]} : vector<4x512xf32> to vector<1x512xf32>
    %420 = vector.broadcast %418 : vector<4x1xf32> to vector<4x512xf32>
    %421 = vector.broadcast %419 : vector<1x512xf32> to vector<4x512xf32>
    %422 = arith.mulf %420, %421 : vector<4x512xf32>
    %423 = arith.addf %417, %422 : vector<4x512xf32>
    %c1_i32_50 = arith.constant 1 : i32
    %424 = tpu.dynamic_rotate %335 by %c1_i32_50 dim 1 : vector<4x512xf32>, i32 -> vector<4x512xf32>
    %cst_51 = arith.constant 0.000000e+00 : f32
    %425 = vector.shape_cast %61 : vector<1x512xi1> to vector<1x512xi1>
    %426 = vector.broadcast %425 : vector<1x512xi1> to vector<4x512xi1>
    %427 = vector.broadcast %cst_51 : f32 to vector<4x512xf32>
    %428 = arith.select %426, %424, %427 : vector<4x512xi1>, vector<4x512xf32>
    %429 = vector.extract_strided_slice %68 {offsets = [0, 12], sizes = [4, 1], strides = [1, 1]} : vector<4x36xf32> to vector<4x1xf32>
    %430 = vector.extract_strided_slice %428 {offsets = [0, 0], sizes = [1, 512], strides = [1, 1]} : vector<4x512xf32> to vector<1x512xf32>
    %431 = vector.broadcast %429 : vector<4x1xf32> to vector<4x512xf32>
    %432 = vector.broadcast %430 : vector<1x512xf32> to vector<4x512xf32>
    %433 = arith.mulf %431, %432 : vector<4x512xf32>
    %434 = arith.addf %423, %433 : vector<4x512xf32>
    %435 = vector.extract_strided_slice %68 {offsets = [0, 13], sizes = [4, 1], strides = [1, 1]} : vector<4x36xf32> to vector<4x1xf32>
    %436 = vector.extract_strided_slice %428 {offsets = [1, 0], sizes = [1, 512], strides = [1, 1]} : vector<4x512xf32> to vector<1x512xf32>
    %437 = vector.broadcast %435 : vector<4x1xf32> to vector<4x512xf32>
    %438 = vector.broadcast %436 : vector<1x512xf32> to vector<4x512xf32>
    %439 = arith.mulf %437, %438 : vector<4x512xf32>
    %440 = arith.addf %434, %439 : vector<4x512xf32>
    %441 = vector.extract_strided_slice %68 {offsets = [0, 14], sizes = [4, 1], strides = [1, 1]} : vector<4x36xf32> to vector<4x1xf32>
    %442 = vector.extract_strided_slice %428 {offsets = [2, 0], sizes = [1, 512], strides = [1, 1]} : vector<4x512xf32> to vector<1x512xf32>
    %443 = vector.broadcast %441 : vector<4x1xf32> to vector<4x512xf32>
    %444 = vector.broadcast %442 : vector<1x512xf32> to vector<4x512xf32>
    %445 = arith.mulf %443, %444 : vector<4x512xf32>
    %446 = arith.addf %440, %445 : vector<4x512xf32>
    %447 = vector.extract_strided_slice %68 {offsets = [0, 15], sizes = [4, 1], strides = [1, 1]} : vector<4x36xf32> to vector<4x1xf32>
    %448 = vector.extract_strided_slice %428 {offsets = [3, 0], sizes = [1, 512], strides = [1, 1]} : vector<4x512xf32> to vector<1x512xf32>
    %449 = vector.broadcast %447 : vector<4x1xf32> to vector<4x512xf32>
    %450 = vector.broadcast %448 : vector<1x512xf32> to vector<4x512xf32>
    %451 = arith.mulf %449, %450 : vector<4x512xf32>
    %452 = arith.addf %446, %451 : vector<4x512xf32>
    %cst_52 = arith.constant 0.000000e+00 : f32
    %453 = vector.shape_cast %62 : vector<1x512xi1> to vector<1x512xi1>
    %454 = vector.broadcast %453 : vector<1x512xi1> to vector<4x512xi1>
    %455 = vector.broadcast %cst_52 : f32 to vector<4x512xf32>
    %456 = arith.select %454, %335, %455 : vector<4x512xi1>, vector<4x512xf32>
    %457 = vector.extract_strided_slice %68 {offsets = [0, 16], sizes = [4, 1], strides = [1, 1]} : vector<4x36xf32> to vector<4x1xf32>
    %458 = vector.extract_strided_slice %456 {offsets = [0, 0], sizes = [1, 512], strides = [1, 1]} : vector<4x512xf32> to vector<1x512xf32>
    %459 = vector.broadcast %457 : vector<4x1xf32> to vector<4x512xf32>
    %460 = vector.broadcast %458 : vector<1x512xf32> to vector<4x512xf32>
    %461 = arith.mulf %459, %460 : vector<4x512xf32>
    %462 = arith.addf %452, %461 : vector<4x512xf32>
    %463 = vector.extract_strided_slice %68 {offsets = [0, 17], sizes = [4, 1], strides = [1, 1]} : vector<4x36xf32> to vector<4x1xf32>
    %464 = vector.extract_strided_slice %456 {offsets = [1, 0], sizes = [1, 512], strides = [1, 1]} : vector<4x512xf32> to vector<1x512xf32>
    %465 = vector.broadcast %463 : vector<4x1xf32> to vector<4x512xf32>
    %466 = vector.broadcast %464 : vector<1x512xf32> to vector<4x512xf32>
    %467 = arith.mulf %465, %466 : vector<4x512xf32>
    %468 = arith.addf %462, %467 : vector<4x512xf32>
    %469 = vector.extract_strided_slice %68 {offsets = [0, 18], sizes = [4, 1], strides = [1, 1]} : vector<4x36xf32> to vector<4x1xf32>
    %470 = vector.extract_strided_slice %456 {offsets = [2, 0], sizes = [1, 512], strides = [1, 1]} : vector<4x512xf32> to vector<1x512xf32>
    %471 = vector.broadcast %469 : vector<4x1xf32> to vector<4x512xf32>
    %472 = vector.broadcast %470 : vector<1x512xf32> to vector<4x512xf32>
    %473 = arith.mulf %471, %472 : vector<4x512xf32>
    %474 = arith.addf %468, %473 : vector<4x512xf32>
    %475 = vector.extract_strided_slice %68 {offsets = [0, 19], sizes = [4, 1], strides = [1, 1]} : vector<4x36xf32> to vector<4x1xf32>
    %476 = vector.extract_strided_slice %456 {offsets = [3, 0], sizes = [1, 512], strides = [1, 1]} : vector<4x512xf32> to vector<1x512xf32>
    %477 = vector.broadcast %475 : vector<4x1xf32> to vector<4x512xf32>
    %478 = vector.broadcast %476 : vector<1x512xf32> to vector<4x512xf32>
    %479 = arith.mulf %477, %478 : vector<4x512xf32>
    %480 = arith.addf %474, %479 : vector<4x512xf32>
    %c511_i32_53 = arith.constant 511 : i32
    %481 = tpu.dynamic_rotate %335 by %c511_i32_53 dim 1 : vector<4x512xf32>, i32 -> vector<4x512xf32>
    %cst_54 = arith.constant 0.000000e+00 : f32
    %482 = vector.shape_cast %63 : vector<1x512xi1> to vector<1x512xi1>
    %483 = vector.broadcast %482 : vector<1x512xi1> to vector<4x512xi1>
    %484 = vector.broadcast %cst_54 : f32 to vector<4x512xf32>
    %485 = arith.select %483, %481, %484 : vector<4x512xi1>, vector<4x512xf32>
    %486 = vector.extract_strided_slice %68 {offsets = [0, 20], sizes = [4, 1], strides = [1, 1]} : vector<4x36xf32> to vector<4x1xf32>
    %487 = vector.extract_strided_slice %485 {offsets = [0, 0], sizes = [1, 512], strides = [1, 1]} : vector<4x512xf32> to vector<1x512xf32>
    %488 = vector.broadcast %486 : vector<4x1xf32> to vector<4x512xf32>
    %489 = vector.broadcast %487 : vector<1x512xf32> to vector<4x512xf32>
    %490 = arith.mulf %488, %489 : vector<4x512xf32>
    %491 = arith.addf %480, %490 : vector<4x512xf32>
    %492 = vector.extract_strided_slice %68 {offsets = [0, 21], sizes = [4, 1], strides = [1, 1]} : vector<4x36xf32> to vector<4x1xf32>
    %493 = vector.extract_strided_slice %485 {offsets = [1, 0], sizes = [1, 512], strides = [1, 1]} : vector<4x512xf32> to vector<1x512xf32>
    %494 = vector.broadcast %492 : vector<4x1xf32> to vector<4x512xf32>
    %495 = vector.broadcast %493 : vector<1x512xf32> to vector<4x512xf32>
    %496 = arith.mulf %494, %495 : vector<4x512xf32>
    %497 = arith.addf %491, %496 : vector<4x512xf32>
    %498 = vector.extract_strided_slice %68 {offsets = [0, 22], sizes = [4, 1], strides = [1, 1]} : vector<4x36xf32> to vector<4x1xf32>
    %499 = vector.extract_strided_slice %485 {offsets = [2, 0], sizes = [1, 512], strides = [1, 1]} : vector<4x512xf32> to vector<1x512xf32>
    %500 = vector.broadcast %498 : vector<4x1xf32> to vector<4x512xf32>
    %501 = vector.broadcast %499 : vector<1x512xf32> to vector<4x512xf32>
    %502 = arith.mulf %500, %501 : vector<4x512xf32>
    %503 = arith.addf %497, %502 : vector<4x512xf32>
    %504 = vector.extract_strided_slice %68 {offsets = [0, 23], sizes = [4, 1], strides = [1, 1]} : vector<4x36xf32> to vector<4x1xf32>
    %505 = vector.extract_strided_slice %485 {offsets = [3, 0], sizes = [1, 512], strides = [1, 1]} : vector<4x512xf32> to vector<1x512xf32>
    %506 = vector.broadcast %504 : vector<4x1xf32> to vector<4x512xf32>
    %507 = vector.broadcast %505 : vector<1x512xf32> to vector<4x512xf32>
    %508 = arith.mulf %506, %507 : vector<4x512xf32>
    %509 = arith.addf %503, %508 : vector<4x512xf32>
    %c497_i32_55 = arith.constant 497 : i32
    %510 = tpu.dynamic_rotate %335 by %c497_i32_55 dim 1 : vector<4x512xf32>, i32 -> vector<4x512xf32>
    %cst_56 = arith.constant 0.000000e+00 : f32
    %511 = vector.shape_cast %64 : vector<1x512xi1> to vector<1x512xi1>
    %512 = vector.broadcast %511 : vector<1x512xi1> to vector<4x512xi1>
    %513 = vector.broadcast %cst_56 : f32 to vector<4x512xf32>
    %514 = arith.select %512, %510, %513 : vector<4x512xi1>, vector<4x512xf32>
    %515 = vector.extract_strided_slice %68 {offsets = [0, 24], sizes = [4, 1], strides = [1, 1]} : vector<4x36xf32> to vector<4x1xf32>
    %516 = vector.extract_strided_slice %514 {offsets = [0, 0], sizes = [1, 512], strides = [1, 1]} : vector<4x512xf32> to vector<1x512xf32>
    %517 = vector.broadcast %515 : vector<4x1xf32> to vector<4x512xf32>
    %518 = vector.broadcast %516 : vector<1x512xf32> to vector<4x512xf32>
    %519 = arith.mulf %517, %518 : vector<4x512xf32>
    %520 = arith.addf %509, %519 : vector<4x512xf32>
    %521 = vector.extract_strided_slice %68 {offsets = [0, 25], sizes = [4, 1], strides = [1, 1]} : vector<4x36xf32> to vector<4x1xf32>
    %522 = vector.extract_strided_slice %514 {offsets = [1, 0], sizes = [1, 512], strides = [1, 1]} : vector<4x512xf32> to vector<1x512xf32>
    %523 = vector.broadcast %521 : vector<4x1xf32> to vector<4x512xf32>
    %524 = vector.broadcast %522 : vector<1x512xf32> to vector<4x512xf32>
    %525 = arith.mulf %523, %524 : vector<4x512xf32>
    %526 = arith.addf %520, %525 : vector<4x512xf32>
    %527 = vector.extract_strided_slice %68 {offsets = [0, 26], sizes = [4, 1], strides = [1, 1]} : vector<4x36xf32> to vector<4x1xf32>
    %528 = vector.extract_strided_slice %514 {offsets = [2, 0], sizes = [1, 512], strides = [1, 1]} : vector<4x512xf32> to vector<1x512xf32>
    %529 = vector.broadcast %527 : vector<4x1xf32> to vector<4x512xf32>
    %530 = vector.broadcast %528 : vector<1x512xf32> to vector<4x512xf32>
    %531 = arith.mulf %529, %530 : vector<4x512xf32>
    %532 = arith.addf %526, %531 : vector<4x512xf32>
    %533 = vector.extract_strided_slice %68 {offsets = [0, 27], sizes = [4, 1], strides = [1, 1]} : vector<4x36xf32> to vector<4x1xf32>
    %534 = vector.extract_strided_slice %514 {offsets = [3, 0], sizes = [1, 512], strides = [1, 1]} : vector<4x512xf32> to vector<1x512xf32>
    %535 = vector.broadcast %533 : vector<4x1xf32> to vector<4x512xf32>
    %536 = vector.broadcast %534 : vector<1x512xf32> to vector<4x512xf32>
    %537 = arith.mulf %535, %536 : vector<4x512xf32>
    %538 = arith.addf %532, %537 : vector<4x512xf32>
    %c496_i32_57 = arith.constant 496 : i32
    %539 = tpu.dynamic_rotate %335 by %c496_i32_57 dim 1 : vector<4x512xf32>, i32 -> vector<4x512xf32>
    %cst_58 = arith.constant 0.000000e+00 : f32
    %540 = vector.shape_cast %65 : vector<1x512xi1> to vector<1x512xi1>
    %541 = vector.broadcast %540 : vector<1x512xi1> to vector<4x512xi1>
    %542 = vector.broadcast %cst_58 : f32 to vector<4x512xf32>
    %543 = arith.select %541, %539, %542 : vector<4x512xi1>, vector<4x512xf32>
    %544 = vector.extract_strided_slice %68 {offsets = [0, 28], sizes = [4, 1], strides = [1, 1]} : vector<4x36xf32> to vector<4x1xf32>
    %545 = vector.extract_strided_slice %543 {offsets = [0, 0], sizes = [1, 512], strides = [1, 1]} : vector<4x512xf32> to vector<1x512xf32>
    %546 = vector.broadcast %544 : vector<4x1xf32> to vector<4x512xf32>
    %547 = vector.broadcast %545 : vector<1x512xf32> to vector<4x512xf32>
    %548 = arith.mulf %546, %547 : vector<4x512xf32>
    %549 = arith.addf %538, %548 : vector<4x512xf32>
    %550 = vector.extract_strided_slice %68 {offsets = [0, 29], sizes = [4, 1], strides = [1, 1]} : vector<4x36xf32> to vector<4x1xf32>
    %551 = vector.extract_strided_slice %543 {offsets = [1, 0], sizes = [1, 512], strides = [1, 1]} : vector<4x512xf32> to vector<1x512xf32>
    %552 = vector.broadcast %550 : vector<4x1xf32> to vector<4x512xf32>
    %553 = vector.broadcast %551 : vector<1x512xf32> to vector<4x512xf32>
    %554 = arith.mulf %552, %553 : vector<4x512xf32>
    %555 = arith.addf %549, %554 : vector<4x512xf32>
    %556 = vector.extract_strided_slice %68 {offsets = [0, 30], sizes = [4, 1], strides = [1, 1]} : vector<4x36xf32> to vector<4x1xf32>
    %557 = vector.extract_strided_slice %543 {offsets = [2, 0], sizes = [1, 512], strides = [1, 1]} : vector<4x512xf32> to vector<1x512xf32>
    %558 = vector.broadcast %556 : vector<4x1xf32> to vector<4x512xf32>
    %559 = vector.broadcast %557 : vector<1x512xf32> to vector<4x512xf32>
    %560 = arith.mulf %558, %559 : vector<4x512xf32>
    %561 = arith.addf %555, %560 : vector<4x512xf32>
    %562 = vector.extract_strided_slice %68 {offsets = [0, 31], sizes = [4, 1], strides = [1, 1]} : vector<4x36xf32> to vector<4x1xf32>
    %563 = vector.extract_strided_slice %543 {offsets = [3, 0], sizes = [1, 512], strides = [1, 1]} : vector<4x512xf32> to vector<1x512xf32>
    %564 = vector.broadcast %562 : vector<4x1xf32> to vector<4x512xf32>
    %565 = vector.broadcast %563 : vector<1x512xf32> to vector<4x512xf32>
    %566 = arith.mulf %564, %565 : vector<4x512xf32>
    %567 = arith.addf %561, %566 : vector<4x512xf32>
    %c495_i32_59 = arith.constant 495 : i32
    %568 = tpu.dynamic_rotate %335 by %c495_i32_59 dim 1 : vector<4x512xf32>, i32 -> vector<4x512xf32>
    %cst_60 = arith.constant 0.000000e+00 : f32
    %569 = vector.shape_cast %66 : vector<1x512xi1> to vector<1x512xi1>
    %570 = vector.broadcast %569 : vector<1x512xi1> to vector<4x512xi1>
    %571 = vector.broadcast %cst_60 : f32 to vector<4x512xf32>
    %572 = arith.select %570, %568, %571 : vector<4x512xi1>, vector<4x512xf32>
    %573 = vector.extract_strided_slice %68 {offsets = [0, 32], sizes = [4, 1], strides = [1, 1]} : vector<4x36xf32> to vector<4x1xf32>
    %574 = vector.extract_strided_slice %572 {offsets = [0, 0], sizes = [1, 512], strides = [1, 1]} : vector<4x512xf32> to vector<1x512xf32>
    %575 = vector.broadcast %573 : vector<4x1xf32> to vector<4x512xf32>
    %576 = vector.broadcast %574 : vector<1x512xf32> to vector<4x512xf32>
    %577 = arith.mulf %575, %576 : vector<4x512xf32>
    %578 = arith.addf %567, %577 : vector<4x512xf32>
    %579 = vector.extract_strided_slice %68 {offsets = [0, 33], sizes = [4, 1], strides = [1, 1]} : vector<4x36xf32> to vector<4x1xf32>
    %580 = vector.extract_strided_slice %572 {offsets = [1, 0], sizes = [1, 512], strides = [1, 1]} : vector<4x512xf32> to vector<1x512xf32>
    %581 = vector.broadcast %579 : vector<4x1xf32> to vector<4x512xf32>
    %582 = vector.broadcast %580 : vector<1x512xf32> to vector<4x512xf32>
    %583 = arith.mulf %581, %582 : vector<4x512xf32>
    %584 = arith.addf %578, %583 : vector<4x512xf32>
    %585 = vector.extract_strided_slice %68 {offsets = [0, 34], sizes = [4, 1], strides = [1, 1]} : vector<4x36xf32> to vector<4x1xf32>
    %586 = vector.extract_strided_slice %572 {offsets = [2, 0], sizes = [1, 512], strides = [1, 1]} : vector<4x512xf32> to vector<1x512xf32>
    %587 = vector.broadcast %585 : vector<4x1xf32> to vector<4x512xf32>
    %588 = vector.broadcast %586 : vector<1x512xf32> to vector<4x512xf32>
    %589 = arith.mulf %587, %588 : vector<4x512xf32>
    %590 = arith.addf %584, %589 : vector<4x512xf32>
    %591 = vector.extract_strided_slice %68 {offsets = [0, 35], sizes = [4, 1], strides = [1, 1]} : vector<4x36xf32> to vector<4x1xf32>
    %592 = vector.extract_strided_slice %572 {offsets = [3, 0], sizes = [1, 512], strides = [1, 1]} : vector<4x512xf32> to vector<1x512xf32>
    %593 = vector.broadcast %591 : vector<4x1xf32> to vector<4x512xf32>
    %594 = vector.broadcast %592 : vector<1x512xf32> to vector<4x512xf32>
    %595 = arith.mulf %593, %594 : vector<4x512xf32>
    %596 = arith.addf %590, %595 : vector<4x512xf32>
    %597 = vector.broadcast %70 : vector<4x1xf32> to vector<4x512xf32>
    %598 = arith.addf %596, %597 : vector<4x512xf32>
    %599 = arith.addf %598, %0 : vector<4x512xf32>
    %c0_61 = arith.constant 0 : index
    %c0_62 = arith.constant 0 : index
    %600 = vector.load %arg7[%c0_61, %c0_62] : memref<4x512xf32, #tpu.memory_space<vmem>>, vector<4x512xf32>
    tpu.vector_store %arg7[%c0_61, %c0_62], %599 {strides = array<i32>} : memref<4x512xf32, #tpu.memory_space<vmem>>, vector<4x512xf32>,
    return
  }
  func.func @transform_0(%arg0: i32) -> (i32, i32) {
    %c0_i32 = arith.constant 0 : i32
    %c0_i32_0 = arith.constant 0 : i32
    return %c0_i32, %arg0 : i32, i32
  }
  func.func @transform_1(%arg0: i32) -> (i32, i32) {
    %c0_i32 = arith.constant 0 : i32
    %c0_i32_0 = arith.constant 0 : i32
    return %c0_i32, %arg0 : i32, i32
  }
  func.func @transform_2(%arg0: i32) -> (i32, i32) {
    %c0_i32 = arith.constant 0 : i32
    %c0_i32_0 = arith.constant 0 : i32
    %c0_i32_1 = arith.constant 0 : i32
    return %c0_i32, %c0_i32_0 : i32, i32
  }
  func.func @transform_3(%arg0: i32) -> (i32, i32) {
    %c0_i32 = arith.constant 0 : i32
    %c0_i32_0 = arith.constant 0 : i32
    %c0_i32_1 = arith.constant 0 : i32
    return %c0_i32, %c0_i32_0 : i32, i32
  }
  func.func @transform_4(%arg0: i32) -> (i32, i32) {
    %c0_i32 = arith.constant 0 : i32
    %c0_i32_0 = arith.constant 0 : i32
    %c0_i32_1 = arith.constant 0 : i32
    return %c0_i32, %c0_i32_0 : i32, i32
  }
  func.func @transform_5(%arg0: i32) -> (i32, i32) {
    %c0_i32 = arith.constant 0 : i32
    %c0_i32_0 = arith.constant 0 : i32
    %c0_i32_1 = arith.constant 0 : i32
    return %c0_i32, %c0_i32_0 : i32, i32
  }
  func.func @transform_6(%arg0: i32) -> (i32, i32) {
    %c0_i32 = arith.constant 0 : i32
    %c0_i32_0 = arith.constant 0 : i32
    return %c0_i32, %arg0 : i32, i32
  }
}

</mosaic_0001>

<llo_original>
// kernel: tpu_custom_call.1
$region0: #{tpu_custom_call.1}
  #allocation0 [shape = 'u32[]', space=smem, size = 0x4, offset = 0x4, fixed_abs, tag = 'smem constant byte address 0x4 - core index']
  #allocation1 [shape = 'u32[144,128]{1,0:T(1,128)}', space=vmem, size = 0x12000, scoped, tag = 'internal scratch']
  %s0 = inlined_call_operand.hbm [shape: f32[4,512], index: 0, kind: input, shape index: {}]
  %s1 = inlined_call_operand.vmem [shape: s32[2,512], index: 1, kind: input, shape index: {}]
  %s2 = inlined_call_operand.vmem [shape: f32[4,36], index: 2, kind: input, shape index: {}]
  %s3 = inlined_call_operand.vmem [shape: f32[4,1], index: 3, kind: input, shape index: {}]
  %s4 = inlined_call_operand.vmem [shape: f32[4,36], index: 4, kind: input, shape index: {}]
  %s5 = inlined_call_operand.vmem [shape: f32[4,1], index: 5, kind: input, shape index: {}]
  %s6 = inlined_call_operand.hbm [shape: f32[4,512], index: 6, kind: output, shape index: {}]
  %s7 = sld [smem:[#allocation0]]
  $region38: #{tpu_custom_call.1} parent=0
    _
  %s9 = ssub.s32 1, %s7
  %s10 = scalar_select 0, %s9, %s7
  $region1: #{tpu_custom_call.1} parent=0
    #allocation2 [shape = 'u8[8192]{0}', space=vmem, size = 0x2000, scoped, tag = 'input window, operand 0, single buffered']
    #allocation3 [shape = 's32[1]{0}', space=sflag, size = 0x4, scoped, tag = 'scoped memory for tpu_custom_call.1']
    #allocation4 [shape = 's32[1]{0}', space=sflag, size = 0x4, scoped, tag = 'scoped memory for tpu_custom_call.1']
    #allocation5 [shape = 'u8[8192]{0}', space=vmem, size = 0x2000, scoped, tag = 'output window, operand 0, single buffered']
    %11 = vsyncpa [#allocation3], 0
    %12 = vsyncpa [#allocation4], 0
    // Predicated region
    $region2: #{tpu_custom_call.1} parent=1 // pred_check
      _
    $region3: #{tpu_custom_call.1} parent=1 // pred_check_branch
      %14 = sbr.rel (0) target = $region5
    $region4: #{tpu_custom_call.1} parent=1 // pred_region
      %s16 = ssub.s32 256, 256
      %17 = vsyncadd [#allocation3], %s16
      %s19 = sshll.u32 [#allocation2], 4
      %s20 = int_to_ptr.vmem [resolvable:$true] %s19
      %22 = dma.hbm_to_vmem [thread:$0]  %s0, 256, %s20, [#allocation3]
    $region5: #{tpu_custom_call.1} parent=1 // pred_fallthru
      _
    // Predicated region
    $region6: #{tpu_custom_call.1} parent=1 // pred_check
      _
    $region7: #{tpu_custom_call.1} parent=1 // pred_check_branch
      %24 = sbr.rel (0) target = $region9
    $region8: #{tpu_custom_call.1} parent=1 // pred_region
      _
    $region9: #{tpu_custom_call.1} parent=1 // pred_fallthru
      _
    // Predicated region
    $region10: #{tpu_custom_call.1} parent=1 // pred_check
      _
    $region11: #{tpu_custom_call.1} parent=1 // pred_check_branch
      %26 = sbr.rel (0) target = $region13
    $region12: #{tpu_custom_call.1} parent=1 // pred_region
      _
    $region13: #{tpu_custom_call.1} parent=1 // pred_fallthru
      _
    // Predicated region
    $region14: #{tpu_custom_call.1} parent=1 // pred_check
      _
    $region15: #{tpu_custom_call.1} parent=1 // pred_check_branch
      %28 = sbr.rel (0) target = $region17
    $region16: #{tpu_custom_call.1} parent=1 // pred_region
      _
    $region17: #{tpu_custom_call.1} parent=1 // pred_fallthru
      _
    // Predicated region
    $region18: #{tpu_custom_call.1} parent=1 // pred_check
      _
    $region19: #{tpu_custom_call.1} parent=1 // pred_check_branch
      %30 = sbr.rel (0) target = $region21
    $region20: #{tpu_custom_call.1} parent=1 // pred_region
      _
    $region21: #{tpu_custom_call.1} parent=1 // pred_fallthru
      _
    // Predicated region
    $region22: #{tpu_custom_call.1} parent=1 // pred_check
      _
    $region23: #{tpu_custom_call.1} parent=1 // pred_check_branch
      %32 = sbr.rel (0) target = $region25
    $region24: #{tpu_custom_call.1} parent=1 // pred_region
      _
    $region25: #{tpu_custom_call.1} parent=1 // pred_fallthru
      _
    // Predicated region
    $region26: #{tpu_custom_call.1} parent=1 // pred_check
      _
    $region27: #{tpu_custom_call.1} parent=1 // pred_check_branch
      %34 = sbr.rel (0) target = $region29
    $region28: #{tpu_custom_call.1} parent=1 // pred_region
      %35 = dma.done [#allocation3], 256
    $region29: #{tpu_custom_call.1} parent=1 // pred_fallthru
      _
    %v36 = vld [vmem:[#allocation2] sm:$0xff]
    %v37 = vld [vmem:[#allocation2 + $0x8] sm:$0xff]
    %v38 = vld [vmem:[%s1] sm:$0xff]
    %v39 = vadd.s32 %v38, 4294967295
    %vm40 = vcmp.ge.s32.totalorder %v39, 0
    %vm41 = vcmp.lt.s32.totalorder %v39, 16
    %vm42 = vmand %vm40, %vm41
    %vm43 = vcmp.ge.s32.totalorder %v38, 0
    %vm44 = vcmp.lt.s32.totalorder %v38, 16
    %vm45 = vmand %vm43, %vm44
    %v46 = vadd.s32 %v38, 1
    %vm47 = vcmp.ge.s32.totalorder %v46, 0
    %vm48 = vcmp.lt.s32.totalorder %v46, 16
    %vm49 = vmand %vm47, %vm48
    %v50 = vsel %vm42, 1, 0
    %v51 = vrot.slane %v50, 7
    %v52 = vrot.slane %v51, 2
    %vm53 = vcmp.ne.s32.totalorder %v52, 0
    %vm54 = vmand %vm42, %vm53
    %v55 = vsel %vm45, 1, 0
    %v56 = vrot.slane %v55, 7
    %v57 = vrot.slane %v56, 2
    %vm58 = vcmp.ne.s32.totalorder %v57, 0
    %vm59 = vmand %vm42, %vm58
    %v60 = vsel %vm49, 1, 0
    %v61 = vrot.slane %v60, 7
    %v62 = vrot.slane %v61, 2
    %vm63 = vcmp.ne.s32.totalorder %v62, 0
    %vm64 = vmand %vm42, %vm63
    %vm65 = vmand %vm45, %vm53
    %vm66 = vmand %vm45, %vm58
    %vm67 = vmand %vm45, %vm63
    %vm68 = vmand %vm49, %vm53
    %vm69 = vmand %vm49, %vm58
    %vm70 = vmand %vm49, %vm63
    %v71 = vld [vmem:[%s2] sm:$0xf]
    %v72 = vld [vmem:[%s4] sm:$0xf]
    %v73 = vld [vmem:[%s3] sm:$0xf]
    %v74 = vld [vmem:[%s5] sm:$0xf]
    %v77 = vcombine.high %v36, %v36
    %v78 = vcombine.high %v37, %v37
    %81 = vrot.lane.b32.xlu0 %v36, 17
    %v82 = vpop.permute.xlu0 %81
    %83 = vrot.lane.b32.xlu0 %v77, 17
    %v84 = vpop.permute.xlu0 %83
    %85 = vrot.lane.b32.xlu0 %v37, 17
    %v86 = vpop.permute.xlu0 %85
    %87 = vrot.lane.b32.xlu0 %v78, 17
    %v88 = vpop.permute.xlu0 %87
    %v89 = vlaneseq
    %v90 = vand.u32 %v89, 127
    %vm91 = vcmp.lt.s32.totalorder %v90, 17
    %v92 = vsel %vm91, %v86, %v88
    %v93 = vsel %vm91, %v84, %v86
    %v94 = vsel %vm91, %v82, %v84
    %v95 = vsel %vm91, %v88, %v82
    %v96 = vsel %vm54, 1, 0
    %v97 = vlaneseq
    %v98 = vshrl.u32 %v97, 7
    %v99 = vsub.s32 0, %v98
    %v100 = vrot.slane %v96, %v99
    %v101 = vlaneseq
    %v102 = vshrl.u32 %v101, 7
    %v103 = vsub.s32 2, %v102
    %v104 = vrot.slane %v96, %v103
    %v105 = vlaneseq
    %v106 = vshrl.u32 %v105, 7
    %v107 = vsub.s32 4, %v106
    %v108 = vrot.slane %v96, %v107
    %v109 = vlaneseq
    %v110 = vshrl.u32 %v109, 7
    %v111 = vsub.s32 6, %v110
    %v112 = vrot.slane %v96, %v111
    %v113 = vlaneseq
    %v114 = vshrl.u32 %v113, 7
    %v115 = vsub.s32 0, %v114
    %v116 = vrot.slane %v100, %v115
    %v117 = vlaneseq
    %v118 = vshrl.u32 %v117, 7
    %v119 = vsub.s32 0, %v118
    %v120 = vrot.slane %v104, %v119
    %v121 = vlaneseq
    %v122 = vshrl.u32 %v121, 7
    %v123 = vsub.s32 0, %v122
    %v124 = vrot.slane %v108, %v123
    %v125 = vlaneseq
    %v126 = vshrl.u32 %v125, 7
    %v127 = vsub.s32 0, %v126
    %v128 = vrot.slane %v112, %v127
    %vm129 = vcmp.eq.s32.totalorder %v116, 1
    %vm130 = vcmp.eq.s32.totalorder %v120, 1
    %vm131 = vcmp.eq.s32.totalorder %v124, 1
    %vm132 = vcmp.eq.s32.totalorder %v128, 1
    %v133 = vsel %vm129, %v95, 0.0
    %v134 = vsel %vm130, %v94, 0.0
    %v135 = vsel %vm131, %v93, 0.0
    %v136 = vsel %vm132, %v92, 0.0
    %138 = vset.pattern.permute.xlu0 0
    %139 = vperm.xlu0 %138, %v71
    %v140 = vpop.permute.xlu0 %139
    %v142 = vlaneseq
    %v143 = vshrl.u32 %v142, 7
    %v144 = vsub.s32 0, %v143
    %v145 = vrot.slane %v133, %v144
    %v146 = vlaneseq
    %v147 = vshrl.u32 %v146, 7
    %v148 = vsub.s32 0, %v147
    %v149 = vrot.slane %v134, %v148
    %v150 = vlaneseq
    %v151 = vshrl.u32 %v150, 7
    %v152 = vsub.s32 0, %v151
    %v153 = vrot.slane %v135, %v152
    %v154 = vlaneseq
    %v155 = vshrl.u32 %v154, 7
    %v156 = vsub.s32 0, %v155
    %v157 = vrot.slane %v136, %v156
    %v158 = vmul.f32 %v140, %v145
    %v159 = vmul.f32 %v140, %v149
    %v160 = vmul.f32 %v140, %v153
    %v161 = vmul.f32 %v140, %v157
    %v162 = vadd.f32 %v158, 0.0
    %v163 = vadd.f32 %v159, 0.0
    %v164 = vadd.f32 %v160, 0.0
    %v165 = vadd.f32 %v161, 0.0
    %166 = vset.pattern.permute.xlu0 1
    %167 = vperm.xlu0 %166, %v71
    %v168 = vpop.permute.xlu0 %167
    %v170 = vlaneseq
    %v171 = vshrl.u32 %v170, 7
    %v172 = vsub.s32 1, %v171
    %v173 = vrot.slane %v133, %v172
    %v174 = vlaneseq
    %v175 = vshrl.u32 %v174, 7
    %v176 = vsub.s32 1, %v175
    %v177 = vrot.slane %v134, %v176
    %v178 = vlaneseq
    %v179 = vshrl.u32 %v178, 7
    %v180 = vsub.s32 1, %v179
    %v181 = vrot.slane %v135, %v180
    %v182 = vlaneseq
    %v183 = vshrl.u32 %v182, 7
    %v184 = vsub.s32 1, %v183
    %v185 = vrot.slane %v136, %v184
    %v186 = vmul.f32 %v168, %v173
    %v187 = vmul.f32 %v168, %v177
    %v188 = vmul.f32 %v168, %v181
    %v189 = vmul.f32 %v168, %v185
    %v190 = vadd.f32 %v162, %v186
    %v191 = vadd.f32 %v163, %v187
    %v192 = vadd.f32 %v164, %v188
    %v193 = vadd.f32 %v165, %v189
    %194 = vset.pattern.permute.xlu0 2
    %195 = vperm.xlu0 %194, %v71
    %v196 = vpop.permute.xlu0 %195
    %v198 = vlaneseq
    %v199 = vshrl.u32 %v198, 7
    %v200 = vsub.s32 2, %v199
    %v201 = vrot.slane %v133, %v200
    %v202 = vlaneseq
    %v203 = vshrl.u32 %v202, 7
    %v204 = vsub.s32 2, %v203
    %v205 = vrot.slane %v134, %v204
    %v206 = vlaneseq
    %v207 = vshrl.u32 %v206, 7
    %v208 = vsub.s32 2, %v207
    %v209 = vrot.slane %v135, %v208
    %v210 = vlaneseq
    %v211 = vshrl.u32 %v210, 7
    %v212 = vsub.s32 2, %v211
    %v213 = vrot.slane %v136, %v212
    %v214 = vmul.f32 %v196, %v201
    %v215 = vmul.f32 %v196, %v205
    %v216 = vmul.f32 %v196, %v209
    %v217 = vmul.f32 %v196, %v213
    %v218 = vadd.f32 %v190, %v214
    %v219 = vadd.f32 %v191, %v215
    %v220 = vadd.f32 %v192, %v216
    %v221 = vadd.f32 %v193, %v217
    %222 = vset.pattern.permute.xlu0 3
    %223 = vperm.xlu0 %222, %v71
    %v224 = vpop.permute.xlu0 %223
    %v226 = vlaneseq
    %v227 = vshrl.u32 %v226, 7
    %v228 = vsub.s32 3, %v227
    %v229 = vrot.slane %v133, %v228
    %v230 = vlaneseq
    %v231 = vshrl.u32 %v230, 7
    %v232 = vsub.s32 3, %v231
    %v233 = vrot.slane %v134, %v232
    %v234 = vlaneseq
    %v235 = vshrl.u32 %v234, 7
    %v236 = vsub.s32 3, %v235
    %v237 = vrot.slane %v135, %v236
    %v238 = vlaneseq
    %v239 = vshrl.u32 %v238, 7
    %v240 = vsub.s32 3, %v239
    %v241 = vrot.slane %v136, %v240
    %v242 = vmul.f32 %v224, %v229
    %v243 = vmul.f32 %v224, %v233
    %v244 = vmul.f32 %v224, %v237
    %v245 = vmul.f32 %v224, %v241
    %v246 = vadd.f32 %v218, %v242
    %v247 = vadd.f32 %v219, %v243
    %v248 = vadd.f32 %v220, %v244
    %v249 = vadd.f32 %v221, %v245
    %250 = vrot.lane.b32.xlu0 %v36, 16
    %v251 = vpop.permute.xlu0 %250
    %252 = vrot.lane.b32.xlu0 %v77, 16
    %v253 = vpop.permute.xlu0 %252
    %254 = vrot.lane.b32.xlu0 %v37, 16
    %v255 = vpop.permute.xlu0 %254
    %256 = vrot.lane.b32.xlu0 %v78, 16
    %v257 = vpop.permute.xlu0 %256
    %vm258 = vcmp.lt.s32.totalorder %v90, 16
    %v259 = vsel %vm258, %v255, %v257
    %v260 = vsel %vm258, %v253, %v255
    %v261 = vsel %vm258, %v251, %v253
    %v262 = vsel %vm258, %v257, %v251
    %v263 = vsel %vm59, 1, 0
    %v264 = vlaneseq
    %v265 = vshrl.u32 %v264, 7
    %v266 = vsub.s32 0, %v265
    %v267 = vrot.slane %v263, %v266
    %v268 = vlaneseq
    %v269 = vshrl.u32 %v268, 7
    %v270 = vsub.s32 2, %v269
    %v271 = vrot.slane %v263, %v270
    %v272 = vlaneseq
    %v273 = vshrl.u32 %v272, 7
    %v274 = vsub.s32 4, %v273
    %v275 = vrot.slane %v263, %v274
    %v276 = vlaneseq
    %v277 = vshrl.u32 %v276, 7
    %v278 = vsub.s32 6, %v277
    %v279 = vrot.slane %v263, %v278
    %v280 = vlaneseq
    %v281 = vshrl.u32 %v280, 7
    %v282 = vsub.s32 0, %v281
    %v283 = vrot.slane %v267, %v282
    %v284 = vlaneseq
    %v285 = vshrl.u32 %v284, 7
    %v286 = vsub.s32 0, %v285
    %v287 = vrot.slane %v271, %v286
    %v288 = vlaneseq
    %v289 = vshrl.u32 %v288, 7
    %v290 = vsub.s32 0, %v289
    %v291 = vrot.slane %v275, %v290
    %v292 = vlaneseq
    %v293 = vshrl.u32 %v292, 7
    %v294 = vsub.s32 0, %v293
    %v295 = vrot.slane %v279, %v294
    %vm296 = vcmp.eq.s32.totalorder %v283, 1
    %vm297 = vcmp.eq.s32.totalorder %v287, 1
    %vm298 = vcmp.eq.s32.totalorder %v291, 1
    %vm299 = vcmp.eq.s32.totalorder %v295, 1
    %v300 = vsel %vm296, %v262, 0.0
    %v301 = vsel %vm297, %v261, 0.0
    %v302 = vsel %vm298, %v260, 0.0
    %v303 = vsel %vm299, %v259, 0.0
    %304 = vset.pattern.permute.xlu0 4
    %305 = vperm.xlu0 %304, %v71
    %v306 = vpop.permute.xlu0 %305
    %v308 = vlaneseq
    %v309 = vshrl.u32 %v308, 7
    %v310 = vsub.s32 0, %v309
    %v311 = vrot.slane %v300, %v310
    %v312 = vlaneseq
    %v313 = vshrl.u32 %v312, 7
    %v314 = vsub.s32 0, %v313
    %v315 = vrot.slane %v301, %v314
    %v316 = vlaneseq
    %v317 = vshrl.u32 %v316, 7
    %v318 = vsub.s32 0, %v317
    %v319 = vrot.slane %v302, %v318
    %v320 = vlaneseq
    %v321 = vshrl.u32 %v320, 7
    %v322 = vsub.s32 0, %v321
    %v323 = vrot.slane %v303, %v322
    %v324 = vmul.f32 %v306, %v311
    %v325 = vmul.f32 %v306, %v315
    %v326 = vmul.f32 %v306, %v319
    %v327 = vmul.f32 %v306, %v323
    %v328 = vadd.f32 %v246, %v324
    %v329 = vadd.f32 %v247, %v325
    %v330 = vadd.f32 %v248, %v326
    %v331 = vadd.f32 %v249, %v327
    %332 = vset.pattern.permute.xlu0 5
    %333 = vperm.xlu0 %332, %v71
    %v334 = vpop.permute.xlu0 %333
    %v336 = vlaneseq
    %v337 = vshrl.u32 %v336, 7
    %v338 = vsub.s32 1, %v337
    %v339 = vrot.slane %v300, %v338
    %v340 = vlaneseq
    %v341 = vshrl.u32 %v340, 7
    %v342 = vsub.s32 1, %v341
    %v343 = vrot.slane %v301, %v342
    %v344 = vlaneseq
    %v345 = vshrl.u32 %v344, 7
    %v346 = vsub.s32 1, %v345
    %v347 = vrot.slane %v302, %v346
    %v348 = vlaneseq
    %v349 = vshrl.u32 %v348, 7
    %v350 = vsub.s32 1, %v349
    %v351 = vrot.slane %v303, %v350
    %v352 = vmul.f32 %v334, %v339
    %v353 = vmul.f32 %v334, %v343
    %v354 = vmul.f32 %v334, %v347
    %v355 = vmul.f32 %v334, %v351
    %v356 = vadd.f32 %v328, %v352
    %v357 = vadd.f32 %v329, %v353
    %v358 = vadd.f32 %v330, %v354
    %v359 = vadd.f32 %v331, %v355
    %360 = vset.pattern.permute.xlu0 6
    %361 = vperm.xlu0 %360, %v71
    %v362 = vpop.permute.xlu0 %361
    %v364 = vlaneseq
    %v365 = vshrl.u32 %v364, 7
    %v366 = vsub.s32 2, %v365
    %v367 = vrot.slane %v300, %v366
    %v368 = vlaneseq
    %v369 = vshrl.u32 %v368, 7
    %v370 = vsub.s32 2, %v369
    %v371 = vrot.slane %v301, %v370
    %v372 = vlaneseq
    %v373 = vshrl.u32 %v372, 7
    %v374 = vsub.s32 2, %v373
    %v375 = vrot.slane %v302, %v374
    %v376 = vlaneseq
    %v377 = vshrl.u32 %v376, 7
    %v378 = vsub.s32 2, %v377
    %v379 = vrot.slane %v303, %v378
    %v380 = vmul.f32 %v362, %v367
    %v381 = vmul.f32 %v362, %v371
    %v382 = vmul.f32 %v362, %v375
    %v383 = vmul.f32 %v362, %v379
    %v384 = vadd.f32 %v356, %v380
    %v385 = vadd.f32 %v357, %v381
    %v386 = vadd.f32 %v358, %v382
    %v387 = vadd.f32 %v359, %v383
    %388 = vset.pattern.permute.xlu0 7
    %389 = vperm.xlu0 %388, %v71
    %v390 = vpop.permute.xlu0 %389
    %v392 = vlaneseq
    %v393 = vshrl.u32 %v392, 7
    %v394 = vsub.s32 3, %v393
    %v395 = vrot.slane %v300, %v394
    %v396 = vlaneseq
    %v397 = vshrl.u32 %v396, 7
    %v398 = vsub.s32 3, %v397
    %v399 = vrot.slane %v301, %v398
    %v400 = vlaneseq
    %v401 = vshrl.u32 %v400, 7
    %v402 = vsub.s32 3, %v401
    %v403 = vrot.slane %v302, %v402
    %v404 = vlaneseq
    %v405 = vshrl.u32 %v404, 7
    %v406 = vsub.s32 3, %v405
    %v407 = vrot.slane %v303, %v406
    %v408 = vmul.f32 %v390, %v395
    %v409 = vmul.f32 %v390, %v399
    %v410 = vmul.f32 %v390, %v403
    %v411 = vmul.f32 %v390, %v407
    %v412 = vadd.f32 %v384, %v408
    %v413 = vadd.f32 %v385, %v409
    %v414 = vadd.f32 %v386, %v410
    %v415 = vadd.f32 %v387, %v411
    %416 = vrot.lane.b32.xlu0 %v36, 15
    %v417 = vpop.permute.xlu0 %416
    %418 = vrot.lane.b32.xlu0 %v77, 15
    %v419 = vpop.permute.xlu0 %418
    %420 = vrot.lane.b32.xlu0 %v37, 15
    %v421 = vpop.permute.xlu0 %420
    %422 = vrot.lane.b32.xlu0 %v78, 15
    %v423 = vpop.permute.xlu0 %422
    %vm424 = vcmp.lt.s32.totalorder %v90, 15
    %v425 = vsel %vm424, %v421, %v423
    %v426 = vsel %vm424, %v419, %v421
    %v427 = vsel %vm424, %v417, %v419
    %v428 = vsel %vm424, %v423, %v417
    %v429 = vsel %vm64, 1, 0
    %v430 = vlaneseq
    %v431 = vshrl.u32 %v430, 7
    %v432 = vsub.s32 0, %v431
    %v433 = vrot.slane %v429, %v432
    %v434 = vlaneseq
    %v435 = vshrl.u32 %v434, 7
    %v436 = vsub.s32 2, %v435
    %v437 = vrot.slane %v429, %v436
    %v438 = vlaneseq
    %v439 = vshrl.u32 %v438, 7
    %v440 = vsub.s32 4, %v439
    %v441 = vrot.slane %v429, %v440
    %v442 = vlaneseq
    %v443 = vshrl.u32 %v442, 7
    %v444 = vsub.s32 6, %v443
    %v445 = vrot.slane %v429, %v444
    %v446 = vlaneseq
    %v447 = vshrl.u32 %v446, 7
    %v448 = vsub.s32 0, %v447
    %v449 = vrot.slane %v433, %v448
    %v450 = vlaneseq
    %v451 = vshrl.u32 %v450, 7
    %v452 = vsub.s32 0, %v451
    %v453 = vrot.slane %v437, %v452
    %v454 = vlaneseq
    %v455 = vshrl.u32 %v454, 7
    %v456 = vsub.s32 0, %v455
    %v457 = vrot.slane %v441, %v456
    %v458 = vlaneseq
    %v459 = vshrl.u32 %v458, 7
    %v460 = vsub.s32 0, %v459
    %v461 = vrot.slane %v445, %v460
    %vm462 = vcmp.eq.s32.totalorder %v449, 1
    %vm463 = vcmp.eq.s32.totalorder %v453, 1
    %vm464 = vcmp.eq.s32.totalorder %v457, 1
    %vm465 = vcmp.eq.s32.totalorder %v461, 1
    %v466 = vsel %vm462, %v428, 0.0
    %v467 = vsel %vm463, %v427, 0.0
    %v468 = vsel %vm464, %v426, 0.0
    %v469 = vsel %vm465, %v425, 0.0
    %470 = vset.pattern.permute.xlu0 8
    %471 = vperm.xlu0 %470, %v71
    %v472 = vpop.permute.xlu0 %471
    %v474 = vlaneseq
    %v475 = vshrl.u32 %v474, 7
    %v476 = vsub.s32 0, %v475
    %v477 = vrot.slane %v466, %v476
    %v478 = vlaneseq
    %v479 = vshrl.u32 %v478, 7
    %v480 = vsub.s32 0, %v479
    %v481 = vrot.slane %v467, %v480
    %v482 = vlaneseq
    %v483 = vshrl.u32 %v482, 7
    %v484 = vsub.s32 0, %v483
    %v485 = vrot.slane %v468, %v484
    %v486 = vlaneseq
    %v487 = vshrl.u32 %v486, 7
    %v488 = vsub.s32 0, %v487
    %v489 = vrot.slane %v469, %v488
    %v490 = vmul.f32 %v472, %v477
    %v491 = vmul.f32 %v472, %v481
    %v492 = vmul.f32 %v472, %v485
    %v493 = vmul.f32 %v472, %v489
    %v494 = vadd.f32 %v412, %v490
    %v495 = vadd.f32 %v413, %v491
    %v496 = vadd.f32 %v414, %v492
    %v497 = vadd.f32 %v415, %v493
    %498 = vset.pattern.permute.xlu0 9
    %499 = vperm.xlu0 %498, %v71
    %v500 = vpop.permute.xlu0 %499
    %v502 = vlaneseq
    %v503 = vshrl.u32 %v502, 7
    %v504 = vsub.s32 1, %v503
    %v505 = vrot.slane %v466, %v504
    %v506 = vlaneseq
    %v507 = vshrl.u32 %v506, 7
    %v508 = vsub.s32 1, %v507
    %v509 = vrot.slane %v467, %v508
    %v510 = vlaneseq
    %v511 = vshrl.u32 %v510, 7
    %v512 = vsub.s32 1, %v511
    %v513 = vrot.slane %v468, %v512
    %v514 = vlaneseq
    %v515 = vshrl.u32 %v514, 7
    %v516 = vsub.s32 1, %v515
    %v517 = vrot.slane %v469, %v516
    %v518 = vmul.f32 %v500, %v505
    %v519 = vmul.f32 %v500, %v509
    %v520 = vmul.f32 %v500, %v513
    %v521 = vmul.f32 %v500, %v517
    %v522 = vadd.f32 %v494, %v518
    %v523 = vadd.f32 %v495, %v519
    %v524 = vadd.f32 %v496, %v520
    %v525 = vadd.f32 %v497, %v521
    %526 = vset.pattern.permute.xlu0 10
    %527 = vperm.xlu0 %526, %v71
    %v528 = vpop.permute.xlu0 %527
    %v530 = vlaneseq
    %v531 = vshrl.u32 %v530, 7
    %v532 = vsub.s32 2, %v531
    %v533 = vrot.slane %v466, %v532
    %v534 = vlaneseq
    %v535 = vshrl.u32 %v534, 7
    %v536 = vsub.s32 2, %v535
    %v537 = vrot.slane %v467, %v536
    %v538 = vlaneseq
    %v539 = vshrl.u32 %v538, 7
    %v540 = vsub.s32 2, %v539
    %v541 = vrot.slane %v468, %v540
    %v542 = vlaneseq
    %v543 = vshrl.u32 %v542, 7
    %v544 = vsub.s32 2, %v543
    %v545 = vrot.slane %v469, %v544
    %v546 = vmul.f32 %v528, %v533
    %v547 = vmul.f32 %v528, %v537
    %v548 = vmul.f32 %v528, %v541
    %v549 = vmul.f32 %v528, %v545
    %v550 = vadd.f32 %v522, %v546
    %v551 = vadd.f32 %v523, %v547
    %v552 = vadd.f32 %v524, %v548
    %v553 = vadd.f32 %v525, %v549
    %554 = vset.pattern.permute.xlu0 11
    %555 = vperm.xlu0 %554, %v71
    %v556 = vpop.permute.xlu0 %555
    %v558 = vlaneseq
    %v559 = vshrl.u32 %v558, 7
    %v560 = vsub.s32 3, %v559
    %v561 = vrot.slane %v466, %v560
    %v562 = vlaneseq
    %v563 = vshrl.u32 %v562, 7
    %v564 = vsub.s32 3, %v563
    %v565 = vrot.slane %v467, %v564
    %v566 = vlaneseq
    %v567 = vshrl.u32 %v566, 7
    %v568 = vsub.s32 3, %v567
    %v569 = vrot.slane %v468, %v568
    %v570 = vlaneseq
    %v571 = vshrl.u32 %v570, 7
    %v572 = vsub.s32 3, %v571
    %v573 = vrot.slane %v469, %v572
    %v574 = vmul.f32 %v556, %v561
    %v575 = vmul.f32 %v556, %v565
    %v576 = vmul.f32 %v556, %v569
    %v577 = vmul.f32 %v556, %v573
    %v578 = vadd.f32 %v550, %v574
    %v579 = vadd.f32 %v551, %v575
    %v580 = vadd.f32 %v552, %v576
    %v581 = vadd.f32 %v553, %v577
    %582 = vrot.lane.b32.xlu0 %v36, 1
    %v583 = vpop.permute.xlu0 %582
    %584 = vrot.lane.b32.xlu0 %v77, 1
    %v585 = vpop.permute.xlu0 %584
    %586 = vrot.lane.b32.xlu0 %v37, 1
    %v587 = vpop.permute.xlu0 %586
    %588 = vrot.lane.b32.xlu0 %v78, 1
    %v589 = vpop.permute.xlu0 %588
    %vm590 = vcmp.lt.s32.totalorder %v90, 1
    %v591 = vsel %vm590, %v587, %v589
    %v592 = vsel %vm590, %v585, %v587
    %v593 = vsel %vm590, %v583, %v585
    %v594 = vsel %vm590, %v589, %v583
    %v595 = vsel %vm65, 1, 0
    %v596 = vlaneseq
    %v597 = vshrl.u32 %v596, 7
    %v598 = vsub.s32 0, %v597
    %v599 = vrot.slane %v595, %v598
    %v600 = vlaneseq
    %v601 = vshrl.u32 %v600, 7
    %v602 = vsub.s32 2, %v601
    %v603 = vrot.slane %v595, %v602
    %v604 = vlaneseq
    %v605 = vshrl.u32 %v604, 7
    %v606 = vsub.s32 4, %v605
    %v607 = vrot.slane %v595, %v606
    %v608 = vlaneseq
    %v609 = vshrl.u32 %v608, 7
    %v610 = vsub.s32 6, %v609
    %v611 = vrot.slane %v595, %v610
    %v612 = vlaneseq
    %v613 = vshrl.u32 %v612, 7
    %v614 = vsub.s32 0, %v613
    %v615 = vrot.slane %v599, %v614
    %v616 = vlaneseq
    %v617 = vshrl.u32 %v616, 7
    %v618 = vsub.s32 0, %v617
    %v619 = vrot.slane %v603, %v618
    %v620 = vlaneseq
    %v621 = vshrl.u32 %v620, 7
    %v622 = vsub.s32 0, %v621
    %v623 = vrot.slane %v607, %v622
    %v624 = vlaneseq
    %v625 = vshrl.u32 %v624, 7
    %v626 = vsub.s32 0, %v625
    %v627 = vrot.slane %v611, %v626
    %vm628 = vcmp.eq.s32.totalorder %v615, 1
    %vm629 = vcmp.eq.s32.totalorder %v619, 1
    %vm630 = vcmp.eq.s32.totalorder %v623, 1
    %vm631 = vcmp.eq.s32.totalorder %v627, 1
    %v632 = vsel %vm628, %v594, 0.0
    %v633 = vsel %vm629, %v593, 0.0
    %v634 = vsel %vm630, %v592, 0.0
    %v635 = vsel %vm631, %v591, 0.0
    %636 = vset.pattern.permute.xlu0 12
    %637 = vperm.xlu0 %636, %v71
    %v638 = vpop.permute.xlu0 %637
    %v640 = vlaneseq
    %v641 = vshrl.u32 %v640, 7
    %v642 = vsub.s32 0, %v641
    %v643 = vrot.slane %v632, %v642
    %v644 = vlaneseq
    %v645 = vshrl.u32 %v644, 7
    %v646 = vsub.s32 0, %v645
    %v647 = vrot.slane %v633, %v646
    %v648 = vlaneseq
    %v649 = vshrl.u32 %v648, 7
    %v650 = vsub.s32 0, %v649
    %v651 = vrot.slane %v634, %v650
    %v652 = vlaneseq
    %v653 = vshrl.u32 %v652, 7
    %v654 = vsub.s32 0, %v653
    %v655 = vrot.slane %v635, %v654
    %v656 = vmul.f32 %v638, %v643
    %v657 = vmul.f32 %v638, %v647
    %v658 = vmul.f32 %v638, %v651
    %v659 = vmul.f32 %v638, %v655
    %v660 = vadd.f32 %v578, %v656
    %v661 = vadd.f32 %v579, %v657
    %v662 = vadd.f32 %v580, %v658
    %v663 = vadd.f32 %v581, %v659
    %664 = vset.pattern.permute.xlu0 13
    %665 = vperm.xlu0 %664, %v71
    %v666 = vpop.permute.xlu0 %665
    %v668 = vlaneseq
    %v669 = vshrl.u32 %v668, 7
    %v670 = vsub.s32 1, %v669
    %v671 = vrot.slane %v632, %v670
    %v672 = vlaneseq
    %v673 = vshrl.u32 %v672, 7
    %v674 = vsub.s32 1, %v673
    %v675 = vrot.slane %v633, %v674
    %v676 = vlaneseq
    %v677 = vshrl.u32 %v676, 7
    %v678 = vsub.s32 1, %v677
    %v679 = vrot.slane %v634, %v678
    %v680 = vlaneseq
    %v681 = vshrl.u32 %v680, 7
    %v682 = vsub.s32 1, %v681
    %v683 = vrot.slane %v635, %v682
    %v684 = vmul.f32 %v666, %v671
    %v685 = vmul.f32 %v666, %v675
    %v686 = vmul.f32 %v666, %v679
    %v687 = vmul.f32 %v666, %v683
    %v688 = vadd.f32 %v660, %v684
    %v689 = vadd.f32 %v661, %v685
    %v690 = vadd.f32 %v662, %v686
    %v691 = vadd.f32 %v663, %v687
    %692 = vset.pattern.permute.xlu0 14
    %693 = vperm.xlu0 %692, %v71
    %v694 = vpop.permute.xlu0 %693
    %v696 = vlaneseq
    %v697 = vshrl.u32 %v696, 7
    %v698 = vsub.s32 2, %v697
    %v699 = vrot.slane %v632, %v698
    %v700 = vlaneseq
    %v701 = vshrl.u32 %v700, 7
    %v702 = vsub.s32 2, %v701
    %v703 = vrot.slane %v633, %v702
    %v704 = vlaneseq
    %v705 = vshrl.u32 %v704, 7
    %v706 = vsub.s32 2, %v705
    %v707 = vrot.slane %v634, %v706
    %v708 = vlaneseq
    %v709 = vshrl.u32 %v708, 7
    %v710 = vsub.s32 2, %v709
    %v711 = vrot.slane %v635, %v710
    %v712 = vmul.f32 %v694, %v699
    %v713 = vmul.f32 %v694, %v703
    %v714 = vmul.f32 %v694, %v707
    %v715 = vmul.f32 %v694, %v711
    %v716 = vadd.f32 %v688, %v712
    %v717 = vadd.f32 %v689, %v713
    %v718 = vadd.f32 %v690, %v714
    %v719 = vadd.f32 %v691, %v715
    %720 = vset.pattern.permute.xlu0 15
    %721 = vperm.xlu0 %720, %v71
    %v722 = vpop.permute.xlu0 %721
    %v724 = vlaneseq
    %v725 = vshrl.u32 %v724, 7
    %v726 = vsub.s32 3, %v725
    %v727 = vrot.slane %v632, %v726
    %v728 = vlaneseq
    %v729 = vshrl.u32 %v728, 7
    %v730 = vsub.s32 3, %v729
    %v731 = vrot.slane %v633, %v730
    %v732 = vlaneseq
    %v733 = vshrl.u32 %v732, 7
    %v734 = vsub.s32 3, %v733
    %v735 = vrot.slane %v634, %v734
    %v736 = vlaneseq
    %v737 = vshrl.u32 %v736, 7
    %v738 = vsub.s32 3, %v737
    %v739 = vrot.slane %v635, %v738
    %v740 = vmul.f32 %v722, %v727
    %v741 = vmul.f32 %v722, %v731
    %v742 = vmul.f32 %v722, %v735
    %v743 = vmul.f32 %v722, %v739
    %v744 = vadd.f32 %v716, %v740
    %v745 = vadd.f32 %v717, %v741
    %v746 = vadd.f32 %v718, %v742
    %v747 = vadd.f32 %v719, %v743
    %v748 = vsel %vm66, 1, 0
    %v749 = vlaneseq
    %v750 = vshrl.u32 %v749, 7
    %v751 = vsub.s32 0, %v750
    %v752 = vrot.slane %v748, %v751
    %v753 = vlaneseq
    %v754 = vshrl.u32 %v753, 7
    %v755 = vsub.s32 2, %v754
    %v756 = vrot.slane %v748, %v755
    %v757 = vlaneseq
    %v758 = vshrl.u32 %v757, 7
    %v759 = vsub.s32 4, %v758
    %v760 = vrot.slane %v748, %v759
    %v761 = vlaneseq
    %v762 = vshrl.u32 %v761, 7
    %v763 = vsub.s32 6, %v762
    %v764 = vrot.slane %v748, %v763
    %v765 = vlaneseq
    %v766 = vshrl.u32 %v765, 7
    %v767 = vsub.s32 0, %v766
    %v768 = vrot.slane %v752, %v767
    %v769 = vlaneseq
    %v770 = vshrl.u32 %v769, 7
    %v771 = vsub.s32 0, %v770
    %v772 = vrot.slane %v756, %v771
    %v773 = vlaneseq
    %v774 = vshrl.u32 %v773, 7
    %v775 = vsub.s32 0, %v774
    %v776 = vrot.slane %v760, %v775
    %v777 = vlaneseq
    %v778 = vshrl.u32 %v777, 7
    %v779 = vsub.s32 0, %v778
    %v780 = vrot.slane %v764, %v779
    %vm781 = vcmp.eq.s32.totalorder %v768, 1
    %vm782 = vcmp.eq.s32.totalorder %v772, 1
    %vm783 = vcmp.eq.s32.totalorder %v776, 1
    %vm784 = vcmp.eq.s32.totalorder %v780, 1
    %v785 = vsel %vm781, %v36, 0.0
    %v786 = vsel %vm782, %v77, 0.0
    %v787 = vsel %vm783, %v37, 0.0
    %v788 = vsel %vm784, %v78, 0.0
    %789 = vset.pattern.permute.xlu0 16
    %790 = vperm.xlu0 %789, %v71
    %v791 = vpop.permute.xlu0 %790
    %v793 = vlaneseq
    %v794 = vshrl.u32 %v793, 7
    %v795 = vsub.s32 0, %v794
    %v796 = vrot.slane %v785, %v795
    %v797 = vlaneseq
    %v798 = vshrl.u32 %v797, 7
    %v799 = vsub.s32 0, %v798
    %v800 = vrot.slane %v786, %v799
    %v801 = vlaneseq
    %v802 = vshrl.u32 %v801, 7
    %v803 = vsub.s32 0, %v802
    %v804 = vrot.slane %v787, %v803
    %v805 = vlaneseq
    %v806 = vshrl.u32 %v805, 7
    %v807 = vsub.s32 0, %v806
    %v808 = vrot.slane %v788, %v807
    %v809 = vmul.f32 %v791, %v796
    %v810 = vmul.f32 %v791, %v800
    %v811 = vmul.f32 %v791, %v804
    %v812 = vmul.f32 %v791, %v808
    %v813 = vadd.f32 %v744, %v809
    %v814 = vadd.f32 %v745, %v810
    %v815 = vadd.f32 %v746, %v811
    %v816 = vadd.f32 %v747, %v812
    %817 = vset.pattern.permute.xlu0 17
    %818 = vperm.xlu0 %817, %v71
    %v819 = vpop.permute.xlu0 %818
    %v821 = vlaneseq
    %v822 = vshrl.u32 %v821, 7
    %v823 = vsub.s32 1, %v822
    %v824 = vrot.slane %v785, %v823
    %v825 = vlaneseq
    %v826 = vshrl.u32 %v825, 7
    %v827 = vsub.s32 1, %v826
    %v828 = vrot.slane %v786, %v827
    %v829 = vlaneseq
    %v830 = vshrl.u32 %v829, 7
    %v831 = vsub.s32 1, %v830
    %v832 = vrot.slane %v787, %v831
    %v833 = vlaneseq
    %v834 = vshrl.u32 %v833, 7
    %v835 = vsub.s32 1, %v834
    %v836 = vrot.slane %v788, %v835
    %v837 = vmul.f32 %v819, %v824
    %v838 = vmul.f32 %v819, %v828
    %v839 = vmul.f32 %v819, %v832
    %v840 = vmul.f32 %v819, %v836
    %v841 = vadd.f32 %v813, %v837
    %v842 = vadd.f32 %v814, %v838
    %v843 = vadd.f32 %v815, %v839
    %v844 = vadd.f32 %v816, %v840
    %845 = vset.pattern.permute.xlu0 18
    %846 = vperm.xlu0 %845, %v71
    %v847 = vpop.permute.xlu0 %846
    %v849 = vlaneseq
    %v850 = vshrl.u32 %v849, 7
    %v851 = vsub.s32 2, %v850
    %v852 = vrot.slane %v785, %v851
    %v853 = vlaneseq
    %v854 = vshrl.u32 %v853, 7
    %v855 = vsub.s32 2, %v854
    %v856 = vrot.slane %v786, %v855
    %v857 = vlaneseq
    %v858 = vshrl.u32 %v857, 7
    %v859 = vsub.s32 2, %v858
    %v860 = vrot.slane %v787, %v859
    %v861 = vlaneseq
    %v862 = vshrl.u32 %v861, 7
    %v863 = vsub.s32 2, %v862
    %v864 = vrot.slane %v788, %v863
    %v865 = vmul.f32 %v847, %v852
    %v866 = vmul.f32 %v847, %v856
    %v867 = vmul.f32 %v847, %v860
    %v868 = vmul.f32 %v847, %v864
    %v869 = vadd.f32 %v841, %v865
    %v870 = vadd.f32 %v842, %v866
    %v871 = vadd.f32 %v843, %v867
    %v872 = vadd.f32 %v844, %v868
    %873 = vset.pattern.permute.xlu0 19
    %874 = vperm.xlu0 %873, %v71
    %v875 = vpop.permute.xlu0 %874
    %v877 = vlaneseq
    %v878 = vshrl.u32 %v877, 7
    %v879 = vsub.s32 3, %v878
    %v880 = vrot.slane %v785, %v879
    %v881 = vlaneseq
    %v882 = vshrl.u32 %v881, 7
    %v883 = vsub.s32 3, %v882
    %v884 = vrot.slane %v786, %v883
    %v885 = vlaneseq
    %v886 = vshrl.u32 %v885, 7
    %v887 = vsub.s32 3, %v886
    %v888 = vrot.slane %v787, %v887
    %v889 = vlaneseq
    %v890 = vshrl.u32 %v889, 7
    %v891 = vsub.s32 3, %v890
    %v892 = vrot.slane %v788, %v891
    %v893 = vmul.f32 %v875, %v880
    %v894 = vmul.f32 %v875, %v884
    %v895 = vmul.f32 %v875, %v888
    %v896 = vmul.f32 %v875, %v892
    %v897 = vadd.f32 %v869, %v893
    %v898 = vadd.f32 %v870, %v894
    %v899 = vadd.f32 %v871, %v895
    %v900 = vadd.f32 %v872, %v896
    %901 = vrot.lane.b32.xlu0 %v36, 127
    %v902 = vpop.permute.xlu0 %901
    %903 = vrot.lane.b32.xlu0 %v77, 127
    %v904 = vpop.permute.xlu0 %903
    %905 = vrot.lane.b32.xlu0 %v37, 127
    %v906 = vpop.permute.xlu0 %905
    %907 = vrot.lane.b32.xlu0 %v78, 127
    %v908 = vpop.permute.xlu0 %907
    %vm909 = vcmp.lt.s32.totalorder %v90, 127
    %v910 = vsel %vm909, %v906, %v908
    %v911 = vsel %vm909, %v904, %v906
    %v912 = vsel %vm909, %v902, %v904
    %v913 = vsel %vm909, %v908, %v902
    %v914 = vsel %vm67, 1, 0
    %v915 = vlaneseq
    %v916 = vshrl.u32 %v915, 7
    %v917 = vsub.s32 0, %v916
    %v918 = vrot.slane %v914, %v917
    %v919 = vlaneseq
    %v920 = vshrl.u32 %v919, 7
    %v921 = vsub.s32 2, %v920
    %v922 = vrot.slane %v914, %v921
    %v923 = vlaneseq
    %v924 = vshrl.u32 %v923, 7
    %v925 = vsub.s32 4, %v924
    %v926 = vrot.slane %v914, %v925
    %v927 = vlaneseq
    %v928 = vshrl.u32 %v927, 7
    %v929 = vsub.s32 6, %v928
    %v930 = vrot.slane %v914, %v929
    %v931 = vlaneseq
    %v932 = vshrl.u32 %v931, 7
    %v933 = vsub.s32 0, %v932
    %v934 = vrot.slane %v918, %v933
    %v935 = vlaneseq
    %v936 = vshrl.u32 %v935, 7
    %v937 = vsub.s32 0, %v936
    %v938 = vrot.slane %v922, %v937
    %v939 = vlaneseq
    %v940 = vshrl.u32 %v939, 7
    %v941 = vsub.s32 0, %v940
    %v942 = vrot.slane %v926, %v941
    %v943 = vlaneseq
    %v944 = vshrl.u32 %v943, 7
    %v945 = vsub.s32 0, %v944
    %v946 = vrot.slane %v930, %v945
    %vm947 = vcmp.eq.s32.totalorder %v934, 1
    %vm948 = vcmp.eq.s32.totalorder %v938, 1
    %vm949 = vcmp.eq.s32.totalorder %v942, 1
    %vm950 = vcmp.eq.s32.totalorder %v946, 1
    %v951 = vsel %vm947, %v912, 0.0
    %v952 = vsel %vm948, %v911, 0.0
    %v953 = vsel %vm949, %v910, 0.0
    %v954 = vsel %vm950, %v913, 0.0
    %955 = vset.pattern.permute.xlu0 20
    %956 = vperm.xlu0 %955, %v71
    %v957 = vpop.permute.xlu0 %956
    %v959 = vlaneseq
    %v960 = vshrl.u32 %v959, 7
    %v961 = vsub.s32 0, %v960
    %v962 = vrot.slane %v951, %v961
    %v963 = vlaneseq
    %v964 = vshrl.u32 %v963, 7
    %v965 = vsub.s32 0, %v964
    %v966 = vrot.slane %v952, %v965
    %v967 = vlaneseq
    %v968 = vshrl.u32 %v967, 7
    %v969 = vsub.s32 0, %v968
    %v970 = vrot.slane %v953, %v969
    %v971 = vlaneseq
    %v972 = vshrl.u32 %v971, 7
    %v973 = vsub.s32 0, %v972
    %v974 = vrot.slane %v954, %v973
    %v975 = vmul.f32 %v957, %v962
    %v976 = vmul.f32 %v957, %v966
    %v977 = vmul.f32 %v957, %v970
    %v978 = vmul.f32 %v957, %v974
    %v979 = vadd.f32 %v897, %v975
    %v980 = vadd.f32 %v898, %v976
    %v981 = vadd.f32 %v899, %v977
    %v982 = vadd.f32 %v900, %v978
    %983 = vset.pattern.permute.xlu0 21
    %984 = vperm.xlu0 %983, %v71
    %v985 = vpop.permute.xlu0 %984
    %v987 = vlaneseq
    %v988 = vshrl.u32 %v987, 7
    %v989 = vsub.s32 1, %v988
    %v990 = vrot.slane %v951, %v989
    %v991 = vlaneseq
    %v992 = vshrl.u32 %v991, 7
    %v993 = vsub.s32 1, %v992
    %v994 = vrot.slane %v952, %v993
    %v995 = vlaneseq
    %v996 = vshrl.u32 %v995, 7
    %v997 = vsub.s32 1, %v996
    %v998 = vrot.slane %v953, %v997
    %v999 = vlaneseq
    %v1000 = vshrl.u32 %v999, 7
    %v1001 = vsub.s32 1, %v1000
    %v1002 = vrot.slane %v954, %v1001
    %v1003 = vmul.f32 %v985, %v990
    %v1004 = vmul.f32 %v985, %v994
    %v1005 = vmul.f32 %v985, %v998
    %v1006 = vmul.f32 %v985, %v1002
    %v1007 = vadd.f32 %v979, %v1003
    %v1008 = vadd.f32 %v980, %v1004
    %v1009 = vadd.f32 %v981, %v1005
    %v1010 = vadd.f32 %v982, %v1006
    %1011 = vset.pattern.permute.xlu0 22
    %1012 = vperm.xlu0 %1011, %v71
    %v1013 = vpop.permute.xlu0 %1012
    %v1015 = vlaneseq
    %v1016 = vshrl.u32 %v1015, 7
    %v1017 = vsub.s32 2, %v1016
    %v1018 = vrot.slane %v951, %v1017
    %v1019 = vlaneseq
    %v1020 = vshrl.u32 %v1019, 7
    %v1021 = vsub.s32 2, %v1020
    %v1022 = vrot.slane %v952, %v1021
    %v1023 = vlaneseq
    %v1024 = vshrl.u32 %v1023, 7
    %v1025 = vsub.s32 2, %v1024
    %v1026 = vrot.slane %v953, %v1025
    %v1027 = vlaneseq
    %v1028 = vshrl.u32 %v1027, 7
    %v1029 = vsub.s32 2, %v1028
    %v1030 = vrot.slane %v954, %v1029
    %v1031 = vmul.f32 %v1013, %v1018
    %v1032 = vmul.f32 %v1013, %v1022
    %v1033 = vmul.f32 %v1013, %v1026
    %v1034 = vmul.f32 %v1013, %v1030
    %v1035 = vadd.f32 %v1007, %v1031
    %v1036 = vadd.f32 %v1008, %v1032
    %v1037 = vadd.f32 %v1009, %v1033
    %v1038 = vadd.f32 %v1010, %v1034
    %1039 = vset.pattern.permute.xlu0 23
    %1040 = vperm.xlu0 %1039, %v71
    %v1041 = vpop.permute.xlu0 %1040
    %v1043 = vlaneseq
    %v1044 = vshrl.u32 %v1043, 7
    %v1045 = vsub.s32 3, %v1044
    %v1046 = vrot.slane %v951, %v1045
    %v1047 = vlaneseq
    %v1048 = vshrl.u32 %v1047, 7
    %v1049 = vsub.s32 3, %v1048
    %v1050 = vrot.slane %v952, %v1049
    %v1051 = vlaneseq
    %v1052 = vshrl.u32 %v1051, 7
    %v1053 = vsub.s32 3, %v1052
    %v1054 = vrot.slane %v953, %v1053
    %v1055 = vlaneseq
    %v1056 = vshrl.u32 %v1055, 7
    %v1057 = vsub.s32 3, %v1056
    %v1058 = vrot.slane %v954, %v1057
    %v1059 = vmul.f32 %v1041, %v1046
    %v1060 = vmul.f32 %v1041, %v1050
    %v1061 = vmul.f32 %v1041, %v1054
    %v1062 = vmul.f32 %v1041, %v1058
    %v1063 = vadd.f32 %v1035, %v1059
    %v1064 = vadd.f32 %v1036, %v1060
    %v1065 = vadd.f32 %v1037, %v1061
    %v1066 = vadd.f32 %v1038, %v1062
    %1067 = vrot.lane.b32.xlu0 %v36, 113
    %v1068 = vpop.permute.xlu0 %1067
    %1069 = vrot.lane.b32.xlu0 %v77, 113
    %v1070 = vpop.permute.xlu0 %1069
    %1071 = vrot.lane.b32.xlu0 %v37, 113
    %v1072 = vpop.permute.xlu0 %1071
    %1073 = vrot.lane.b32.xlu0 %v78, 113
    %v1074 = vpop.permute.xlu0 %1073
    %vm1075 = vcmp.lt.s32.totalorder %v90, 113
    %v1076 = vsel %vm1075, %v1072, %v1074
    %v1077 = vsel %vm1075, %v1070, %v1072
    %v1078 = vsel %vm1075, %v1068, %v1070
    %v1079 = vsel %vm1075, %v1074, %v1068
    %v1080 = vsel %vm68, 1, 0
    %v1081 = vlaneseq
    %v1082 = vshrl.u32 %v1081, 7
    %v1083 = vsub.s32 0, %v1082
    %v1084 = vrot.slane %v1080, %v1083
    %v1085 = vlaneseq
    %v1086 = vshrl.u32 %v1085, 7
    %v1087 = vsub.s32 2, %v1086
    %v1088 = vrot.slane %v1080, %v1087
    %v1089 = vlaneseq
    %v1090 = vshrl.u32 %v1089, 7
    %v1091 = vsub.s32 4, %v1090
    %v1092 = vrot.slane %v1080, %v1091
    %v1093 = vlaneseq
    %v1094 = vshrl.u32 %v1093, 7
    %v1095 = vsub.s32 6, %v1094
    %v1096 = vrot.slane %v1080, %v1095
    %v1097 = vlaneseq
    %v1098 = vshrl.u32 %v1097, 7
    %v1099 = vsub.s32 0, %v1098
    %v1100 = vrot.slane %v1084, %v1099
    %v1101 = vlaneseq
    %v1102 = vshrl.u32 %v1101, 7
    %v1103 = vsub.s32 0, %v1102
    %v1104 = vrot.slane %v1088, %v1103
    %v1105 = vlaneseq
    %v1106 = vshrl.u32 %v1105, 7
    %v1107 = vsub.s32 0, %v1106
    %v1108 = vrot.slane %v1092, %v1107
    %v1109 = vlaneseq
    %v1110 = vshrl.u32 %v1109, 7
    %v1111 = vsub.s32 0, %v1110
    %v1112 = vrot.slane %v1096, %v1111
    %vm1113 = vcmp.eq.s32.totalorder %v1100, 1
    %vm1114 = vcmp.eq.s32.totalorder %v1104, 1
    %vm1115 = vcmp.eq.s32.totalorder %v1108, 1
    %vm1116 = vcmp.eq.s32.totalorder %v1112, 1
    %v1117 = vsel %vm1113, %v1078, 0.0
    %v1118 = vsel %vm1114, %v1077, 0.0
    %v1119 = vsel %vm1115, %v1076, 0.0
    %v1120 = vsel %vm1116, %v1079, 0.0
    %1121 = vset.pattern.permute.xlu0 24
    %1122 = vperm.xlu0 %1121, %v71
    %v1123 = vpop.permute.xlu0 %1122
    %v1125 = vlaneseq
    %v1126 = vshrl.u32 %v1125, 7
    %v1127 = vsub.s32 0, %v1126
    %v1128 = vrot.slane %v1117, %v1127
    %v1129 = vlaneseq
    %v1130 = vshrl.u32 %v1129, 7
    %v1131 = vsub.s32 0, %v1130
    %v1132 = vrot.slane %v1118, %v1131
    %v1133 = vlaneseq
    %v1134 = vshrl.u32 %v1133, 7
    %v1135 = vsub.s32 0, %v1134
    %v1136 = vrot.slane %v1119, %v1135
    %v1137 = vlaneseq
    %v1138 = vshrl.u32 %v1137, 7
    %v1139 = vsub.s32 0, %v1138
    %v1140 = vrot.slane %v1120, %v1139
    %v1141 = vmul.f32 %v1123, %v1128
    %v1142 = vmul.f32 %v1123, %v1132
    %v1143 = vmul.f32 %v1123, %v1136
    %v1144 = vmul.f32 %v1123, %v1140
    %v1145 = vadd.f32 %v1063, %v1141
    %v1146 = vadd.f32 %v1064, %v1142
    %v1147 = vadd.f32 %v1065, %v1143
    %v1148 = vadd.f32 %v1066, %v1144
    %1149 = vset.pattern.permute.xlu0 25
    %1150 = vperm.xlu0 %1149, %v71
    %v1151 = vpop.permute.xlu0 %1150
    %v1153 = vlaneseq
    %v1154 = vshrl.u32 %v1153, 7
    %v1155 = vsub.s32 1, %v1154
    %v1156 = vrot.slane %v1117, %v1155
    %v1157 = vlaneseq
    %v1158 = vshrl.u32 %v1157, 7
    %v1159 = vsub.s32 1, %v1158
    %v1160 = vrot.slane %v1118, %v1159
    %v1161 = vlaneseq
    %v1162 = vshrl.u32 %v1161, 7
    %v1163 = vsub.s32 1, %v1162
    %v1164 = vrot.slane %v1119, %v1163
    %v1165 = vlaneseq
    %v1166 = vshrl.u32 %v1165, 7
    %v1167 = vsub.s32 1, %v1166
    %v1168 = vrot.slane %v1120, %v1167
    %v1169 = vmul.f32 %v1151, %v1156
    %v1170 = vmul.f32 %v1151, %v1160
    %v1171 = vmul.f32 %v1151, %v1164
    %v1172 = vmul.f32 %v1151, %v1168
    %v1173 = vadd.f32 %v1145, %v1169
    %v1174 = vadd.f32 %v1146, %v1170
    %v1175 = vadd.f32 %v1147, %v1171
    %v1176 = vadd.f32 %v1148, %v1172
    %1177 = vset.pattern.permute.xlu0 26
    %1178 = vperm.xlu0 %1177, %v71
    %v1179 = vpop.permute.xlu0 %1178
    %v1181 = vlaneseq
    %v1182 = vshrl.u32 %v1181, 7
    %v1183 = vsub.s32 2, %v1182
    %v1184 = vrot.slane %v1117, %v1183
    %v1185 = vlaneseq
    %v1186 = vshrl.u32 %v1185, 7
    %v1187 = vsub.s32 2, %v1186
    %v1188 = vrot.slane %v1118, %v1187
    %v1189 = vlaneseq
    %v1190 = vshrl.u32 %v1189, 7
    %v1191 = vsub.s32 2, %v1190
    %v1192 = vrot.slane %v1119, %v1191
    %v1193 = vlaneseq
    %v1194 = vshrl.u32 %v1193, 7
    %v1195 = vsub.s32 2, %v1194
    %v1196 = vrot.slane %v1120, %v1195
    %v1197 = vmul.f32 %v1179, %v1184
    %v1198 = vmul.f32 %v1179, %v1188
    %v1199 = vmul.f32 %v1179, %v1192
    %v1200 = vmul.f32 %v1179, %v1196
    %v1201 = vadd.f32 %v1173, %v1197
    %v1202 = vadd.f32 %v1174, %v1198
    %v1203 = vadd.f32 %v1175, %v1199
    %v1204 = vadd.f32 %v1176, %v1200
    %1205 = vset.pattern.permute.xlu0 27
    %1206 = vperm.xlu0 %1205, %v71
    %v1207 = vpop.permute.xlu0 %1206
    %v1209 = vlaneseq
    %v1210 = vshrl.u32 %v1209, 7
    %v1211 = vsub.s32 3, %v1210
    %v1212 = vrot.slane %v1117, %v1211
    %v1213 = vlaneseq
    %v1214 = vshrl.u32 %v1213, 7
    %v1215 = vsub.s32 3, %v1214
    %v1216 = vrot.slane %v1118, %v1215
    %v1217 = vlaneseq
    %v1218 = vshrl.u32 %v1217, 7
    %v1219 = vsub.s32 3, %v1218
    %v1220 = vrot.slane %v1119, %v1219
    %v1221 = vlaneseq
    %v1222 = vshrl.u32 %v1221, 7
    %v1223 = vsub.s32 3, %v1222
    %v1224 = vrot.slane %v1120, %v1223
    %v1225 = vmul.f32 %v1207, %v1212
    %v1226 = vmul.f32 %v1207, %v1216
    %v1227 = vmul.f32 %v1207, %v1220
    %v1228 = vmul.f32 %v1207, %v1224
    %v1229 = vadd.f32 %v1201, %v1225
    %v1230 = vadd.f32 %v1202, %v1226
    %v1231 = vadd.f32 %v1203, %v1227
    %v1232 = vadd.f32 %v1204, %v1228
    %1233 = vrot.lane.b32.xlu0 %v36, 112
    %v1234 = vpop.permute.xlu0 %1233
    %1235 = vrot.lane.b32.xlu0 %v77, 112
    %v1236 = vpop.permute.xlu0 %1235
    %1237 = vrot.lane.b32.xlu0 %v37, 112
    %v1238 = vpop.permute.xlu0 %1237
    %1239 = vrot.lane.b32.xlu0 %v78, 112
    %v1240 = vpop.permute.xlu0 %1239
    %vm1241 = vcmp.lt.s32.totalorder %v90, 112
    %v1242 = vsel %vm1241, %v1238, %v1240
    %v1243 = vsel %vm1241, %v1236, %v1238
    %v1244 = vsel %vm1241, %v1234, %v1236
    %v1245 = vsel %vm1241, %v1240, %v1234
    %v1246 = vsel %vm69, 1, 0
    %v1247 = vlaneseq
    %v1248 = vshrl.u32 %v1247, 7
    %v1249 = vsub.s32 0, %v1248
    %v1250 = vrot.slane %v1246, %v1249
    %v1251 = vlaneseq
    %v1252 = vshrl.u32 %v1251, 7
    %v1253 = vsub.s32 2, %v1252
    %v1254 = vrot.slane %v1246, %v1253
    %v1255 = vlaneseq
    %v1256 = vshrl.u32 %v1255, 7
    %v1257 = vsub.s32 4, %v1256
    %v1258 = vrot.slane %v1246, %v1257
    %v1259 = vlaneseq
    %v1260 = vshrl.u32 %v1259, 7
    %v1261 = vsub.s32 6, %v1260
    %v1262 = vrot.slane %v1246, %v1261
    %v1263 = vlaneseq
    %v1264 = vshrl.u32 %v1263, 7
    %v1265 = vsub.s32 0, %v1264
    %v1266 = vrot.slane %v1250, %v1265
    %v1267 = vlaneseq
    %v1268 = vshrl.u32 %v1267, 7
    %v1269 = vsub.s32 0, %v1268
    %v1270 = vrot.slane %v1254, %v1269
    %v1271 = vlaneseq
    %v1272 = vshrl.u32 %v1271, 7
    %v1273 = vsub.s32 0, %v1272
    %v1274 = vrot.slane %v1258, %v1273
    %v1275 = vlaneseq
    %v1276 = vshrl.u32 %v1275, 7
    %v1277 = vsub.s32 0, %v1276
    %v1278 = vrot.slane %v1262, %v1277
    %vm1279 = vcmp.eq.s32.totalorder %v1266, 1
    %vm1280 = vcmp.eq.s32.totalorder %v1270, 1
    %vm1281 = vcmp.eq.s32.totalorder %v1274, 1
    %vm1282 = vcmp.eq.s32.totalorder %v1278, 1
    %v1283 = vsel %vm1279, %v1244, 0.0
    %v1284 = vsel %vm1280, %v1243, 0.0
    %v1285 = vsel %vm1281, %v1242, 0.0
    %v1286 = vsel %vm1282, %v1245, 0.0
    %1287 = vset.pattern.permute.xlu0 28
    %1288 = vperm.xlu0 %1287, %v71
    %v1289 = vpop.permute.xlu0 %1288
    %v1291 = vlaneseq
    %v1292 = vshrl.u32 %v1291, 7
    %v1293 = vsub.s32 0, %v1292
    %v1294 = vrot.slane %v1283, %v1293
    %v1295 = vlaneseq
    %v1296 = vshrl.u32 %v1295, 7
    %v1297 = vsub.s32 0, %v1296
    %v1298 = vrot.slane %v1284, %v1297
    %v1299 = vlaneseq
    %v1300 = vshrl.u32 %v1299, 7
    %v1301 = vsub.s32 0, %v1300
    %v1302 = vrot.slane %v1285, %v1301
    %v1303 = vlaneseq
    %v1304 = vshrl.u32 %v1303, 7
    %v1305 = vsub.s32 0, %v1304
    %v1306 = vrot.slane %v1286, %v1305
    %v1307 = vmul.f32 %v1289, %v1294
    %v1308 = vmul.f32 %v1289, %v1298
    %v1309 = vmul.f32 %v1289, %v1302
    %v1310 = vmul.f32 %v1289, %v1306
    %v1311 = vadd.f32 %v1229, %v1307
    %v1312 = vadd.f32 %v1230, %v1308
    %v1313 = vadd.f32 %v1231, %v1309
    %v1314 = vadd.f32 %v1232, %v1310
    %1315 = vset.pattern.permute.xlu0 29
    %1316 = vperm.xlu0 %1315, %v71
    %v1317 = vpop.permute.xlu0 %1316
    %v1319 = vlaneseq
    %v1320 = vshrl.u32 %v1319, 7
    %v1321 = vsub.s32 1, %v1320
    %v1322 = vrot.slane %v1283, %v1321
    %v1323 = vlaneseq
    %v1324 = vshrl.u32 %v1323, 7
    %v1325 = vsub.s32 1, %v1324
    %v1326 = vrot.slane %v1284, %v1325
    %v1327 = vlaneseq
    %v1328 = vshrl.u32 %v1327, 7
    %v1329 = vsub.s32 1, %v1328
    %v1330 = vrot.slane %v1285, %v1329
    %v1331 = vlaneseq
    %v1332 = vshrl.u32 %v1331, 7
    %v1333 = vsub.s32 1, %v1332
    %v1334 = vrot.slane %v1286, %v1333
    %v1335 = vmul.f32 %v1317, %v1322
    %v1336 = vmul.f32 %v1317, %v1326
    %v1337 = vmul.f32 %v1317, %v1330
    %v1338 = vmul.f32 %v1317, %v1334
    %v1339 = vadd.f32 %v1311, %v1335
    %v1340 = vadd.f32 %v1312, %v1336
    %v1341 = vadd.f32 %v1313, %v1337
    %v1342 = vadd.f32 %v1314, %v1338
    %1343 = vset.pattern.permute.xlu0 30
    %1344 = vperm.xlu0 %1343, %v71
    %v1345 = vpop.permute.xlu0 %1344
    %v1347 = vlaneseq
    %v1348 = vshrl.u32 %v1347, 7
    %v1349 = vsub.s32 2, %v1348
    %v1350 = vrot.slane %v1283, %v1349
    %v1351 = vlaneseq
    %v1352 = vshrl.u32 %v1351, 7
    %v1353 = vsub.s32 2, %v1352
    %v1354 = vrot.slane %v1284, %v1353
    %v1355 = vlaneseq
    %v1356 = vshrl.u32 %v1355, 7
    %v1357 = vsub.s32 2, %v1356
    %v1358 = vrot.slane %v1285, %v1357
    %v1359 = vlaneseq
    %v1360 = vshrl.u32 %v1359, 7
    %v1361 = vsub.s32 2, %v1360
    %v1362 = vrot.slane %v1286, %v1361
    %v1363 = vmul.f32 %v1345, %v1350
    %v1364 = vmul.f32 %v1345, %v1354
    %v1365 = vmul.f32 %v1345, %v1358
    %v1366 = vmul.f32 %v1345, %v1362
    %v1367 = vadd.f32 %v1339, %v1363
    %v1368 = vadd.f32 %v1340, %v1364
    %v1369 = vadd.f32 %v1341, %v1365
    %v1370 = vadd.f32 %v1342, %v1366
    %1371 = vset.pattern.permute.xlu0 31
    %1372 = vperm.xlu0 %1371, %v71
    %v1373 = vpop.permute.xlu0 %1372
    %v1375 = vlaneseq
    %v1376 = vshrl.u32 %v1375, 7
    %v1377 = vsub.s32 3, %v1376
    %v1378 = vrot.slane %v1283, %v1377
    %v1379 = vlaneseq
    %v1380 = vshrl.u32 %v1379, 7
    %v1381 = vsub.s32 3, %v1380
    %v1382 = vrot.slane %v1284, %v1381
    %v1383 = vlaneseq
    %v1384 = vshrl.u32 %v1383, 7
    %v1385 = vsub.s32 3, %v1384
    %v1386 = vrot.slane %v1285, %v1385
    %v1387 = vlaneseq
    %v1388 = vshrl.u32 %v1387, 7
    %v1389 = vsub.s32 3, %v1388
    %v1390 = vrot.slane %v1286, %v1389
    %v1391 = vmul.f32 %v1373, %v1378
    %v1392 = vmul.f32 %v1373, %v1382
    %v1393 = vmul.f32 %v1373, %v1386
    %v1394 = vmul.f32 %v1373, %v1390
    %v1395 = vadd.f32 %v1367, %v1391
    %v1396 = vadd.f32 %v1368, %v1392
    %v1397 = vadd.f32 %v1369, %v1393
    %v1398 = vadd.f32 %v1370, %v1394
    %1399 = vrot.lane.b32.xlu0 %v36, 111
    %v1400 = vpop.permute.xlu0 %1399
    %1401 = vrot.lane.b32.xlu0 %v77, 111
    %v1402 = vpop.permute.xlu0 %1401
    %1403 = vrot.lane.b32.xlu0 %v37, 111
    %v1404 = vpop.permute.xlu0 %1403
    %1405 = vrot.lane.b32.xlu0 %v78, 111
    %v1406 = vpop.permute.xlu0 %1405
    %vm1407 = vcmp.lt.s32.totalorder %v90, 111
    %v1408 = vsel %vm1407, %v1404, %v1406
    %v1409 = vsel %vm1407, %v1402, %v1404
    %v1410 = vsel %vm1407, %v1400, %v1402
    %v1411 = vsel %vm1407, %v1406, %v1400
    %v1412 = vsel %vm70, 1, 0
    %v1413 = vlaneseq
    %v1414 = vshrl.u32 %v1413, 7
    %v1415 = vsub.s32 0, %v1414
    %v1416 = vrot.slane %v1412, %v1415
    %v1417 = vlaneseq
    %v1418 = vshrl.u32 %v1417, 7
    %v1419 = vsub.s32 2, %v1418
    %v1420 = vrot.slane %v1412, %v1419
    %v1421 = vlaneseq
    %v1422 = vshrl.u32 %v1421, 7
    %v1423 = vsub.s32 4, %v1422
    %v1424 = vrot.slane %v1412, %v1423
    %v1425 = vlaneseq
    %v1426 = vshrl.u32 %v1425, 7
    %v1427 = vsub.s32 6, %v1426
    %v1428 = vrot.slane %v1412, %v1427
    %v1429 = vlaneseq
    %v1430 = vshrl.u32 %v1429, 7
    %v1431 = vsub.s32 0, %v1430
    %v1432 = vrot.slane %v1416, %v1431
    %v1433 = vlaneseq
    %v1434 = vshrl.u32 %v1433, 7
    %v1435 = vsub.s32 0, %v1434
    %v1436 = vrot.slane %v1420, %v1435
    %v1437 = vlaneseq
    %v1438 = vshrl.u32 %v1437, 7
    %v1439 = vsub.s32 0, %v1438
    %v1440 = vrot.slane %v1424, %v1439
    %v1441 = vlaneseq
    %v1442 = vshrl.u32 %v1441, 7
    %v1443 = vsub.s32 0, %v1442
    %v1444 = vrot.slane %v1428, %v1443
    %vm1445 = vcmp.eq.s32.totalorder %v1432, 1
    %vm1446 = vcmp.eq.s32.totalorder %v1436, 1
    %vm1447 = vcmp.eq.s32.totalorder %v1440, 1
    %vm1448 = vcmp.eq.s32.totalorder %v1444, 1
    %v1449 = vsel %vm1445, %v1410, 0.0
    %v1450 = vsel %vm1446, %v1409, 0.0
    %v1451 = vsel %vm1447, %v1408, 0.0
    %v1452 = vsel %vm1448, %v1411, 0.0
    %1453 = vset.pattern.permute.xlu0 32
    %1454 = vperm.xlu0 %1453, %v71
    %v1455 = vpop.permute.xlu0 %1454
    %v1457 = vlaneseq
    %v1458 = vshrl.u32 %v1457, 7
    %v1459 = vsub.s32 0, %v1458
    %v1460 = vrot.slane %v1449, %v1459
    %v1461 = vlaneseq
    %v1462 = vshrl.u32 %v1461, 7
    %v1463 = vsub.s32 0, %v1462
    %v1464 = vrot.slane %v1450, %v1463
    %v1465 = vlaneseq
    %v1466 = vshrl.u32 %v1465, 7
    %v1467 = vsub.s32 0, %v1466
    %v1468 = vrot.slane %v1451, %v1467
    %v1469 = vlaneseq
    %v1470 = vshrl.u32 %v1469, 7
    %v1471 = vsub.s32 0, %v1470
    %v1472 = vrot.slane %v1452, %v1471
    %v1473 = vmul.f32 %v1455, %v1460
    %v1474 = vmul.f32 %v1455, %v1464
    %v1475 = vmul.f32 %v1455, %v1468
    %v1476 = vmul.f32 %v1455, %v1472
    %v1477 = vadd.f32 %v1395, %v1473
    %v1478 = vadd.f32 %v1396, %v1474
    %v1479 = vadd.f32 %v1397, %v1475
    %v1480 = vadd.f32 %v1398, %v1476
    %1481 = vset.pattern.permute.xlu0 33
    %1482 = vperm.xlu0 %1481, %v71
    %v1483 = vpop.permute.xlu0 %1482
    %v1485 = vlaneseq
    %v1486 = vshrl.u32 %v1485, 7
    %v1487 = vsub.s32 1, %v1486
    %v1488 = vrot.slane %v1449, %v1487
    %v1489 = vlaneseq
    %v1490 = vshrl.u32 %v1489, 7
    %v1491 = vsub.s32 1, %v1490
    %v1492 = vrot.slane %v1450, %v1491
    %v1493 = vlaneseq
    %v1494 = vshrl.u32 %v1493, 7
    %v1495 = vsub.s32 1, %v1494
    %v1496 = vrot.slane %v1451, %v1495
    %v1497 = vlaneseq
    %v1498 = vshrl.u32 %v1497, 7
    %v1499 = vsub.s32 1, %v1498
    %v1500 = vrot.slane %v1452, %v1499
    %v1501 = vmul.f32 %v1483, %v1488
    %v1502 = vmul.f32 %v1483, %v1492
    %v1503 = vmul.f32 %v1483, %v1496
    %v1504 = vmul.f32 %v1483, %v1500
    %v1505 = vadd.f32 %v1477, %v1501
    %v1506 = vadd.f32 %v1478, %v1502
    %v1507 = vadd.f32 %v1479, %v1503
    %v1508 = vadd.f32 %v1480, %v1504
    %1509 = vset.pattern.permute.xlu0 34
    %1510 = vperm.xlu0 %1509, %v71
    %v1511 = vpop.permute.xlu0 %1510
    %v1513 = vlaneseq
    %v1514 = vshrl.u32 %v1513, 7
    %v1515 = vsub.s32 2, %v1514
    %v1516 = vrot.slane %v1449, %v1515
    %v1517 = vlaneseq
    %v1518 = vshrl.u32 %v1517, 7
    %v1519 = vsub.s32 2, %v1518
    %v1520 = vrot.slane %v1450, %v1519
    %v1521 = vlaneseq
    %v1522 = vshrl.u32 %v1521, 7
    %v1523 = vsub.s32 2, %v1522
    %v1524 = vrot.slane %v1451, %v1523
    %v1525 = vlaneseq
    %v1526 = vshrl.u32 %v1525, 7
    %v1527 = vsub.s32 2, %v1526
    %v1528 = vrot.slane %v1452, %v1527
    %v1529 = vmul.f32 %v1511, %v1516
    %v1530 = vmul.f32 %v1511, %v1520
    %v1531 = vmul.f32 %v1511, %v1524
    %v1532 = vmul.f32 %v1511, %v1528
    %v1533 = vadd.f32 %v1505, %v1529
    %v1534 = vadd.f32 %v1506, %v1530
    %v1535 = vadd.f32 %v1507, %v1531
    %v1536 = vadd.f32 %v1508, %v1532
    %1537 = vset.pattern.permute.xlu0 35
    %1538 = vperm.xlu0 %1537, %v71
    %v1539 = vpop.permute.xlu0 %1538
    %v1541 = vlaneseq
    %v1542 = vshrl.u32 %v1541, 7
    %v1543 = vsub.s32 3, %v1542
    %v1544 = vrot.slane %v1449, %v1543
    %v1545 = vlaneseq
    %v1546 = vshrl.u32 %v1545, 7
    %v1547 = vsub.s32 3, %v1546
    %v1548 = vrot.slane %v1450, %v1547
    %v1549 = vlaneseq
    %v1550 = vshrl.u32 %v1549, 7
    %v1551 = vsub.s32 3, %v1550
    %v1552 = vrot.slane %v1451, %v1551
    %v1553 = vlaneseq
    %v1554 = vshrl.u32 %v1553, 7
    %v1555 = vsub.s32 3, %v1554
    %v1556 = vrot.slane %v1452, %v1555
    %v1557 = vmul.f32 %v1539, %v1544
    %v1558 = vmul.f32 %v1539, %v1548
    %v1559 = vmul.f32 %v1539, %v1552
    %v1560 = vmul.f32 %v1539, %v1556
    %v1561 = vadd.f32 %v1533, %v1557
    %v1562 = vadd.f32 %v1534, %v1558
    %v1563 = vadd.f32 %v1535, %v1559
    %v1564 = vadd.f32 %v1536, %v1560
    %1566 = vset.pattern.permute.xlu0 0
    %1567 = vperm.xlu0 %1566, %v73
    %v1568 = vpop.permute.xlu0 %1567
    %v1570 = vadd.f32 %v1561, %v1568
    %v1571 = vadd.f32 %v1562, %v1568
    %v1572 = vadd.f32 %v1563, %v1568
    %v1573 = vadd.f32 %v1564, %v1568
    %v1574 = vmax.f32 %v1570, 0.0
    %v1575 = vmax.f32 %v1571, 0.0
    %v1576 = vmax.f32 %v1572, 0.0
    %v1577 = vmax.f32 %v1573, 0.0
    %1578 = vrot.lane.b32.xlu0 %v1574, 17
    %v1579 = vpop.permute.xlu0 %1578
    %1580 = vrot.lane.b32.xlu0 %v1575, 17
    %v1581 = vpop.permute.xlu0 %1580
    %1582 = vrot.lane.b32.xlu0 %v1576, 17
    %v1583 = vpop.permute.xlu0 %1582
    %1584 = vrot.lane.b32.xlu0 %v1577, 17
    %v1585 = vpop.permute.xlu0 %1584
    %v1586 = vsel %vm91, %v1583, %v1585
    %v1587 = vsel %vm91, %v1581, %v1583
    %v1588 = vsel %vm91, %v1579, %v1581
    %v1589 = vsel %vm91, %v1585, %v1579
    %v1590 = vsel %vm129, %v1589, 0.0
    %v1591 = vsel %vm130, %v1588, 0.0
    %v1592 = vsel %vm131, %v1587, 0.0
    %v1593 = vsel %vm132, %v1586, 0.0
    %1595 = vset.pattern.permute.xlu0 0
    %1596 = vperm.xlu0 %1595, %v72
    %v1597 = vpop.permute.xlu0 %1596
    %v1599 = vlaneseq
    %v1600 = vshrl.u32 %v1599, 7
    %v1601 = vsub.s32 0, %v1600
    %v1602 = vrot.slane %v1590, %v1601
    %v1603 = vlaneseq
    %v1604 = vshrl.u32 %v1603, 7
    %v1605 = vsub.s32 0, %v1604
    %v1606 = vrot.slane %v1591, %v1605
    %v1607 = vlaneseq
    %v1608 = vshrl.u32 %v1607, 7
    %v1609 = vsub.s32 0, %v1608
    %v1610 = vrot.slane %v1592, %v1609
    %v1611 = vlaneseq
    %v1612 = vshrl.u32 %v1611, 7
    %v1613 = vsub.s32 0, %v1612
    %v1614 = vrot.slane %v1593, %v1613
    %v1615 = vmul.f32 %v1597, %v1602
    %v1616 = vmul.f32 %v1597, %v1606
    %v1617 = vmul.f32 %v1597, %v1610
    %v1618 = vmul.f32 %v1597, %v1614
    %v1619 = vadd.f32 %v1615, 0.0
    %v1620 = vadd.f32 %v1616, 0.0
    %v1621 = vadd.f32 %v1617, 0.0
    %v1622 = vadd.f32 %v1618, 0.0
    %1623 = vset.pattern.permute.xlu0 1
    %1624 = vperm.xlu0 %1623, %v72
    %v1625 = vpop.permute.xlu0 %1624
    %v1627 = vlaneseq
    %v1628 = vshrl.u32 %v1627, 7
    %v1629 = vsub.s32 1, %v1628
    %v1630 = vrot.slane %v1590, %v1629
    %v1631 = vlaneseq
    %v1632 = vshrl.u32 %v1631, 7
    %v1633 = vsub.s32 1, %v1632
    %v1634 = vrot.slane %v1591, %v1633
    %v1635 = vlaneseq
    %v1636 = vshrl.u32 %v1635, 7
    %v1637 = vsub.s32 1, %v1636
    %v1638 = vrot.slane %v1592, %v1637
    %v1639 = vlaneseq
    %v1640 = vshrl.u32 %v1639, 7
    %v1641 = vsub.s32 1, %v1640
    %v1642 = vrot.slane %v1593, %v1641
    %v1643 = vmul.f32 %v1625, %v1630
    %v1644 = vmul.f32 %v1625, %v1634
    %v1645 = vmul.f32 %v1625, %v1638
    %v1646 = vmul.f32 %v1625, %v1642
    %v1647 = vadd.f32 %v1619, %v1643
    %v1648 = vadd.f32 %v1620, %v1644
    %v1649 = vadd.f32 %v1621, %v1645
    %v1650 = vadd.f32 %v1622, %v1646
    %1651 = vset.pattern.permute.xlu0 2
    %1652 = vperm.xlu0 %1651, %v72
    %v1653 = vpop.permute.xlu0 %1652
    %v1655 = vlaneseq
    %v1656 = vshrl.u32 %v1655, 7
    %v1657 = vsub.s32 2, %v1656
    %v1658 = vrot.slane %v1590, %v1657
    %v1659 = vlaneseq
    %v1660 = vshrl.u32 %v1659, 7
    %v1661 = vsub.s32 2, %v1660
    %v1662 = vrot.slane %v1591, %v1661
    %v1663 = vlaneseq
    %v1664 = vshrl.u32 %v1663, 7
    %v1665 = vsub.s32 2, %v1664
    %v1666 = vrot.slane %v1592, %v1665
    %v1667 = vlaneseq
    %v1668 = vshrl.u32 %v1667, 7
    %v1669 = vsub.s32 2, %v1668
    %v1670 = vrot.slane %v1593, %v1669
    %v1671 = vmul.f32 %v1653, %v1658
    %v1672 = vmul.f32 %v1653, %v1662
    %v1673 = vmul.f32 %v1653, %v1666
    %v1674 = vmul.f32 %v1653, %v1670
    %v1675 = vadd.f32 %v1647, %v1671
    %v1676 = vadd.f32 %v1648, %v1672
    %v1677 = vadd.f32 %v1649, %v1673
    %v1678 = vadd.f32 %v1650, %v1674
    %1679 = vset.pattern.permute.xlu0 3
    %1680 = vperm.xlu0 %1679, %v72
    %v1681 = vpop.permute.xlu0 %1680
    %v1683 = vlaneseq
    %v1684 = vshrl.u32 %v1683, 7
    %v1685 = vsub.s32 3, %v1684
    %v1686 = vrot.slane %v1590, %v1685
    %v1687 = vlaneseq
    %v1688 = vshrl.u32 %v1687, 7
    %v1689 = vsub.s32 3, %v1688
    %v1690 = vrot.slane %v1591, %v1689
    %v1691 = vlaneseq
    %v1692 = vshrl.u32 %v1691, 7
    %v1693 = vsub.s32 3, %v1692
    %v1694 = vrot.slane %v1592, %v1693
    %v1695 = vlaneseq
    %v1696 = vshrl.u32 %v1695, 7
    %v1697 = vsub.s32 3, %v1696
    %v1698 = vrot.slane %v1593, %v1697
    %v1699 = vmul.f32 %v1681, %v1686
    %v1700 = vmul.f32 %v1681, %v1690
    %v1701 = vmul.f32 %v1681, %v1694
    %v1702 = vmul.f32 %v1681, %v1698
    %v1703 = vadd.f32 %v1675, %v1699
    %v1704 = vadd.f32 %v1676, %v1700
    %v1705 = vadd.f32 %v1677, %v1701
    %v1706 = vadd.f32 %v1678, %v1702
    %1707 = vrot.lane.b32.xlu0 %v1574, 16
    %v1708 = vpop.permute.xlu0 %1707
    %1709 = vrot.lane.b32.xlu0 %v1575, 16
    %v1710 = vpop.permute.xlu0 %1709
    %1711 = vrot.lane.b32.xlu0 %v1576, 16
    %v1712 = vpop.permute.xlu0 %1711
    %1713 = vrot.lane.b32.xlu0 %v1577, 16
    %v1714 = vpop.permute.xlu0 %1713
    %v1715 = vsel %vm258, %v1712, %v1714
    %v1716 = vsel %vm258, %v1710, %v1712
    %v1717 = vsel %vm258, %v1708, %v1710
    %v1718 = vsel %vm258, %v1714, %v1708
    %v1719 = vsel %vm296, %v1718, 0.0
    %v1720 = vsel %vm297, %v1717, 0.0
    %v1721 = vsel %vm298, %v1716, 0.0
    %v1722 = vsel %vm299, %v1715, 0.0
    %1723 = vset.pattern.permute.xlu0 4
    %1724 = vperm.xlu0 %1723, %v72
    %v1725 = vpop.permute.xlu0 %1724
    %v1727 = vlaneseq
    %v1728 = vshrl.u32 %v1727, 7
    %v1729 = vsub.s32 0, %v1728
    %v1730 = vrot.slane %v1719, %v1729
    %v1731 = vlaneseq
    %v1732 = vshrl.u32 %v1731, 7
    %v1733 = vsub.s32 0, %v1732
    %v1734 = vrot.slane %v1720, %v1733
    %v1735 = vlaneseq
    %v1736 = vshrl.u32 %v1735, 7
    %v1737 = vsub.s32 0, %v1736
    %v1738 = vrot.slane %v1721, %v1737
    %v1739 = vlaneseq
    %v1740 = vshrl.u32 %v1739, 7
    %v1741 = vsub.s32 0, %v1740
    %v1742 = vrot.slane %v1722, %v1741
    %v1743 = vmul.f32 %v1725, %v1730
    %v1744 = vmul.f32 %v1725, %v1734
    %v1745 = vmul.f32 %v1725, %v1738
    %v1746 = vmul.f32 %v1725, %v1742
    %v1747 = vadd.f32 %v1703, %v1743
    %v1748 = vadd.f32 %v1704, %v1744
    %v1749 = vadd.f32 %v1705, %v1745
    %v1750 = vadd.f32 %v1706, %v1746
    %1751 = vset.pattern.permute.xlu0 5
    %1752 = vperm.xlu0 %1751, %v72
    %v1753 = vpop.permute.xlu0 %1752
    %v1755 = vlaneseq
    %v1756 = vshrl.u32 %v1755, 7
    %v1757 = vsub.s32 1, %v1756
    %v1758 = vrot.slane %v1719, %v1757
    %v1759 = vlaneseq
    %v1760 = vshrl.u32 %v1759, 7
    %v1761 = vsub.s32 1, %v1760
    %v1762 = vrot.slane %v1720, %v1761
    %v1763 = vlaneseq
    %v1764 = vshrl.u32 %v1763, 7
    %v1765 = vsub.s32 1, %v1764
    %v1766 = vrot.slane %v1721, %v1765
    %v1767 = vlaneseq
    %v1768 = vshrl.u32 %v1767, 7
    %v1769 = vsub.s32 1, %v1768
    %v1770 = vrot.slane %v1722, %v1769
    %v1771 = vmul.f32 %v1753, %v1758
    %v1772 = vmul.f32 %v1753, %v1762
    %v1773 = vmul.f32 %v1753, %v1766
    %v1774 = vmul.f32 %v1753, %v1770
    %v1775 = vadd.f32 %v1747, %v1771
    %v1776 = vadd.f32 %v1748, %v1772
    %v1777 = vadd.f32 %v1749, %v1773
    %v1778 = vadd.f32 %v1750, %v1774
    %1779 = vset.pattern.permute.xlu0 6
    %1780 = vperm.xlu0 %1779, %v72
    %v1781 = vpop.permute.xlu0 %1780
    %v1783 = vlaneseq
    %v1784 = vshrl.u32 %v1783, 7
    %v1785 = vsub.s32 2, %v1784
    %v1786 = vrot.slane %v1719, %v1785
    %v1787 = vlaneseq
    %v1788 = vshrl.u32 %v1787, 7
    %v1789 = vsub.s32 2, %v1788
    %v1790 = vrot.slane %v1720, %v1789
    %v1791 = vlaneseq
    %v1792 = vshrl.u32 %v1791, 7
    %v1793 = vsub.s32 2, %v1792
    %v1794 = vrot.slane %v1721, %v1793
    %v1795 = vlaneseq
    %v1796 = vshrl.u32 %v1795, 7
    %v1797 = vsub.s32 2, %v1796
    %v1798 = vrot.slane %v1722, %v1797
    %v1799 = vmul.f32 %v1781, %v1786
    %v1800 = vmul.f32 %v1781, %v1790
    %v1801 = vmul.f32 %v1781, %v1794
    %v1802 = vmul.f32 %v1781, %v1798
    %v1803 = vadd.f32 %v1775, %v1799
    %v1804 = vadd.f32 %v1776, %v1800
    %v1805 = vadd.f32 %v1777, %v1801
    %v1806 = vadd.f32 %v1778, %v1802
    %1807 = vset.pattern.permute.xlu0 7
    %1808 = vperm.xlu0 %1807, %v72
    %v1809 = vpop.permute.xlu0 %1808
    %v1811 = vlaneseq
    %v1812 = vshrl.u32 %v1811, 7
    %v1813 = vsub.s32 3, %v1812
    %v1814 = vrot.slane %v1719, %v1813
    %v1815 = vlaneseq
    %v1816 = vshrl.u32 %v1815, 7
    %v1817 = vsub.s32 3, %v1816
    %v1818 = vrot.slane %v1720, %v1817
    %v1819 = vlaneseq
    %v1820 = vshrl.u32 %v1819, 7
    %v1821 = vsub.s32 3, %v1820
    %v1822 = vrot.slane %v1721, %v1821
    %v1823 = vlaneseq
    %v1824 = vshrl.u32 %v1823, 7
    %v1825 = vsub.s32 3, %v1824
    %v1826 = vrot.slane %v1722, %v1825
    %v1827 = vmul.f32 %v1809, %v1814
    %v1828 = vmul.f32 %v1809, %v1818
    %v1829 = vmul.f32 %v1809, %v1822
    %v1830 = vmul.f32 %v1809, %v1826
    %v1831 = vadd.f32 %v1803, %v1827
    %v1832 = vadd.f32 %v1804, %v1828
    %v1833 = vadd.f32 %v1805, %v1829
    %v1834 = vadd.f32 %v1806, %v1830
    %1835 = vrot.lane.b32.xlu0 %v1574, 15
    %v1836 = vpop.permute.xlu0 %1835
    %1837 = vrot.lane.b32.xlu0 %v1575, 15
    %v1838 = vpop.permute.xlu0 %1837
    %1839 = vrot.lane.b32.xlu0 %v1576, 15
    %v1840 = vpop.permute.xlu0 %1839
    %1841 = vrot.lane.b32.xlu0 %v1577, 15
    %v1842 = vpop.permute.xlu0 %1841
    %v1843 = vsel %vm424, %v1840, %v1842
    %v1844 = vsel %vm424, %v1838, %v1840
    %v1845 = vsel %vm424, %v1836, %v1838
    %v1846 = vsel %vm424, %v1842, %v1836
    %v1847 = vsel %vm462, %v1846, 0.0
    %v1848 = vsel %vm463, %v1845, 0.0
    %v1849 = vsel %vm464, %v1844, 0.0
    %v1850 = vsel %vm465, %v1843, 0.0
    %1851 = vset.pattern.permute.xlu0 8
    %1852 = vperm.xlu0 %1851, %v72
    %v1853 = vpop.permute.xlu0 %1852
    %v1855 = vlaneseq
    %v1856 = vshrl.u32 %v1855, 7
    %v1857 = vsub.s32 0, %v1856
    %v1858 = vrot.slane %v1847, %v1857
    %v1859 = vlaneseq
    %v1860 = vshrl.u32 %v1859, 7
    %v1861 = vsub.s32 0, %v1860
    %v1862 = vrot.slane %v1848, %v1861
    %v1863 = vlaneseq
    %v1864 = vshrl.u32 %v1863, 7
    %v1865 = vsub.s32 0, %v1864
    %v1866 = vrot.slane %v1849, %v1865
    %v1867 = vlaneseq
    %v1868 = vshrl.u32 %v1867, 7
    %v1869 = vsub.s32 0, %v1868
    %v1870 = vrot.slane %v1850, %v1869
    %v1871 = vmul.f32 %v1853, %v1858
    %v1872 = vmul.f32 %v1853, %v1862
    %v1873 = vmul.f32 %v1853, %v1866
    %v1874 = vmul.f32 %v1853, %v1870
    %v1875 = vadd.f32 %v1831, %v1871
    %v1876 = vadd.f32 %v1832, %v1872
    %v1877 = vadd.f32 %v1833, %v1873
    %v1878 = vadd.f32 %v1834, %v1874
    %1879 = vset.pattern.permute.xlu0 9
    %1880 = vperm.xlu0 %1879, %v72
    %v1881 = vpop.permute.xlu0 %1880
    %v1883 = vlaneseq
    %v1884 = vshrl.u32 %v1883, 7
    %v1885 = vsub.s32 1, %v1884
    %v1886 = vrot.slane %v1847, %v1885
    %v1887 = vlaneseq
    %v1888 = vshrl.u32 %v1887, 7
    %v1889 = vsub.s32 1, %v1888
    %v1890 = vrot.slane %v1848, %v1889
    %v1891 = vlaneseq
    %v1892 = vshrl.u32 %v1891, 7
    %v1893 = vsub.s32 1, %v1892
    %v1894 = vrot.slane %v1849, %v1893
    %v1895 = vlaneseq
    %v1896 = vshrl.u32 %v1895, 7
    %v1897 = vsub.s32 1, %v1896
    %v1898 = vrot.slane %v1850, %v1897
    %v1899 = vmul.f32 %v1881, %v1886
    %v1900 = vmul.f32 %v1881, %v1890
    %v1901 = vmul.f32 %v1881, %v1894
    %v1902 = vmul.f32 %v1881, %v1898
    %v1903 = vadd.f32 %v1875, %v1899
    %v1904 = vadd.f32 %v1876, %v1900
    %v1905 = vadd.f32 %v1877, %v1901
    %v1906 = vadd.f32 %v1878, %v1902
    %1907 = vset.pattern.permute.xlu0 10
    %1908 = vperm.xlu0 %1907, %v72
    %v1909 = vpop.permute.xlu0 %1908
    %v1911 = vlaneseq
    %v1912 = vshrl.u32 %v1911, 7
    %v1913 = vsub.s32 2, %v1912
    %v1914 = vrot.slane %v1847, %v1913
    %v1915 = vlaneseq
    %v1916 = vshrl.u32 %v1915, 7
    %v1917 = vsub.s32 2, %v1916
    %v1918 = vrot.slane %v1848, %v1917
    %v1919 = vlaneseq
    %v1920 = vshrl.u32 %v1919, 7
    %v1921 = vsub.s32 2, %v1920
    %v1922 = vrot.slane %v1849, %v1921
    %v1923 = vlaneseq
    %v1924 = vshrl.u32 %v1923, 7
    %v1925 = vsub.s32 2, %v1924
    %v1926 = vrot.slane %v1850, %v1925
    %v1927 = vmul.f32 %v1909, %v1914
    %v1928 = vmul.f32 %v1909, %v1918
    %v1929 = vmul.f32 %v1909, %v1922
    %v1930 = vmul.f32 %v1909, %v1926
    %v1931 = vadd.f32 %v1903, %v1927
    %v1932 = vadd.f32 %v1904, %v1928
    %v1933 = vadd.f32 %v1905, %v1929
    %v1934 = vadd.f32 %v1906, %v1930
    %1935 = vset.pattern.permute.xlu0 11
    %1936 = vperm.xlu0 %1935, %v72
    %v1937 = vpop.permute.xlu0 %1936
    %v1939 = vlaneseq
    %v1940 = vshrl.u32 %v1939, 7
    %v1941 = vsub.s32 3, %v1940
    %v1942 = vrot.slane %v1847, %v1941
    %v1943 = vlaneseq
    %v1944 = vshrl.u32 %v1943, 7
    %v1945 = vsub.s32 3, %v1944
    %v1946 = vrot.slane %v1848, %v1945
    %v1947 = vlaneseq
    %v1948 = vshrl.u32 %v1947, 7
    %v1949 = vsub.s32 3, %v1948
    %v1950 = vrot.slane %v1849, %v1949
    %v1951 = vlaneseq
    %v1952 = vshrl.u32 %v1951, 7
    %v1953 = vsub.s32 3, %v1952
    %v1954 = vrot.slane %v1850, %v1953
    %v1955 = vmul.f32 %v1937, %v1942
    %v1956 = vmul.f32 %v1937, %v1946
    %v1957 = vmul.f32 %v1937, %v1950
    %v1958 = vmul.f32 %v1937, %v1954
    %v1959 = vadd.f32 %v1931, %v1955
    %v1960 = vadd.f32 %v1932, %v1956
    %v1961 = vadd.f32 %v1933, %v1957
    %v1962 = vadd.f32 %v1934, %v1958
    %1963 = vrot.lane.b32.xlu0 %v1574, 1
    %v1964 = vpop.permute.xlu0 %1963
    %1965 = vrot.lane.b32.xlu0 %v1575, 1
    %v1966 = vpop.permute.xlu0 %1965
    %1967 = vrot.lane.b32.xlu0 %v1576, 1
    %v1968 = vpop.permute.xlu0 %1967
    %1969 = vrot.lane.b32.xlu0 %v1577, 1
    %v1970 = vpop.permute.xlu0 %1969
    %v1971 = vsel %vm590, %v1968, %v1970
    %v1972 = vsel %vm590, %v1966, %v1968
    %v1973 = vsel %vm590, %v1964, %v1966
    %v1974 = vsel %vm590, %v1970, %v1964
    %v1975 = vsel %vm628, %v1974, 0.0
    %v1976 = vsel %vm629, %v1973, 0.0
    %v1977 = vsel %vm630, %v1972, 0.0
    %v1978 = vsel %vm631, %v1971, 0.0
    %1979 = vset.pattern.permute.xlu0 12
    %1980 = vperm.xlu0 %1979, %v72
    %v1981 = vpop.permute.xlu0 %1980
    %v1983 = vlaneseq
    %v1984 = vshrl.u32 %v1983, 7
    %v1985 = vsub.s32 0, %v1984
    %v1986 = vrot.slane %v1975, %v1985
    %v1987 = vlaneseq
    %v1988 = vshrl.u32 %v1987, 7
    %v1989 = vsub.s32 0, %v1988
    %v1990 = vrot.slane %v1976, %v1989
    %v1991 = vlaneseq
    %v1992 = vshrl.u32 %v1991, 7
    %v1993 = vsub.s32 0, %v1992
    %v1994 = vrot.slane %v1977, %v1993
    %v1995 = vlaneseq
    %v1996 = vshrl.u32 %v1995, 7
    %v1997 = vsub.s32 0, %v1996
    %v1998 = vrot.slane %v1978, %v1997
    %v1999 = vmul.f32 %v1981, %v1986
    %v2000 = vmul.f32 %v1981, %v1990
    %v2001 = vmul.f32 %v1981, %v1994
    %v2002 = vmul.f32 %v1981, %v1998
    %v2003 = vadd.f32 %v1959, %v1999
    %v2004 = vadd.f32 %v1960, %v2000
    %v2005 = vadd.f32 %v1961, %v2001
    %v2006 = vadd.f32 %v1962, %v2002
    %2007 = vset.pattern.permute.xlu0 13
    %2008 = vperm.xlu0 %2007, %v72
    %v2009 = vpop.permute.xlu0 %2008
    %v2011 = vlaneseq
    %v2012 = vshrl.u32 %v2011, 7
    %v2013 = vsub.s32 1, %v2012
    %v2014 = vrot.slane %v1975, %v2013
    %v2015 = vlaneseq
    %v2016 = vshrl.u32 %v2015, 7
    %v2017 = vsub.s32 1, %v2016
    %v2018 = vrot.slane %v1976, %v2017
    %v2019 = vlaneseq
    %v2020 = vshrl.u32 %v2019, 7
    %v2021 = vsub.s32 1, %v2020
    %v2022 = vrot.slane %v1977, %v2021
    %v2023 = vlaneseq
    %v2024 = vshrl.u32 %v2023, 7
    %v2025 = vsub.s32 1, %v2024
    %v2026 = vrot.slane %v1978, %v2025
    %v2027 = vmul.f32 %v2009, %v2014
    %v2028 = vmul.f32 %v2009, %v2018
    %v2029 = vmul.f32 %v2009, %v2022
    %v2030 = vmul.f32 %v2009, %v2026
    %v2031 = vadd.f32 %v2003, %v2027
    %v2032 = vadd.f32 %v2004, %v2028
    %v2033 = vadd.f32 %v2005, %v2029
    %v2034 = vadd.f32 %v2006, %v2030
    %2035 = vset.pattern.permute.xlu0 14
    %2036 = vperm.xlu0 %2035, %v72
    %v2037 = vpop.permute.xlu0 %2036
    %v2039 = vlaneseq
    %v2040 = vshrl.u32 %v2039, 7
    %v2041 = vsub.s32 2, %v2040
    %v2042 = vrot.slane %v1975, %v2041
    %v2043 = vlaneseq
    %v2044 = vshrl.u32 %v2043, 7
    %v2045 = vsub.s32 2, %v2044
    %v2046 = vrot.slane %v1976, %v2045
    %v2047 = vlaneseq
    %v2048 = vshrl.u32 %v2047, 7
    %v2049 = vsub.s32 2, %v2048
    %v2050 = vrot.slane %v1977, %v2049
    %v2051 = vlaneseq
    %v2052 = vshrl.u32 %v2051, 7
    %v2053 = vsub.s32 2, %v2052
    %v2054 = vrot.slane %v1978, %v2053
    %v2055 = vmul.f32 %v2037, %v2042
    %v2056 = vmul.f32 %v2037, %v2046
    %v2057 = vmul.f32 %v2037, %v2050
    %v2058 = vmul.f32 %v2037, %v2054
    %v2059 = vadd.f32 %v2031, %v2055
    %v2060 = vadd.f32 %v2032, %v2056
    %v2061 = vadd.f32 %v2033, %v2057
    %v2062 = vadd.f32 %v2034, %v2058
    %2063 = vset.pattern.permute.xlu0 15
    %2064 = vperm.xlu0 %2063, %v72
    %v2065 = vpop.permute.xlu0 %2064
    %v2067 = vlaneseq
    %v2068 = vshrl.u32 %v2067, 7
    %v2069 = vsub.s32 3, %v2068
    %v2070 = vrot.slane %v1975, %v2069
    %v2071 = vlaneseq
    %v2072 = vshrl.u32 %v2071, 7
    %v2073 = vsub.s32 3, %v2072
    %v2074 = vrot.slane %v1976, %v2073
    %v2075 = vlaneseq
    %v2076 = vshrl.u32 %v2075, 7
    %v2077 = vsub.s32 3, %v2076
    %v2078 = vrot.slane %v1977, %v2077
    %v2079 = vlaneseq
    %v2080 = vshrl.u32 %v2079, 7
    %v2081 = vsub.s32 3, %v2080
    %v2082 = vrot.slane %v1978, %v2081
    %v2083 = vmul.f32 %v2065, %v2070
    %v2084 = vmul.f32 %v2065, %v2074
    %v2085 = vmul.f32 %v2065, %v2078
    %v2086 = vmul.f32 %v2065, %v2082
    %v2087 = vadd.f32 %v2059, %v2083
    %v2088 = vadd.f32 %v2060, %v2084
    %v2089 = vadd.f32 %v2061, %v2085
    %v2090 = vadd.f32 %v2062, %v2086
    %v2091 = vsel %vm781, %v1574, 0.0
    %v2092 = vsel %vm782, %v1575, 0.0
    %v2093 = vsel %vm783, %v1576, 0.0
    %v2094 = vsel %vm784, %v1577, 0.0
    %2095 = vset.pattern.permute.xlu0 16
    %2096 = vperm.xlu0 %2095, %v72
    %v2097 = vpop.permute.xlu0 %2096
    %v2099 = vlaneseq
    %v2100 = vshrl.u32 %v2099, 7
    %v2101 = vsub.s32 0, %v2100
    %v2102 = vrot.slane %v2091, %v2101
    %v2103 = vlaneseq
    %v2104 = vshrl.u32 %v2103, 7
    %v2105 = vsub.s32 0, %v2104
    %v2106 = vrot.slane %v2092, %v2105
    %v2107 = vlaneseq
    %v2108 = vshrl.u32 %v2107, 7
    %v2109 = vsub.s32 0, %v2108
    %v2110 = vrot.slane %v2093, %v2109
    %v2111 = vlaneseq
    %v2112 = vshrl.u32 %v2111, 7
    %v2113 = vsub.s32 0, %v2112
    %v2114 = vrot.slane %v2094, %v2113
    %v2115 = vmul.f32 %v2097, %v2102
    %v2116 = vmul.f32 %v2097, %v2106
    %v2117 = vmul.f32 %v2097, %v2110
    %v2118 = vmul.f32 %v2097, %v2114
    %v2119 = vadd.f32 %v2087, %v2115
    %v2120 = vadd.f32 %v2088, %v2116
    %v2121 = vadd.f32 %v2089, %v2117
    %v2122 = vadd.f32 %v2090, %v2118
    %2123 = vset.pattern.permute.xlu0 17
    %2124 = vperm.xlu0 %2123, %v72
    %v2125 = vpop.permute.xlu0 %2124
    %v2127 = vlaneseq
    %v2128 = vshrl.u32 %v2127, 7
    %v2129 = vsub.s32 1, %v2128
    %v2130 = vrot.slane %v2091, %v2129
    %v2131 = vlaneseq
    %v2132 = vshrl.u32 %v2131, 7
    %v2133 = vsub.s32 1, %v2132
    %v2134 = vrot.slane %v2092, %v2133
    %v2135 = vlaneseq
    %v2136 = vshrl.u32 %v2135, 7
    %v2137 = vsub.s32 1, %v2136
    %v2138 = vrot.slane %v2093, %v2137
    %v2139 = vlaneseq
    %v2140 = vshrl.u32 %v2139, 7
    %v2141 = vsub.s32 1, %v2140
    %v2142 = vrot.slane %v2094, %v2141
    %v2143 = vmul.f32 %v2125, %v2130
    %v2144 = vmul.f32 %v2125, %v2134
    %v2145 = vmul.f32 %v2125, %v2138
    %v2146 = vmul.f32 %v2125, %v2142
    %v2147 = vadd.f32 %v2119, %v2143
    %v2148 = vadd.f32 %v2120, %v2144
    %v2149 = vadd.f32 %v2121, %v2145
    %v2150 = vadd.f32 %v2122, %v2146
    %2151 = vset.pattern.permute.xlu0 18
    %2152 = vperm.xlu0 %2151, %v72
    %v2153 = vpop.permute.xlu0 %2152
    %v2155 = vlaneseq
    %v2156 = vshrl.u32 %v2155, 7
    %v2157 = vsub.s32 2, %v2156
    %v2158 = vrot.slane %v2091, %v2157
    %v2159 = vlaneseq
    %v2160 = vshrl.u32 %v2159, 7
    %v2161 = vsub.s32 2, %v2160
    %v2162 = vrot.slane %v2092, %v2161
    %v2163 = vlaneseq
    %v2164 = vshrl.u32 %v2163, 7
    %v2165 = vsub.s32 2, %v2164
    %v2166 = vrot.slane %v2093, %v2165
    %v2167 = vlaneseq
    %v2168 = vshrl.u32 %v2167, 7
    %v2169 = vsub.s32 2, %v2168
    %v2170 = vrot.slane %v2094, %v2169
    %v2171 = vmul.f32 %v2153, %v2158
    %v2172 = vmul.f32 %v2153, %v2162
    %v2173 = vmul.f32 %v2153, %v2166
    %v2174 = vmul.f32 %v2153, %v2170
    %v2175 = vadd.f32 %v2147, %v2171
    %v2176 = vadd.f32 %v2148, %v2172
    %v2177 = vadd.f32 %v2149, %v2173
    %v2178 = vadd.f32 %v2150, %v2174
    %2179 = vset.pattern.permute.xlu0 19
    %2180 = vperm.xlu0 %2179, %v72
    %v2181 = vpop.permute.xlu0 %2180
    %v2183 = vlaneseq
    %v2184 = vshrl.u32 %v2183, 7
    %v2185 = vsub.s32 3, %v2184
    %v2186 = vrot.slane %v2091, %v2185
    %v2187 = vlaneseq
    %v2188 = vshrl.u32 %v2187, 7
    %v2189 = vsub.s32 3, %v2188
    %v2190 = vrot.slane %v2092, %v2189
    %v2191 = vlaneseq
    %v2192 = vshrl.u32 %v2191, 7
    %v2193 = vsub.s32 3, %v2192
    %v2194 = vrot.slane %v2093, %v2193
    %v2195 = vlaneseq
    %v2196 = vshrl.u32 %v2195, 7
    %v2197 = vsub.s32 3, %v2196
    %v2198 = vrot.slane %v2094, %v2197
    %v2199 = vmul.f32 %v2181, %v2186
    %v2200 = vmul.f32 %v2181, %v2190
    %v2201 = vmul.f32 %v2181, %v2194
    %v2202 = vmul.f32 %v2181, %v2198
    %v2203 = vadd.f32 %v2175, %v2199
    %v2204 = vadd.f32 %v2176, %v2200
    %v2205 = vadd.f32 %v2177, %v2201
    %v2206 = vadd.f32 %v2178, %v2202
    %2207 = vrot.lane.b32.xlu0 %v1574, 127
    %v2208 = vpop.permute.xlu0 %2207
    %2209 = vrot.lane.b32.xlu0 %v1575, 127
    %v2210 = vpop.permute.xlu0 %2209
    %2211 = vrot.lane.b32.xlu0 %v1576, 127
    %v2212 = vpop.permute.xlu0 %2211
    %2213 = vrot.lane.b32.xlu0 %v1577, 127
    %v2214 = vpop.permute.xlu0 %2213
    %v2215 = vsel %vm909, %v2212, %v2214
    %v2216 = vsel %vm909, %v2210, %v2212
    %v2217 = vsel %vm909, %v2208, %v2210
    %v2218 = vsel %vm909, %v2214, %v2208
    %v2219 = vsel %vm947, %v2217, 0.0
    %v2220 = vsel %vm948, %v2216, 0.0
    %v2221 = vsel %vm949, %v2215, 0.0
    %v2222 = vsel %vm950, %v2218, 0.0
    %2223 = vset.pattern.permute.xlu0 20
    %2224 = vperm.xlu0 %2223, %v72
    %v2225 = vpop.permute.xlu0 %2224
    %v2227 = vlaneseq
    %v2228 = vshrl.u32 %v2227, 7
    %v2229 = vsub.s32 0, %v2228
    %v2230 = vrot.slane %v2219, %v2229
    %v2231 = vlaneseq
    %v2232 = vshrl.u32 %v2231, 7
    %v2233 = vsub.s32 0, %v2232
    %v2234 = vrot.slane %v2220, %v2233
    %v2235 = vlaneseq
    %v2236 = vshrl.u32 %v2235, 7
    %v2237 = vsub.s32 0, %v2236
    %v2238 = vrot.slane %v2221, %v2237
    %v2239 = vlaneseq
    %v2240 = vshrl.u32 %v2239, 7
    %v2241 = vsub.s32 0, %v2240
    %v2242 = vrot.slane %v2222, %v2241
    %v2243 = vmul.f32 %v2225, %v2230
    %v2244 = vmul.f32 %v2225, %v2234
    %v2245 = vmul.f32 %v2225, %v2238
    %v2246 = vmul.f32 %v2225, %v2242
    %v2247 = vadd.f32 %v2203, %v2243
    %v2248 = vadd.f32 %v2204, %v2244
    %v2249 = vadd.f32 %v2205, %v2245
    %v2250 = vadd.f32 %v2206, %v2246
    %2251 = vset.pattern.permute.xlu0 21
    %2252 = vperm.xlu0 %2251, %v72
    %v2253 = vpop.permute.xlu0 %2252
    %v2255 = vlaneseq
    %v2256 = vshrl.u32 %v2255, 7
    %v2257 = vsub.s32 1, %v2256
    %v2258 = vrot.slane %v2219, %v2257
    %v2259 = vlaneseq
    %v2260 = vshrl.u32 %v2259, 7
    %v2261 = vsub.s32 1, %v2260
    %v2262 = vrot.slane %v2220, %v2261
    %v2263 = vlaneseq
    %v2264 = vshrl.u32 %v2263, 7
    %v2265 = vsub.s32 1, %v2264
    %v2266 = vrot.slane %v2221, %v2265
    %v2267 = vlaneseq
    %v2268 = vshrl.u32 %v2267, 7
    %v2269 = vsub.s32 1, %v2268
    %v2270 = vrot.slane %v2222, %v2269
    %v2271 = vmul.f32 %v2253, %v2258
    %v2272 = vmul.f32 %v2253, %v2262
    %v2273 = vmul.f32 %v2253, %v2266
    %v2274 = vmul.f32 %v2253, %v2270
    %v2275 = vadd.f32 %v2247, %v2271
    %v2276 = vadd.f32 %v2248, %v2272
    %v2277 = vadd.f32 %v2249, %v2273
    %v2278 = vadd.f32 %v2250, %v2274
    %2279 = vset.pattern.permute.xlu0 22
    %2280 = vperm.xlu0 %2279, %v72
    %v2281 = vpop.permute.xlu0 %2280
    %v2283 = vlaneseq
    %v2284 = vshrl.u32 %v2283, 7
    %v2285 = vsub.s32 2, %v2284
    %v2286 = vrot.slane %v2219, %v2285
    %v2287 = vlaneseq
    %v2288 = vshrl.u32 %v2287, 7
    %v2289 = vsub.s32 2, %v2288
    %v2290 = vrot.slane %v2220, %v2289
    %v2291 = vlaneseq
    %v2292 = vshrl.u32 %v2291, 7
    %v2293 = vsub.s32 2, %v2292
    %v2294 = vrot.slane %v2221, %v2293
    %v2295 = vlaneseq
    %v2296 = vshrl.u32 %v2295, 7
    %v2297 = vsub.s32 2, %v2296
    %v2298 = vrot.slane %v2222, %v2297
    %v2299 = vmul.f32 %v2281, %v2286
    %v2300 = vmul.f32 %v2281, %v2290
    %v2301 = vmul.f32 %v2281, %v2294
    %v2302 = vmul.f32 %v2281, %v2298
    %v2303 = vadd.f32 %v2275, %v2299
    %v2304 = vadd.f32 %v2276, %v2300
    %v2305 = vadd.f32 %v2277, %v2301
    %v2306 = vadd.f32 %v2278, %v2302
    %2307 = vset.pattern.permute.xlu0 23
    %2308 = vperm.xlu0 %2307, %v72
    %v2309 = vpop.permute.xlu0 %2308
    %v2311 = vlaneseq
    %v2312 = vshrl.u32 %v2311, 7
    %v2313 = vsub.s32 3, %v2312
    %v2314 = vrot.slane %v2219, %v2313
    %v2315 = vlaneseq
    %v2316 = vshrl.u32 %v2315, 7
    %v2317 = vsub.s32 3, %v2316
    %v2318 = vrot.slane %v2220, %v2317
    %v2319 = vlaneseq
    %v2320 = vshrl.u32 %v2319, 7
    %v2321 = vsub.s32 3, %v2320
    %v2322 = vrot.slane %v2221, %v2321
    %v2323 = vlaneseq
    %v2324 = vshrl.u32 %v2323, 7
    %v2325 = vsub.s32 3, %v2324
    %v2326 = vrot.slane %v2222, %v2325
    %v2327 = vmul.f32 %v2309, %v2314
    %v2328 = vmul.f32 %v2309, %v2318
    %v2329 = vmul.f32 %v2309, %v2322
    %v2330 = vmul.f32 %v2309, %v2326
    %v2331 = vadd.f32 %v2303, %v2327
    %v2332 = vadd.f32 %v2304, %v2328
    %v2333 = vadd.f32 %v2305, %v2329
    %v2334 = vadd.f32 %v2306, %v2330
    %2335 = vrot.lane.b32.xlu0 %v1574, 113
    %v2336 = vpop.permute.xlu0 %2335
    %2337 = vrot.lane.b32.xlu0 %v1575, 113
    %v2338 = vpop.permute.xlu0 %2337
    %2339 = vrot.lane.b32.xlu0 %v1576, 113
    %v2340 = vpop.permute.xlu0 %2339
    %2341 = vrot.lane.b32.xlu0 %v1577, 113
    %v2342 = vpop.permute.xlu0 %2341
    %v2343 = vsel %vm1075, %v2340, %v2342
    %v2344 = vsel %vm1075, %v2338, %v2340
    %v2345 = vsel %vm1075, %v2336, %v2338
    %v2346 = vsel %vm1075, %v2342, %v2336
    %v2347 = vsel %vm1113, %v2345, 0.0
    %v2348 = vsel %vm1114, %v2344, 0.0
    %v2349 = vsel %vm1115, %v2343, 0.0
    %v2350 = vsel %vm1116, %v2346, 0.0
    %2351 = vset.pattern.permute.xlu0 24
    %2352 = vperm.xlu0 %2351, %v72
    %v2353 = vpop.permute.xlu0 %2352
    %v2355 = vlaneseq
    %v2356 = vshrl.u32 %v2355, 7
    %v2357 = vsub.s32 0, %v2356
    %v2358 = vrot.slane %v2347, %v2357
    %v2359 = vlaneseq
    %v2360 = vshrl.u32 %v2359, 7
    %v2361 = vsub.s32 0, %v2360
    %v2362 = vrot.slane %v2348, %v2361
    %v2363 = vlaneseq
    %v2364 = vshrl.u32 %v2363, 7
    %v2365 = vsub.s32 0, %v2364
    %v2366 = vrot.slane %v2349, %v2365
    %v2367 = vlaneseq
    %v2368 = vshrl.u32 %v2367, 7
    %v2369 = vsub.s32 0, %v2368
    %v2370 = vrot.slane %v2350, %v2369
    %v2371 = vmul.f32 %v2353, %v2358
    %v2372 = vmul.f32 %v2353, %v2362
    %v2373 = vmul.f32 %v2353, %v2366
    %v2374 = vmul.f32 %v2353, %v2370
    %v2375 = vadd.f32 %v2331, %v2371
    %v2376 = vadd.f32 %v2332, %v2372
    %v2377 = vadd.f32 %v2333, %v2373
    %v2378 = vadd.f32 %v2334, %v2374
    %2379 = vset.pattern.permute.xlu0 25
    %2380 = vperm.xlu0 %2379, %v72
    %v2381 = vpop.permute.xlu0 %2380
    %v2383 = vlaneseq
    %v2384 = vshrl.u32 %v2383, 7
    %v2385 = vsub.s32 1, %v2384
    %v2386 = vrot.slane %v2347, %v2385
    %v2387 = vlaneseq
    %v2388 = vshrl.u32 %v2387, 7
    %v2389 = vsub.s32 1, %v2388
    %v2390 = vrot.slane %v2348, %v2389
    %v2391 = vlaneseq
    %v2392 = vshrl.u32 %v2391, 7
    %v2393 = vsub.s32 1, %v2392
    %v2394 = vrot.slane %v2349, %v2393
    %v2395 = vlaneseq
    %v2396 = vshrl.u32 %v2395, 7
    %v2397 = vsub.s32 1, %v2396
    %v2398 = vrot.slane %v2350, %v2397
    %v2399 = vmul.f32 %v2381, %v2386
    %v2400 = vmul.f32 %v2381, %v2390
    %v2401 = vmul.f32 %v2381, %v2394
    %v2402 = vmul.f32 %v2381, %v2398
    %v2403 = vadd.f32 %v2375, %v2399
    %v2404 = vadd.f32 %v2376, %v2400
    %v2405 = vadd.f32 %v2377, %v2401
    %v2406 = vadd.f32 %v2378, %v2402
    %2407 = vset.pattern.permute.xlu0 26
    %2408 = vperm.xlu0 %2407, %v72
    %v2409 = vpop.permute.xlu0 %2408
    %v2411 = vlaneseq
    %v2412 = vshrl.u32 %v2411, 7
    %v2413 = vsub.s32 2, %v2412
    %v2414 = vrot.slane %v2347, %v2413
    %v2415 = vlaneseq
    %v2416 = vshrl.u32 %v2415, 7
    %v2417 = vsub.s32 2, %v2416
    %v2418 = vrot.slane %v2348, %v2417
    %v2419 = vlaneseq
    %v2420 = vshrl.u32 %v2419, 7
    %v2421 = vsub.s32 2, %v2420
    %v2422 = vrot.slane %v2349, %v2421
    %v2423 = vlaneseq
    %v2424 = vshrl.u32 %v2423, 7
    %v2425 = vsub.s32 2, %v2424
    %v2426 = vrot.slane %v2350, %v2425
    %v2427 = vmul.f32 %v2409, %v2414
    %v2428 = vmul.f32 %v2409, %v2418
    %v2429 = vmul.f32 %v2409, %v2422
    %v2430 = vmul.f32 %v2409, %v2426
    %v2431 = vadd.f32 %v2403, %v2427
    %v2432 = vadd.f32 %v2404, %v2428
    %v2433 = vadd.f32 %v2405, %v2429
    %v2434 = vadd.f32 %v2406, %v2430
    %2435 = vset.pattern.permute.xlu0 27
    %2436 = vperm.xlu0 %2435, %v72
    %v2437 = vpop.permute.xlu0 %2436
    %v2439 = vlaneseq
    %v2440 = vshrl.u32 %v2439, 7
    %v2441 = vsub.s32 3, %v2440
    %v2442 = vrot.slane %v2347, %v2441
    %v2443 = vlaneseq
    %v2444 = vshrl.u32 %v2443, 7
    %v2445 = vsub.s32 3, %v2444
    %v2446 = vrot.slane %v2348, %v2445
    %v2447 = vlaneseq
    %v2448 = vshrl.u32 %v2447, 7
    %v2449 = vsub.s32 3, %v2448
    %v2450 = vrot.slane %v2349, %v2449
    %v2451 = vlaneseq
    %v2452 = vshrl.u32 %v2451, 7
    %v2453 = vsub.s32 3, %v2452
    %v2454 = vrot.slane %v2350, %v2453
    %v2455 = vmul.f32 %v2437, %v2442
    %v2456 = vmul.f32 %v2437, %v2446
    %v2457 = vmul.f32 %v2437, %v2450
    %v2458 = vmul.f32 %v2437, %v2454
    %v2459 = vadd.f32 %v2431, %v2455
    %v2460 = vadd.f32 %v2432, %v2456
    %v2461 = vadd.f32 %v2433, %v2457
    %v2462 = vadd.f32 %v2434, %v2458
    %2463 = vrot.lane.b32.xlu0 %v1574, 112
    %v2464 = vpop.permute.xlu0 %2463
    %2465 = vrot.lane.b32.xlu0 %v1575, 112
    %v2466 = vpop.permute.xlu0 %2465
    %2467 = vrot.lane.b32.xlu0 %v1576, 112
    %v2468 = vpop.permute.xlu0 %2467
    %2469 = vrot.lane.b32.xlu0 %v1577, 112
    %v2470 = vpop.permute.xlu0 %2469
    %v2471 = vsel %vm1241, %v2468, %v2470
    %v2472 = vsel %vm1241, %v2466, %v2468
    %v2473 = vsel %vm1241, %v2464, %v2466
    %v2474 = vsel %vm1241, %v2470, %v2464
    %v2475 = vsel %vm1279, %v2473, 0.0
    %v2476 = vsel %vm1280, %v2472, 0.0
    %v2477 = vsel %vm1281, %v2471, 0.0
    %v2478 = vsel %vm1282, %v2474, 0.0
    %2479 = vset.pattern.permute.xlu0 28
    %2480 = vperm.xlu0 %2479, %v72
    %v2481 = vpop.permute.xlu0 %2480
    %v2483 = vlaneseq
    %v2484 = vshrl.u32 %v2483, 7
    %v2485 = vsub.s32 0, %v2484
    %v2486 = vrot.slane %v2475, %v2485
    %v2487 = vlaneseq
    %v2488 = vshrl.u32 %v2487, 7
    %v2489 = vsub.s32 0, %v2488
    %v2490 = vrot.slane %v2476, %v2489
    %v2491 = vlaneseq
    %v2492 = vshrl.u32 %v2491, 7
    %v2493 = vsub.s32 0, %v2492
    %v2494 = vrot.slane %v2477, %v2493
    %v2495 = vlaneseq
    %v2496 = vshrl.u32 %v2495, 7
    %v2497 = vsub.s32 0, %v2496
    %v2498 = vrot.slane %v2478, %v2497
    %v2499 = vmul.f32 %v2481, %v2486
    %v2500 = vmul.f32 %v2481, %v2490
    %v2501 = vmul.f32 %v2481, %v2494
    %v2502 = vmul.f32 %v2481, %v2498
    %v2503 = vadd.f32 %v2459, %v2499
    %v2504 = vadd.f32 %v2460, %v2500
    %v2505 = vadd.f32 %v2461, %v2501
    %v2506 = vadd.f32 %v2462, %v2502
    %2507 = vset.pattern.permute.xlu0 29
    %2508 = vperm.xlu0 %2507, %v72
    %v2509 = vpop.permute.xlu0 %2508
    %v2511 = vlaneseq
    %v2512 = vshrl.u32 %v2511, 7
    %v2513 = vsub.s32 1, %v2512
    %v2514 = vrot.slane %v2475, %v2513
    %v2515 = vlaneseq
    %v2516 = vshrl.u32 %v2515, 7
    %v2517 = vsub.s32 1, %v2516
    %v2518 = vrot.slane %v2476, %v2517
    %v2519 = vlaneseq
    %v2520 = vshrl.u32 %v2519, 7
    %v2521 = vsub.s32 1, %v2520
    %v2522 = vrot.slane %v2477, %v2521
    %v2523 = vlaneseq
    %v2524 = vshrl.u32 %v2523, 7
    %v2525 = vsub.s32 1, %v2524
    %v2526 = vrot.slane %v2478, %v2525
    %v2527 = vmul.f32 %v2509, %v2514
    %v2528 = vmul.f32 %v2509, %v2518
    %v2529 = vmul.f32 %v2509, %v2522
    %v2530 = vmul.f32 %v2509, %v2526
    %v2531 = vadd.f32 %v2503, %v2527
    %v2532 = vadd.f32 %v2504, %v2528
    %v2533 = vadd.f32 %v2505, %v2529
    %v2534 = vadd.f32 %v2506, %v2530
    %2535 = vset.pattern.permute.xlu0 30
    %2536 = vperm.xlu0 %2535, %v72
    %v2537 = vpop.permute.xlu0 %2536
    %v2539 = vlaneseq
    %v2540 = vshrl.u32 %v2539, 7
    %v2541 = vsub.s32 2, %v2540
    %v2542 = vrot.slane %v2475, %v2541
    %v2543 = vlaneseq
    %v2544 = vshrl.u32 %v2543, 7
    %v2545 = vsub.s32 2, %v2544
    %v2546 = vrot.slane %v2476, %v2545
    %v2547 = vlaneseq
    %v2548 = vshrl.u32 %v2547, 7
    %v2549 = vsub.s32 2, %v2548
    %v2550 = vrot.slane %v2477, %v2549
    %v2551 = vlaneseq
    %v2552 = vshrl.u32 %v2551, 7
    %v2553 = vsub.s32 2, %v2552
    %v2554 = vrot.slane %v2478, %v2553
    %v2555 = vmul.f32 %v2537, %v2542
    %v2556 = vmul.f32 %v2537, %v2546
    %v2557 = vmul.f32 %v2537, %v2550
    %v2558 = vmul.f32 %v2537, %v2554
    %v2559 = vadd.f32 %v2531, %v2555
    %v2560 = vadd.f32 %v2532, %v2556
    %v2561 = vadd.f32 %v2533, %v2557
    %v2562 = vadd.f32 %v2534, %v2558
    %2563 = vset.pattern.permute.xlu0 31
    %2564 = vperm.xlu0 %2563, %v72
    %v2565 = vpop.permute.xlu0 %2564
    %v2567 = vlaneseq
    %v2568 = vshrl.u32 %v2567, 7
    %v2569 = vsub.s32 3, %v2568
    %v2570 = vrot.slane %v2475, %v2569
    %v2571 = vlaneseq
    %v2572 = vshrl.u32 %v2571, 7
    %v2573 = vsub.s32 3, %v2572
    %v2574 = vrot.slane %v2476, %v2573
    %v2575 = vlaneseq
    %v2576 = vshrl.u32 %v2575, 7
    %v2577 = vsub.s32 3, %v2576
    %v2578 = vrot.slane %v2477, %v2577
    %v2579 = vlaneseq
    %v2580 = vshrl.u32 %v2579, 7
    %v2581 = vsub.s32 3, %v2580
    %v2582 = vrot.slane %v2478, %v2581
    %v2583 = vmul.f32 %v2565, %v2570
    %v2584 = vmul.f32 %v2565, %v2574
    %v2585 = vmul.f32 %v2565, %v2578
    %v2586 = vmul.f32 %v2565, %v2582
    %v2587 = vadd.f32 %v2559, %v2583
    %v2588 = vadd.f32 %v2560, %v2584
    %v2589 = vadd.f32 %v2561, %v2585
    %v2590 = vadd.f32 %v2562, %v2586
    %2591 = vrot.lane.b32.xlu0 %v1574, 111
    %v2592 = vpop.permute.xlu0 %2591
    %2593 = vrot.lane.b32.xlu0 %v1575, 111
    %v2594 = vpop.permute.xlu0 %2593
    %2595 = vrot.lane.b32.xlu0 %v1576, 111
    %v2596 = vpop.permute.xlu0 %2595
    %2597 = vrot.lane.b32.xlu0 %v1577, 111
    %v2598 = vpop.permute.xlu0 %2597
    %v2599 = vsel %vm1407, %v2596, %v2598
    %v2600 = vsel %vm1407, %v2594, %v2596
    %v2601 = vsel %vm1407, %v2592, %v2594
    %v2602 = vsel %vm1407, %v2598, %v2592
    %v2603 = vsel %vm1445, %v2601, 0.0
    %v2604 = vsel %vm1446, %v2600, 0.0
    %v2605 = vsel %vm1447, %v2599, 0.0
    %v2606 = vsel %vm1448, %v2602, 0.0
    %2607 = vset.pattern.permute.xlu0 32
    %2608 = vperm.xlu0 %2607, %v72
    %v2609 = vpop.permute.xlu0 %2608
    %v2611 = vlaneseq
    %v2612 = vshrl.u32 %v2611, 7
    %v2613 = vsub.s32 0, %v2612
    %v2614 = vrot.slane %v2603, %v2613
    %v2615 = vlaneseq
    %v2616 = vshrl.u32 %v2615, 7
    %v2617 = vsub.s32 0, %v2616
    %v2618 = vrot.slane %v2604, %v2617
    %v2619 = vlaneseq
    %v2620 = vshrl.u32 %v2619, 7
    %v2621 = vsub.s32 0, %v2620
    %v2622 = vrot.slane %v2605, %v2621
    %v2623 = vlaneseq
    %v2624 = vshrl.u32 %v2623, 7
    %v2625 = vsub.s32 0, %v2624
    %v2626 = vrot.slane %v2606, %v2625
    %v2627 = vmul.f32 %v2609, %v2614
    %v2628 = vmul.f32 %v2609, %v2618
    %v2629 = vmul.f32 %v2609, %v2622
    %v2630 = vmul.f32 %v2609, %v2626
    %v2631 = vadd.f32 %v2587, %v2627
    %v2632 = vadd.f32 %v2588, %v2628
    %v2633 = vadd.f32 %v2589, %v2629
    %v2634 = vadd.f32 %v2590, %v2630
    %2635 = vset.pattern.permute.xlu0 33
    %2636 = vperm.xlu0 %2635, %v72
    %v2637 = vpop.permute.xlu0 %2636
    %v2639 = vlaneseq
    %v2640 = vshrl.u32 %v2639, 7
    %v2641 = vsub.s32 1, %v2640
    %v2642 = vrot.slane %v2603, %v2641
    %v2643 = vlaneseq
    %v2644 = vshrl.u32 %v2643, 7
    %v2645 = vsub.s32 1, %v2644
    %v2646 = vrot.slane %v2604, %v2645
    %v2647 = vlaneseq
    %v2648 = vshrl.u32 %v2647, 7
    %v2649 = vsub.s32 1, %v2648
    %v2650 = vrot.slane %v2605, %v2649
    %v2651 = vlaneseq
    %v2652 = vshrl.u32 %v2651, 7
    %v2653 = vsub.s32 1, %v2652
    %v2654 = vrot.slane %v2606, %v2653
    %v2655 = vmul.f32 %v2637, %v2642
    %v2656 = vmul.f32 %v2637, %v2646
    %v2657 = vmul.f32 %v2637, %v2650
    %v2658 = vmul.f32 %v2637, %v2654
    %v2659 = vadd.f32 %v2631, %v2655
    %v2660 = vadd.f32 %v2632, %v2656
    %v2661 = vadd.f32 %v2633, %v2657
    %v2662 = vadd.f32 %v2634, %v2658
    %2663 = vset.pattern.permute.xlu0 34
    %2664 = vperm.xlu0 %2663, %v72
    %v2665 = vpop.permute.xlu0 %2664
    %v2667 = vlaneseq
    %v2668 = vshrl.u32 %v2667, 7
    %v2669 = vsub.s32 2, %v2668
    %v2670 = vrot.slane %v2603, %v2669
    %v2671 = vlaneseq
    %v2672 = vshrl.u32 %v2671, 7
    %v2673 = vsub.s32 2, %v2672
    %v2674 = vrot.slane %v2604, %v2673
    %v2675 = vlaneseq
    %v2676 = vshrl.u32 %v2675, 7
    %v2677 = vsub.s32 2, %v2676
    %v2678 = vrot.slane %v2605, %v2677
    %v2679 = vlaneseq
    %v2680 = vshrl.u32 %v2679, 7
    %v2681 = vsub.s32 2, %v2680
    %v2682 = vrot.slane %v2606, %v2681
    %v2683 = vmul.f32 %v2665, %v2670
    %v2684 = vmul.f32 %v2665, %v2674
    %v2685 = vmul.f32 %v2665, %v2678
    %v2686 = vmul.f32 %v2665, %v2682
    %v2687 = vadd.f32 %v2659, %v2683
    %v2688 = vadd.f32 %v2660, %v2684
    %v2689 = vadd.f32 %v2661, %v2685
    %v2690 = vadd.f32 %v2662, %v2686
    %2691 = vset.pattern.permute.xlu0 35
    %2692 = vperm.xlu0 %2691, %v72
    %v2693 = vpop.permute.xlu0 %2692
    %v2695 = vlaneseq
    %v2696 = vshrl.u32 %v2695, 7
    %v2697 = vsub.s32 3, %v2696
    %v2698 = vrot.slane %v2603, %v2697
    %v2699 = vlaneseq
    %v2700 = vshrl.u32 %v2699, 7
    %v2701 = vsub.s32 3, %v2700
    %v2702 = vrot.slane %v2604, %v2701
    %v2703 = vlaneseq
    %v2704 = vshrl.u32 %v2703, 7
    %v2705 = vsub.s32 3, %v2704
    %v2706 = vrot.slane %v2605, %v2705
    %v2707 = vlaneseq
    %v2708 = vshrl.u32 %v2707, 7
    %v2709 = vsub.s32 3, %v2708
    %v2710 = vrot.slane %v2606, %v2709
    %v2711 = vmul.f32 %v2693, %v2698
    %v2712 = vmul.f32 %v2693, %v2702
    %v2713 = vmul.f32 %v2693, %v2706
    %v2714 = vmul.f32 %v2693, %v2710
    %v2715 = vadd.f32 %v2687, %v2711
    %v2716 = vadd.f32 %v2688, %v2712
    %v2717 = vadd.f32 %v2689, %v2713
    %v2718 = vadd.f32 %v2690, %v2714
    %2720 = vset.pattern.permute.xlu0 0
    %2721 = vperm.xlu0 %2720, %v74
    %v2722 = vpop.permute.xlu0 %2721
    %v2724 = vadd.f32 %v2715, %v2722
    %v2725 = vadd.f32 %v2716, %v2722
    %v2726 = vadd.f32 %v2717, %v2722
    %v2727 = vadd.f32 %v2718, %v2722
    %v2728 = vadd.f32 %v2724, %v36
    %v2729 = vadd.f32 %v2725, %v77
    %v2730 = vadd.f32 %v2726, %v37
    %v2731 = vadd.f32 %v2727, %v78
    %v2736 = vcombine.low %v2728, %v2729
    %v2737 = vcombine.low %v2730, %v2731
    %2740 = vst [vmem:[#allocation5] sm:$0xff] %v2736
    %2741 = vst [vmem:[#allocation5 + $0x8] sm:$0xff] %v2737
    // Predicated region
    $region30: #{tpu_custom_call.1} parent=1 // pred_check
      _
    $region31: #{tpu_custom_call.1} parent=1 // pred_check_branch
      %2743 = sbr.rel (0) target = $region33
    $region32: #{tpu_custom_call.1} parent=1 // pred_region
      %s2745 = ssub.s32 256, 256
      %2746 = vsyncadd [#allocation4], %s2745
      %s2748 = sshll.u32 [#allocation5], 4
      %s2749 = int_to_ptr.vmem [resolvable:$true] %s2748
      %2751 = dma.vmem_to_hbm [thread:$0]  %s2749, 256, %s6, [#allocation4]
    $region33: #{tpu_custom_call.1} parent=1 // pred_fallthru
      _
    // Predicated region
    $region34: #{tpu_custom_call.1} parent=1 // pred_check
      _
    $region35: #{tpu_custom_call.1} parent=1 // pred_check_branch
      %2753 = sbr.rel (0) target = $region37
    $region36: #{tpu_custom_call.1} parent=1 // pred_region
      %2754 = dma.done [#allocation4], 256
    $region37: #{tpu_custom_call.1} parent=1 // pred_fallthru
      _
    %2755 = vsyncpa [#allocation3], 1
    %2756 = vsyncpa [#allocation4], 1

</llo_original>
